<compile_context>
chip_gen: v7x
topology: tpu7x:2x2x1
jax: 0.10.0
libtpu: 0.0.40
codegen_flags: <defaults>
</compile_context>

<pallas_src>
import numpy as np
import jax
import jax.numpy as jnp
from jax.experimental import pallas as pl
from jax.experimental.pallas import tpu as pltpu

# ----------------------- configuration (matches module __init__) -------------
DIM = 32                 # dim
NUM_HEADS = 4            # num_heads
HEAD_DIM = DIM // NUM_HEADS
WINDOW_SIZE = 4          # window_size
SHIFT_SIZE = 2           # shift_size > 0 -> shifted windows + attention mask
MLP_RATIO = 4.0
HIDDEN = int(DIM * MLP_RATIO)
EPS = 1e-5               # nn.LayerNorm default eps
SCALE = HEAD_DIM ** -0.5
N_TOK = WINDOW_SIZE * WINDOW_SIZE

B = 2
H = 8
W = 8
L = H * W                                       # tokens per image = rows per grid step
NW = (H // WINDOW_SIZE) * (W // WINDOW_SIZE)    # windows per image
NEG_INF = -1e9


# ----------------------------- in-kernel helpers ------------------------------
def _erf(x):
    # Abramowitz & Stegun 7.1.26 polynomial erf (max abs err ~1.5e-7).
    a1, a2, a3, a4, a5 = 0.254829592, -0.284496736, 1.421413741, -1.453152027, 1.061405429
    p = 0.3275911
    s = jnp.where(x >= 0.0, 1.0, -1.0)
    ax = jnp.abs(x)
    t = 1.0 / (1.0 + p * ax)
    poly = ((((a5 * t + a4) * t + a3) * t + a2) * t + a1) * t
    return s * (1.0 - poly * jnp.exp(-ax * ax))


def _gelu_exact(x):
    # nn.GELU() default is the exact (erf-based) GELU.
    return 0.5 * x * (1.0 + _erf(x * 0.7071067811865476))


# --------------------------------- fused kernel --------------------------------
def _swin_block_kernel(x_ref, g1_ref, b1_ref,
                       wqkv_ref, bqkv_ref,
                       cmask_ref, lterm_ref, lamb1p_ref,
                       wproj_ref, bproj_ref,
                       g2_ref, b2_ref,
                       w1_ref, b1m_ref, w2_ref, b2m_ref,
                       o_ref):
    """One image (L=64 permuted tokens, windows contiguous) per grid step."""
    x = x_ref[...]                                              # (L, C)

    # ---- LayerNorm 1 ----
    mu = jnp.mean(x, axis=-1, keepdims=True)
    var = jnp.mean(jnp.square(x - mu), axis=-1, keepdims=True)
    xn = (x - mu) * jax.lax.rsqrt(var + EPS) * g1_ref[0] + b1_ref[0]

    # ---- fused QKV projection for all heads: one MXU weight load ----
    # columns: [Q heads | K heads | V heads], qk scale pre-folded into Q columns
    qkv = jnp.dot(xn, wqkv_ref[...], preferred_element_type=jnp.float32) + bqkv_ref[0]  # (L, 3C)

    # ---- window attention: block-diagonal over the stacked windows ----
    acc = None
    for h in range(NUM_HEADS):                                  # heads unrolled (static)
        q = qkv[:, h * HEAD_DIM:(h + 1) * HEAD_DIM]                            # (L, hd)
        k = qkv[:, DIM + h * HEAD_DIM:DIM + (h + 1) * HEAD_DIM]                # (L, hd)
        v = qkv[:, 2 * DIM + h * HEAD_DIM:2 * DIM + (h + 1) * HEAD_DIM]        # (L, hd)

        s = jax.lax.dot_general(q, k, (((1,), (1,)), ((), ())),
                                preferred_element_type=jnp.float32)            # (L, L)
        s = s + cmask_ref[h]                        # rel bias + shift mask + off-block -1e9
        s = s - jnp.max(s, axis=-1, keepdims=True)
        e = jnp.exp(s)
        p = e * pl.reciprocal(jnp.sum(e, axis=-1, keepdims=True), approx=True)

        # attnscale with masked constant term: attn*(1+lamb) - (lamb/N)*blockmask
        p = p * lamb1p_ref[h] - lterm_ref[h]

        y = jnp.dot(p, v, preferred_element_type=jnp.float32)                  # (L, hd)
        contrib = jnp.dot(y, wproj_ref[h], preferred_element_type=jnp.float32) # (L, C)
        acc = contrib if acc is None else acc + contrib

    x1 = x + acc + bproj_ref[0]                                 # residual #1

    # ---- LayerNorm 2 + MLP ----
    mu2 = jnp.mean(x1, axis=-1, keepdims=True)
    var2 = jnp.mean(jnp.square(x1 - mu2), axis=-1, keepdims=True)
    y2 = (x1 - mu2) * jax.lax.rsqrt(var2 + EPS) * g2_ref[0] + b2_ref[0]
    hdn = jnp.dot(y2, w1_ref[...], preferred_element_type=jnp.float32) + b1m_ref[0]
    hdn = _gelu_exact(hdn)
    z = jnp.dot(hdn, w2_ref[...], preferred_element_type=jnp.float32) + b2m_ref[0]
    o_ref[...] = (x1 + z).astype(o_ref.dtype)                   # residual #2


# ------------------------------- pallas wrapper --------------------------------
def swin_block_pallas(xw, kp):
    M, C = xw.shape                     # M = B * L (permuted tokens)
    rep2 = lambda b: (0, 0)
    rep3 = lambda b: (0, 0, 0)
    return pl.pallas_call(
        _swin_block_kernel,
        out_shape=jax.ShapeDtypeStruct((M, C), xw.dtype),
        grid=(M // L,),
        in_specs=[
            pl.BlockSpec((L, C), lambda b: (b, 0)),                        # x (permuted tokens)
            pl.BlockSpec((1, C), rep2), pl.BlockSpec((1, C), rep2),        # g1, b1
            pl.BlockSpec((C, 3 * C), rep2),                                # fused Wqkv (scale folded)
            pl.BlockSpec((1, 3 * C), rep2),                                # fused bqkv
            pl.BlockSpec((NUM_HEADS, L, L), rep3),                         # combined attn mask
            pl.BlockSpec((NUM_HEADS, L, L), rep3),                         # (lamb/N)*blockmask
            pl.BlockSpec(memory_space=pltpu.MemorySpace.SMEM),             # 1+lamb scalars
            pl.BlockSpec((NUM_HEADS, HEAD_DIM, C), rep3),                  # Wproj split per head
            pl.BlockSpec((1, C), rep2),                                    # bproj
            pl.BlockSpec((1, C), rep2), pl.BlockSpec((1, C), rep2),        # g2, b2
            pl.BlockSpec((C, HIDDEN), rep2), pl.BlockSpec((1, HIDDEN), rep2),  # W1, b1
            pl.BlockSpec((HIDDEN, C), rep2), pl.BlockSpec((1, C), rep2),   # W2, b2
        ],
        out_specs=pl.BlockSpec((L, C), lambda b: (b, 0)),
        compiler_params=pltpu.CompilerParams(dimension_semantics=("parallel",)),
    )(xw, kp["g1"], kp["b1"],
      kp["wqkv"], kp["bqkv"],
      kp["cmask"], kp["lterm"], kp["lamb1p"],
      kp["wproj_h"], kp["bproj"],
      kp["g2"], kp["b2"], kp["w1"], kp["b1m"], kp["w2"], kp["b2m"])


# ------------------------------- static tables --------------------------------
def create_attn_mask_np(h, w, ws, shift):
    nw = (h // ws) * (w // ws)
    if shift == 0:
        return np.zeros((nw, ws * ws, ws * ws), np.float32)
    img = np.zeros((1, h, w, 1), np.float32)
    cnt = 0
    for hs in (slice(0, -ws), slice(-ws, -shift), slice(-shift, None)):
        for wsl in (slice(0, -ws), slice(-ws, -shift), slice(-shift, None)):
            img[:, hs, wsl, :] = cnt
            cnt += 1
    mw = img.reshape(1, h // ws, ws, w // ws, ws, 1).transpose(0, 1, 3, 2, 4, 5)
    mw = mw.reshape(-1, ws * ws)
    am = mw[:, None, :] - mw[:, :, None]
    return np.where(am != 0, -100.0, 0.0).astype(np.float32)


def relative_position_index_np(ws):
    coords = np.stack(np.meshgrid(np.arange(ws), np.arange(ws), indexing="ij"))
    cf = coords.reshape(2, -1)
    rel = cf[:, :, None] - cf[:, None, :]
    rel = rel.transpose(1, 2, 0).astype(np.int64)
    rel[..., 0] += ws - 1
    rel[..., 1] += ws - 1
    rel[..., 0] *= 2 * ws - 1
    return rel.sum(-1)


# ------------------------- parameter prep (runs once, eager) -------------------
def prepare_params(p):
    C, hd, nh = DIM, HEAD_DIM, NUM_HEADS

    # fused QKV weight/bias; qk scale folded into the Q columns (first C outputs)
    col_scale = jnp.concatenate([jnp.full((C,), SCALE, jnp.float32),
                                 jnp.ones((2 * C,), jnp.float32)])
    wqkv = p["wqkv"] * col_scale[None, :]                                  # (C, 3C)
    bqkv = (p["bqkv"] * col_scale).reshape(1, 3 * C)

    wproj_h = p["wproj"].reshape(nh, hd, C)                                # (nh, hd, C)

    # relative-position bias, gathered once (static index)
    rel_bias = p["rpb_table"][p["rpi"].reshape(-1)]
    rel_bias = rel_bias.reshape(N_TOK, N_TOK, nh).transpose(2, 0, 1)       # (nh, N, N)

    # combined block-diagonal attention mask: rel bias + shift mask on-diagonal,
    # NEG_INF off-diagonal (kills cross-window attention after softmax).
    cmask = jnp.full((nh, L, L), NEG_INF, jnp.float32)
    for w in range(NW):
        a, b = w * N_TOK, (w + 1) * N_TOK
        cmask = cmask.at[:, a:b, a:b].set(rel_bias + p["attn_mask"][w][None])

    # attnscale constant term, masked to within-window blocks
    blockmask = jnp.asarray(np.kron(np.eye(NW, dtype=np.float32),
                                    np.ones((N_TOK, N_TOK), np.float32)))
    lterm = (p["lamb"] / N_TOK)[:, None, None] * blockmask[None]           # (nh, L, L)
    lamb1p = (1.0 + p["lamb"]).astype(jnp.float32)                         # (nh,) SMEM scalars

    return {
        "g1": p["g1"].reshape(1, C), "b1": p["b1"].reshape(1, C),
        "g2": p["g2"].reshape(1, C), "b2": p["b2"].reshape(1, C),
        "wqkv": wqkv, "bqkv": bqkv,
        "cmask": cmask, "lterm": lterm, "lamb1p": lamb1p,
        "wproj_h": wproj_h, "bproj": p["bproj"].reshape(1, C),
        "w1": p["w1"], "b1m": p["b1m"].reshape(1, HIDDEN),
        "w2": p["w2"], "b2m": p["b2m"].reshape(1, C),
    }


# -------------------------------- full forward ---------------------------------
@jax.jit
def swin_block_forward(x, kp):
    """x: (B, L, C).  Shift + window partition are trivial XLA glue; everything
    else (LN1, attention, residual, LN2, MLP, residual) is the fused kernel."""
    Bx, Lx, C = x.shape
    xr = x.reshape(Bx, H, W, C)
    if SHIFT_SIZE > 0:
        xr = jnp.roll(xr, shift=(-SHIFT_SIZE, -SHIFT_SIZE), axis=(1, 2))
    xw = xr.reshape(Bx, H // WINDOW_SIZE, WINDOW_SIZE, W // WINDOW_SIZE, WINDOW_SIZE, C)
    xw = xw.transpose(0, 1, 3, 2, 4, 5).reshape(Bx * Lx, C)     # permuted tokens

    ow = swin_block_pallas(xw, kp)                              # fused block (permuted order)

    o = ow.reshape(Bx, H // WINDOW_SIZE, W // WINDOW_SIZE, WINDOW_SIZE, WINDOW_SIZE, C)
    o = o.transpose(0, 1, 3, 2, 4, 5).reshape(Bx, H, W, C)      # window reverse
    if SHIFT_SIZE > 0:
        o = jnp.roll(o, shift=(SHIFT_SIZE, SHIFT_SIZE), axis=(1, 2))
    return o.reshape(Bx, Lx, C)


# ----------------------------- pure-JAX reference ------------------------------
def _ln_ref(x, g, b):
    mu = x.mean(-1, keepdims=True)
    var = ((x - mu) ** 2).mean(-1, keepdims=True)
    return (x - mu) / jnp.sqrt(var + EPS) * g + b


def reference_forward(x, params):
    Bx, Lx, C = x.shape
    shortcut = x
    xn = _ln_ref(x, params["g1"], params["b1"]).reshape(Bx, H, W, C)
    if SHIFT_SIZE > 0:
        xn = jnp.roll(xn, shift=(-SHIFT_SIZE, -SHIFT_SIZE), axis=(1, 2))
    xw = xn.reshape(Bx, H // WINDOW_SIZE, WINDOW_SIZE, W // WINDOW_SIZE, WINDOW_SIZE, C)
    xw = xw.transpose(0, 1, 3, 2, 4, 5).reshape(Bx * NW, N_TOK, C)

    qkv = xw @ params["wqkv"] + params["bqkv"]
    qkv = qkv.reshape(-1, N_TOK, 3, NUM_HEADS, HEAD_DIM).transpose(2, 0, 3, 1, 4)
    q, k, v = qkv[0] * SCALE, qkv[1], qkv[2]
    attn = jnp.einsum("thnd,thmd->thnm", q, k)

    rel_bias = params["rpb_table"][params["rpi"].reshape(-1)]
    rel_bias = rel_bias.reshape(N_TOK, N_TOK, NUM_HEADS).transpose(2, 0, 1)
    attn = attn + rel_bias[None]
    attn = attn.reshape(Bx, NW, NUM_HEADS, N_TOK, N_TOK) + params["attn_mask"][None, :, None]
    attn = attn.reshape(-1, NUM_HEADS, N_TOK, N_TOK)
    attn = jax.nn.softmax(attn, axis=-1)
    attn = 1.0 / N_TOK + (attn - 1.0 / N_TOK) * (1.0 + params["lamb"][None, :, None, None])
    out = jnp.einsum("thnm,thmd->thnd", attn, v).transpose(0, 2, 1, 3).reshape(-1, N_TOK, DIM)
    out = out @ params["wproj"] + params["bproj"]

    ar = out.reshape(Bx, H // WINDOW_SIZE, W // WINDOW_SIZE, WINDOW_SIZE, WINDOW_SIZE, DIM)
    ar = ar.transpose(0, 1, 3, 2, 4, 5).reshape(Bx, H, W, DIM)
    if SHIFT_SIZE > 0:
        ar = jnp.roll(ar, shift=(SHIFT_SIZE, SHIFT_SIZE), axis=(1, 2))
    x1 = shortcut + ar.reshape(Bx, Lx, DIM)

    y = _ln_ref(x1, params["g2"], params["b2"])
    hdn = jax.nn.gelu(y @ params["w1"] + params["b1m"], approximate=False)
    return x1 + (hdn @ params["w2"] + params["b2m"])


# ------------------------------------ main --------------------------------------
if __name__ == "__main__":
    key = jax.random.PRNGKey(0)
    ks = jax.random.split(key, 16)

    def rnd(k, shape, s=0.02):
        return jax.random.normal(k, shape, dtype=jnp.float32) * s

    params = {
        "g1": jnp.ones((DIM,), jnp.float32),
        "b1": rnd(ks[0], (DIM,)),
        "g2": jnp.ones((DIM,), jnp.float32),
        "b2": rnd(ks[1], (DIM,)),
        # attention (weights stored pre-transposed: y = x @ W + b)
        "wqkv": rnd(ks[2], (DIM, 3 * DIM)),
        "bqkv": rnd(ks[3], (3 * DIM,)),
        "wproj": rnd(ks[4], (DIM, DIM)),
        "bproj": rnd(ks[5], (DIM,)),
        "rpb_table": rnd(ks[6], ((2 * WINDOW_SIZE - 1) ** 2, NUM_HEADS)),
        "lamb": rnd(ks[7], (NUM_HEADS,), s=0.1),
        # MLP
        "w1": rnd(ks[8], (DIM, HIDDEN)),
        "b1m": rnd(ks[9], (HIDDEN,)),
        "w2": rnd(ks[10], (HIDDEN, DIM)),
        "b2m": rnd(ks[11], (DIM,)),
        # static tables
        "rpi": jnp.asarray(relative_position_index_np(WINDOW_SIZE), jnp.int32),
        "attn_mask": jnp.asarray(create_attn_mask_np(H, W, WINDOW_SIZE, SHIFT_SIZE)),
    }

    x = jax.random.normal(ks[12], (B, L, DIM), dtype=jnp.float32)

    kernel_params = prepare_params(params)        # one-time prep (outside jit)

    out = swin_block_forward(x, kernel_params)
    out = jax.block_until_ready(out)

    ref = reference_forward(x, params)
    np.testing.assert_allclose(np.asarray(out), np.asarray(ref), rtol=2e-3, atol=2e-3)

    print("KERNEL_OK")
</pallas_src>

<mosaic_0001>
module attributes {stable_mosaic.version = 11 : i64} {
  func.func @_swin_block_kernel(%arg0: i32, %arg1: memref<64x32xf32, #tpu.memory_space<vmem>>, %arg2: memref<1x32xf32, #tpu.memory_space<vmem>>, %arg3: memref<1x32xf32, #tpu.memory_space<vmem>>, %arg4: memref<32x96xf32, #tpu.memory_space<vmem>>, %arg5: memref<1x96xf32, #tpu.memory_space<vmem>>, %arg6: memref<4x64x64xf32, #tpu.memory_space<vmem>>, %arg7: memref<4x64x64xf32, #tpu.memory_space<vmem>>, %arg8: memref<4xf32, #tpu.memory_space<smem>>, %arg9: memref<4x8x32xf32, #tpu.memory_space<vmem>>, %arg10: memref<1x32xf32, #tpu.memory_space<vmem>>, %arg11: memref<1x32xf32, #tpu.memory_space<vmem>>, %arg12: memref<1x32xf32, #tpu.memory_space<vmem>>, %arg13: memref<32x128xf32, #tpu.memory_space<vmem>>, %arg14: memref<1x128xf32, #tpu.memory_space<vmem>>, %arg15: memref<128x32xf32, #tpu.memory_space<vmem>>, %arg16: memref<1x32xf32, #tpu.memory_space<vmem>>, %arg17: memref<64x32xf32, #tpu.memory_space<vmem>>) attributes {dimension_semantics = [#tpu.dimension_semantics<parallel>], iteration_bounds = array<i64: 2>, scalar_prefetch = 0 : i64, scratch_operands = 0 : i64, tpu.core_type = #tpu.core_type<tc>, window_params = [{transform_indices = @transform_0, window_bounds = array<i64: 64, 32>}, {pipeline_mode = #tpu.pipeline_mode<synchronous>, transform_indices = @transform_1, window_bounds = array<i64: 1, 32>}, {pipeline_mode = #tpu.pipeline_mode<synchronous>, transform_indices = @transform_2, window_bounds = array<i64: 1, 32>}, {pipeline_mode = #tpu.pipeline_mode<synchronous>, transform_indices = @transform_3, window_bounds = array<i64: 32, 96>}, {pipeline_mode = #tpu.pipeline_mode<synchronous>, transform_indices = @transform_4, window_bounds = array<i64: 1, 96>}, {pipeline_mode = #tpu.pipeline_mode<synchronous>, transform_indices = @transform_5, window_bounds = array<i64: 4, 64, 64>}, {pipeline_mode = #tpu.pipeline_mode<synchronous>, transform_indices = @transform_6, window_bounds = array<i64: 4, 64, 64>}, {transform_indices = @transform_7, window_bounds = array<i64: 4>}, {pipeline_mode = #tpu.pipeline_mode<synchronous>, transform_indices = @transform_8, window_bounds = array<i64: 4, 8, 32>}, {pipeline_mode = #tpu.pipeline_mode<synchronous>, transform_indices = @transform_9, window_bounds = array<i64: 1, 32>}, {pipeline_mode = #tpu.pipeline_mode<synchronous>, transform_indices = @transform_10, window_bounds = array<i64: 1, 32>}, {pipeline_mode = #tpu.pipeline_mode<synchronous>, transform_indices = @transform_11, window_bounds = array<i64: 1, 32>}, {pipeline_mode = #tpu.pipeline_mode<synchronous>, transform_indices = @transform_12, window_bounds = array<i64: 32, 128>}, {pipeline_mode = #tpu.pipeline_mode<synchronous>, transform_indices = @transform_13, window_bounds = array<i64: 1, 128>}, {pipeline_mode = #tpu.pipeline_mode<synchronous>, transform_indices = @transform_14, window_bounds = array<i64: 128, 32>}, {pipeline_mode = #tpu.pipeline_mode<synchronous>, transform_indices = @transform_15, window_bounds = array<i64: 1, 32>}, {transform_indices = @transform_16, window_bounds = array<i64: 64, 32>}]} {
    %c0 = arith.constant 0 : index
    %c0_0 = arith.constant 0 : index
    %0 = vector.load %arg1[%c0, %c0_0] : memref<64x32xf32, #tpu.memory_space<vmem>>, vector<64x32xf32>
    %cst = arith.constant dense<0.000000e+00> : vector<64xf32>
    %1 = vector.multi_reduction <add>, %0, %cst [1] : vector<64x32xf32> to vector<64xf32>
    %2 = vector.shape_cast %1 : vector<64xf32> to vector<64x1xf32>
    %cst_1 = arith.constant 3.200000e+01 : f32
    %3 = vector.broadcast %cst_1 : f32 to vector<64x1xf32>
    %4 = arith.divf %2, %3 : vector<64x1xf32>
    %5 = vector.broadcast %4 : vector<64x1xf32> to vector<64x32xf32>
    %6 = arith.subf %0, %5 : vector<64x32xf32>
    %7 = arith.mulf %6, %6 : vector<64x32xf32>
    %cst_2 = arith.constant dense<0.000000e+00> : vector<64xf32>
    %8 = vector.multi_reduction <add>, %7, %cst_2 [1] : vector<64x32xf32> to vector<64xf32>
    %9 = vector.shape_cast %8 : vector<64xf32> to vector<64x1xf32>
    %cst_3 = arith.constant 3.200000e+01 : f32
    %10 = vector.broadcast %cst_3 : f32 to vector<64x1xf32>
    %11 = arith.divf %9, %10 : vector<64x1xf32>
    %12 = vector.broadcast %4 : vector<64x1xf32> to vector<64x32xf32>
    %13 = arith.subf %0, %12 : vector<64x32xf32>
    %cst_4 = arith.constant 9.99999974E-6 : f32
    %14 = vector.broadcast %cst_4 : f32 to vector<64x1xf32>
    %15 = arith.addf %11, %14 : vector<64x1xf32>
    %16 = math.rsqrt %15 : vector<64x1xf32>
    %17 = vector.broadcast %16 : vector<64x1xf32> to vector<64x32xf32>
    %18 = arith.mulf %13, %17 : vector<64x32xf32>
    %c0_5 = arith.constant 0 : index
    %c0_6 = arith.constant 0 : index
    %19 = vector.load %arg2[%c0_5, %c0_6] : memref<1x32xf32, #tpu.memory_space<vmem>>, vector<1x32xf32>
    %20 = vector.shape_cast %19 : vector<1x32xf32> to vector<32xf32>
    %21 = vector.shape_cast %20 : vector<32xf32> to vector<1x32xf32>
    %22 = vector.broadcast %21 : vector<1x32xf32> to vector<64x32xf32>
    %23 = arith.mulf %18, %22 : vector<64x32xf32>
    %c0_7 = arith.constant 0 : index
    %c0_8 = arith.constant 0 : index
    %24 = vector.load %arg3[%c0_7, %c0_8] : memref<1x32xf32, #tpu.memory_space<vmem>>, vector<1x32xf32>
    %25 = vector.shape_cast %24 : vector<1x32xf32> to vector<32xf32>
    %26 = vector.shape_cast %25 : vector<32xf32> to vector<1x32xf32>
    %27 = vector.broadcast %26 : vector<1x32xf32> to vector<64x32xf32>
    %28 = arith.addf %23, %27 : vector<64x32xf32>
    %c0_9 = arith.constant 0 : index
    %c0_10 = arith.constant 0 : index
    %29 = vector.load %arg4[%c0_9, %c0_10] : memref<32x96xf32, #tpu.memory_space<vmem>>, vector<32x96xf32>
    %cst_11 = arith.constant dense<0.000000e+00> : vector<64x96xf32>
    %30 = tpu.matmul %28, %29, %cst_11 {dimension_numbers = #tpu.dot_dimension_numbers<[1], [0], [0], [1], [0, 0, 1, 1], [], []>} : vector<64x32xf32>, vector<32x96xf32>, vector<64x96xf32> -> vector<64x96xf32>
    %c0_12 = arith.constant 0 : index
    %c0_13 = arith.constant 0 : index
    %31 = vector.load %arg5[%c0_12, %c0_13] : memref<1x96xf32, #tpu.memory_space<vmem>>, vector<1x96xf32>
    %32 = vector.shape_cast %31 : vector<1x96xf32> to vector<96xf32>
    %33 = vector.shape_cast %32 : vector<96xf32> to vector<1x96xf32>
    %34 = vector.broadcast %33 : vector<1x96xf32> to vector<64x96xf32>
    %35 = arith.addf %30, %34 : vector<64x96xf32>
    %36 = vector.extract_strided_slice %35 {offsets = [0, 0], sizes = [64, 8], strides = [1, 1]} : vector<64x96xf32> to vector<64x8xf32>
    %37 = vector.extract_strided_slice %35 {offsets = [0, 32], sizes = [64, 8], strides = [1, 1]} : vector<64x96xf32> to vector<64x8xf32>
    %38 = vector.extract_strided_slice %35 {offsets = [0, 64], sizes = [64, 8], strides = [1, 1]} : vector<64x96xf32> to vector<64x8xf32>
    %cst_14 = arith.constant dense<0.000000e+00> : vector<64x64xf32>
    %39 = tpu.matmul %36, %37, %cst_14 {dimension_numbers = #tpu.dot_dimension_numbers<[1], [1], [0], [0], [0, 0, 1, 0], [], []>} : vector<64x8xf32>, vector<64x8xf32>, vector<64x64xf32> -> vector<64x64xf32>
    %c0_15 = arith.constant 0 : index
    %c0_16 = arith.constant 0 : index
    %c0_17 = arith.constant 0 : index
    %40 = vector.load %arg6[%c0_15, %c0_16, %c0_17] : memref<4x64x64xf32, #tpu.memory_space<vmem>>, vector<1x64x64xf32>
    %41 = vector.shape_cast %40 : vector<1x64x64xf32> to vector<64x64xf32>
    %42 = arith.addf %39, %41 : vector<64x64xf32>
    %cst_18 = arith.constant dense<0xFF800000> : vector<64xf32>
    %43 = vector.multi_reduction <maximumf>, %42, %cst_18 [1] : vector<64x64xf32> to vector<64xf32>
    %44 = vector.shape_cast %43 : vector<64xf32> to vector<64x1xf32>
    %45 = vector.broadcast %44 : vector<64x1xf32> to vector<64x64xf32>
    %46 = arith.subf %42, %45 : vector<64x64xf32>
    %47 = math.exp %46 : vector<64x64xf32>
    %cst_19 = arith.constant dense<0.000000e+00> : vector<64xf32>
    %48 = vector.multi_reduction <add>, %47, %cst_19 [1] : vector<64x64xf32> to vector<64xf32>
    %49 = vector.shape_cast %48 : vector<64xf32> to vector<64x1xf32>
    %50 = tpu.reciprocal %49 {approx = true} : vector<64x1xf32> -> vector<64x1xf32>
    %51 = vector.broadcast %50 : vector<64x1xf32> to vector<64x64xf32>
    %52 = arith.mulf %47, %51 : vector<64x64xf32>
    %c0_20 = arith.constant 0 : index
    %53 = memref.load %arg8[%c0_20] : memref<4xf32, #tpu.memory_space<smem>>
    %54 = vector.broadcast %53 : f32 to vector<64x64xf32>
    %55 = arith.mulf %52, %54 : vector<64x64xf32>
    %c0_21 = arith.constant 0 : index
    %c0_22 = arith.constant 0 : index
    %c0_23 = arith.constant 0 : index
    %56 = vector.load %arg7[%c0_21, %c0_22, %c0_23] : memref<4x64x64xf32, #tpu.memory_space<vmem>>, vector<1x64x64xf32>
    %57 = vector.shape_cast %56 : vector<1x64x64xf32> to vector<64x64xf32>
    %58 = arith.subf %55, %57 : vector<64x64xf32>
    %cst_24 = arith.constant dense<0.000000e+00> : vector<64x8xf32>
    %59 = tpu.matmul %58, %38, %cst_24 {dimension_numbers = #tpu.dot_dimension_numbers<[1], [0], [0], [1], [0, 0, 1, 1], [], []>} : vector<64x64xf32>, vector<64x8xf32>, vector<64x8xf32> -> vector<64x8xf32>
    %c0_25 = arith.constant 0 : index
    %c0_26 = arith.constant 0 : index
    %c0_27 = arith.constant 0 : index
    %60 = vector.load %arg9[%c0_25, %c0_26, %c0_27] : memref<4x8x32xf32, #tpu.memory_space<vmem>>, vector<1x8x32xf32>
    %61 = vector.shape_cast %60 : vector<1x8x32xf32> to vector<8x32xf32>
    %cst_28 = arith.constant dense<0.000000e+00> : vector<64x32xf32>
    %62 = tpu.matmul %59, %61, %cst_28 {dimension_numbers = #tpu.dot_dimension_numbers<[1], [0], [0], [1], [0, 0, 1, 1], [], []>} : vector<64x8xf32>, vector<8x32xf32>, vector<64x32xf32> -> vector<64x32xf32>
    %63 = vector.extract_strided_slice %35 {offsets = [0, 8], sizes = [64, 8], strides = [1, 1]} : vector<64x96xf32> to vector<64x8xf32>
    %64 = vector.extract_strided_slice %35 {offsets = [0, 40], sizes = [64, 8], strides = [1, 1]} : vector<64x96xf32> to vector<64x8xf32>
    %65 = vector.extract_strided_slice %35 {offsets = [0, 72], sizes = [64, 8], strides = [1, 1]} : vector<64x96xf32> to vector<64x8xf32>
    %cst_29 = arith.constant dense<0.000000e+00> : vector<64x64xf32>
    %66 = tpu.matmul %63, %64, %cst_29 {dimension_numbers = #tpu.dot_dimension_numbers<[1], [1], [0], [0], [0, 0, 1, 0], [], []>} : vector<64x8xf32>, vector<64x8xf32>, vector<64x64xf32> -> vector<64x64xf32>
    %c1 = arith.constant 1 : index
    %c0_30 = arith.constant 0 : index
    %c0_31 = arith.constant 0 : index
    %67 = vector.load %arg6[%c1, %c0_30, %c0_31] : memref<4x64x64xf32, #tpu.memory_space<vmem>>, vector<1x64x64xf32>
    %68 = vector.shape_cast %67 : vector<1x64x64xf32> to vector<64x64xf32>
    %69 = arith.addf %66, %68 : vector<64x64xf32>
    %cst_32 = arith.constant dense<0xFF800000> : vector<64xf32>
    %70 = vector.multi_reduction <maximumf>, %69, %cst_32 [1] : vector<64x64xf32> to vector<64xf32>
    %71 = vector.shape_cast %70 : vector<64xf32> to vector<64x1xf32>
    %72 = vector.broadcast %71 : vector<64x1xf32> to vector<64x64xf32>
    %73 = arith.subf %69, %72 : vector<64x64xf32>
    %74 = math.exp %73 : vector<64x64xf32>
    %cst_33 = arith.constant dense<0.000000e+00> : vector<64xf32>
    %75 = vector.multi_reduction <add>, %74, %cst_33 [1] : vector<64x64xf32> to vector<64xf32>
    %76 = vector.shape_cast %75 : vector<64xf32> to vector<64x1xf32>
    %77 = tpu.reciprocal %76 {approx = true} : vector<64x1xf32> -> vector<64x1xf32>
    %78 = vector.broadcast %77 : vector<64x1xf32> to vector<64x64xf32>
    %79 = arith.mulf %74, %78 : vector<64x64xf32>
    %c1_34 = arith.constant 1 : index
    %80 = memref.load %arg8[%c1_34] : memref<4xf32, #tpu.memory_space<smem>>
    %81 = vector.broadcast %80 : f32 to vector<64x64xf32>
    %82 = arith.mulf %79, %81 : vector<64x64xf32>
    %c1_35 = arith.constant 1 : index
    %c0_36 = arith.constant 0 : index
    %c0_37 = arith.constant 0 : index
    %83 = vector.load %arg7[%c1_35, %c0_36, %c0_37] : memref<4x64x64xf32, #tpu.memory_space<vmem>>, vector<1x64x64xf32>
    %84 = vector.shape_cast %83 : vector<1x64x64xf32> to vector<64x64xf32>
    %85 = arith.subf %82, %84 : vector<64x64xf32>
    %cst_38 = arith.constant dense<0.000000e+00> : vector<64x8xf32>
    %86 = tpu.matmul %85, %65, %cst_38 {dimension_numbers = #tpu.dot_dimension_numbers<[1], [0], [0], [1], [0, 0, 1, 1], [], []>} : vector<64x64xf32>, vector<64x8xf32>, vector<64x8xf32> -> vector<64x8xf32>
    %c1_39 = arith.constant 1 : index
    %c0_40 = arith.constant 0 : index
    %c0_41 = arith.constant 0 : index
    %87 = vector.load %arg9[%c1_39, %c0_40, %c0_41] : memref<4x8x32xf32, #tpu.memory_space<vmem>>, vector<1x8x32xf32>
    %88 = vector.shape_cast %87 : vector<1x8x32xf32> to vector<8x32xf32>
    %cst_42 = arith.constant dense<0.000000e+00> : vector<64x32xf32>
    %89 = tpu.matmul %86, %88, %cst_42 {dimension_numbers = #tpu.dot_dimension_numbers<[1], [0], [0], [1], [0, 0, 1, 1], [], []>} : vector<64x8xf32>, vector<8x32xf32>, vector<64x32xf32> -> vector<64x32xf32>
    %90 = arith.addf %62, %89 : vector<64x32xf32>
    %91 = vector.extract_strided_slice %35 {offsets = [0, 16], sizes = [64, 8], strides = [1, 1]} : vector<64x96xf32> to vector<64x8xf32>
    %92 = vector.extract_strided_slice %35 {offsets = [0, 48], sizes = [64, 8], strides = [1, 1]} : vector<64x96xf32> to vector<64x8xf32>
    %93 = vector.extract_strided_slice %35 {offsets = [0, 80], sizes = [64, 8], strides = [1, 1]} : vector<64x96xf32> to vector<64x8xf32>
    %cst_43 = arith.constant dense<0.000000e+00> : vector<64x64xf32>
    %94 = tpu.matmul %91, %92, %cst_43 {dimension_numbers = #tpu.dot_dimension_numbers<[1], [1], [0], [0], [0, 0, 1, 0], [], []>} : vector<64x8xf32>, vector<64x8xf32>, vector<64x64xf32> -> vector<64x64xf32>
    %c2 = arith.constant 2 : index
    %c0_44 = arith.constant 0 : index
    %c0_45 = arith.constant 0 : index
    %95 = vector.load %arg6[%c2, %c0_44, %c0_45] : memref<4x64x64xf32, #tpu.memory_space<vmem>>, vector<1x64x64xf32>
    %96 = vector.shape_cast %95 : vector<1x64x64xf32> to vector<64x64xf32>
    %97 = arith.addf %94, %96 : vector<64x64xf32>
    %cst_46 = arith.constant dense<0xFF800000> : vector<64xf32>
    %98 = vector.multi_reduction <maximumf>, %97, %cst_46 [1] : vector<64x64xf32> to vector<64xf32>
    %99 = vector.shape_cast %98 : vector<64xf32> to vector<64x1xf32>
    %100 = vector.broadcast %99 : vector<64x1xf32> to vector<64x64xf32>
    %101 = arith.subf %97, %100 : vector<64x64xf32>
    %102 = math.exp %101 : vector<64x64xf32>
    %cst_47 = arith.constant dense<0.000000e+00> : vector<64xf32>
    %103 = vector.multi_reduction <add>, %102, %cst_47 [1] : vector<64x64xf32> to vector<64xf32>
    %104 = vector.shape_cast %103 : vector<64xf32> to vector<64x1xf32>
    %105 = tpu.reciprocal %104 {approx = true} : vector<64x1xf32> -> vector<64x1xf32>
    %106 = vector.broadcast %105 : vector<64x1xf32> to vector<64x64xf32>
    %107 = arith.mulf %102, %106 : vector<64x64xf32>
    %c2_48 = arith.constant 2 : index
    %108 = memref.load %arg8[%c2_48] : memref<4xf32, #tpu.memory_space<smem>>
    %109 = vector.broadcast %108 : f32 to vector<64x64xf32>
    %110 = arith.mulf %107, %109 : vector<64x64xf32>
    %c2_49 = arith.constant 2 : index
    %c0_50 = arith.constant 0 : index
    %c0_51 = arith.constant 0 : index
    %111 = vector.load %arg7[%c2_49, %c0_50, %c0_51] : memref<4x64x64xf32, #tpu.memory_space<vmem>>, vector<1x64x64xf32>
    %112 = vector.shape_cast %111 : vector<1x64x64xf32> to vector<64x64xf32>
    %113 = arith.subf %110, %112 : vector<64x64xf32>
    %cst_52 = arith.constant dense<0.000000e+00> : vector<64x8xf32>
    %114 = tpu.matmul %113, %93, %cst_52 {dimension_numbers = #tpu.dot_dimension_numbers<[1], [0], [0], [1], [0, 0, 1, 1], [], []>} : vector<64x64xf32>, vector<64x8xf32>, vector<64x8xf32> -> vector<64x8xf32>
    %c2_53 = arith.constant 2 : index
    %c0_54 = arith.constant 0 : index
    %c0_55 = arith.constant 0 : index
    %115 = vector.load %arg9[%c2_53, %c0_54, %c0_55] : memref<4x8x32xf32, #tpu.memory_space<vmem>>, vector<1x8x32xf32>
    %116 = vector.shape_cast %115 : vector<1x8x32xf32> to vector<8x32xf32>
    %cst_56 = arith.constant dense<0.000000e+00> : vector<64x32xf32>
    %117 = tpu.matmul %114, %116, %cst_56 {dimension_numbers = #tpu.dot_dimension_numbers<[1], [0], [0], [1], [0, 0, 1, 1], [], []>} : vector<64x8xf32>, vector<8x32xf32>, vector<64x32xf32> -> vector<64x32xf32>
    %118 = arith.addf %90, %117 : vector<64x32xf32>
    %119 = vector.extract_strided_slice %35 {offsets = [0, 24], sizes = [64, 8], strides = [1, 1]} : vector<64x96xf32> to vector<64x8xf32>
    %120 = vector.extract_strided_slice %35 {offsets = [0, 56], sizes = [64, 8], strides = [1, 1]} : vector<64x96xf32> to vector<64x8xf32>
    %121 = vector.extract_strided_slice %35 {offsets = [0, 88], sizes = [64, 8], strides = [1, 1]} : vector<64x96xf32> to vector<64x8xf32>
    %cst_57 = arith.constant dense<0.000000e+00> : vector<64x64xf32>
    %122 = tpu.matmul %119, %120, %cst_57 {dimension_numbers = #tpu.dot_dimension_numbers<[1], [1], [0], [0], [0, 0, 1, 0], [], []>} : vector<64x8xf32>, vector<64x8xf32>, vector<64x64xf32> -> vector<64x64xf32>
    %c3 = arith.constant 3 : index
    %c0_58 = arith.constant 0 : index
    %c0_59 = arith.constant 0 : index
    %123 = vector.load %arg6[%c3, %c0_58, %c0_59] : memref<4x64x64xf32, #tpu.memory_space<vmem>>, vector<1x64x64xf32>
    %124 = vector.shape_cast %123 : vector<1x64x64xf32> to vector<64x64xf32>
    %125 = arith.addf %122, %124 : vector<64x64xf32>
    %cst_60 = arith.constant dense<0xFF800000> : vector<64xf32>
    %126 = vector.multi_reduction <maximumf>, %125, %cst_60 [1] : vector<64x64xf32> to vector<64xf32>
    %127 = vector.shape_cast %126 : vector<64xf32> to vector<64x1xf32>
    %128 = vector.broadcast %127 : vector<64x1xf32> to vector<64x64xf32>
    %129 = arith.subf %125, %128 : vector<64x64xf32>
    %130 = math.exp %129 : vector<64x64xf32>
    %cst_61 = arith.constant dense<0.000000e+00> : vector<64xf32>
    %131 = vector.multi_reduction <add>, %130, %cst_61 [1] : vector<64x64xf32> to vector<64xf32>
    %132 = vector.shape_cast %131 : vector<64xf32> to vector<64x1xf32>
    %133 = tpu.reciprocal %132 {approx = true} : vector<64x1xf32> -> vector<64x1xf32>
    %134 = vector.broadcast %133 : vector<64x1xf32> to vector<64x64xf32>
    %135 = arith.mulf %130, %134 : vector<64x64xf32>
    %c3_62 = arith.constant 3 : index
    %136 = memref.load %arg8[%c3_62] : memref<4xf32, #tpu.memory_space<smem>>
    %137 = vector.broadcast %136 : f32 to vector<64x64xf32>
    %138 = arith.mulf %135, %137 : vector<64x64xf32>
    %c3_63 = arith.constant 3 : index
    %c0_64 = arith.constant 0 : index
    %c0_65 = arith.constant 0 : index
    %139 = vector.load %arg7[%c3_63, %c0_64, %c0_65] : memref<4x64x64xf32, #tpu.memory_space<vmem>>, vector<1x64x64xf32>
    %140 = vector.shape_cast %139 : vector<1x64x64xf32> to vector<64x64xf32>
    %141 = arith.subf %138, %140 : vector<64x64xf32>
    %cst_66 = arith.constant dense<0.000000e+00> : vector<64x8xf32>
    %142 = tpu.matmul %141, %121, %cst_66 {dimension_numbers = #tpu.dot_dimension_numbers<[1], [0], [0], [1], [0, 0, 1, 1], [], []>} : vector<64x64xf32>, vector<64x8xf32>, vector<64x8xf32> -> vector<64x8xf32>
    %c3_67 = arith.constant 3 : index
    %c0_68 = arith.constant 0 : index
    %c0_69 = arith.constant 0 : index
    %143 = vector.load %arg9[%c3_67, %c0_68, %c0_69] : memref<4x8x32xf32, #tpu.memory_space<vmem>>, vector<1x8x32xf32>
    %144 = vector.shape_cast %143 : vector<1x8x32xf32> to vector<8x32xf32>
    %cst_70 = arith.constant dense<0.000000e+00> : vector<64x32xf32>
    %145 = tpu.matmul %142, %144, %cst_70 {dimension_numbers = #tpu.dot_dimension_numbers<[1], [0], [0], [1], [0, 0, 1, 1], [], []>} : vector<64x8xf32>, vector<8x32xf32>, vector<64x32xf32> -> vector<64x32xf32>
    %146 = arith.addf %118, %145 : vector<64x32xf32>
    %147 = arith.addf %0, %146 : vector<64x32xf32>
    %c0_71 = arith.constant 0 : index
    %c0_72 = arith.constant 0 : index
    %148 = vector.load %arg10[%c0_71, %c0_72] : memref<1x32xf32, #tpu.memory_space<vmem>>, vector<1x32xf32>
    %149 = vector.shape_cast %148 : vector<1x32xf32> to vector<32xf32>
    %150 = vector.shape_cast %149 : vector<32xf32> to vector<1x32xf32>
    %151 = vector.broadcast %150 : vector<1x32xf32> to vector<64x32xf32>
    %152 = arith.addf %147, %151 : vector<64x32xf32>
    %cst_73 = arith.constant dense<0.000000e+00> : vector<64xf32>
    %153 = vector.multi_reduction <add>, %152, %cst_73 [1] : vector<64x32xf32> to vector<64xf32>
    %154 = vector.shape_cast %153 : vector<64xf32> to vector<64x1xf32>
    %cst_74 = arith.constant 3.200000e+01 : f32
    %155 = vector.broadcast %cst_74 : f32 to vector<64x1xf32>
    %156 = arith.divf %154, %155 : vector<64x1xf32>
    %157 = vector.broadcast %156 : vector<64x1xf32> to vector<64x32xf32>
    %158 = arith.subf %152, %157 : vector<64x32xf32>
    %159 = arith.mulf %158, %158 : vector<64x32xf32>
    %cst_75 = arith.constant dense<0.000000e+00> : vector<64xf32>
    %160 = vector.multi_reduction <add>, %159, %cst_75 [1] : vector<64x32xf32> to vector<64xf32>
    %161 = vector.shape_cast %160 : vector<64xf32> to vector<64x1xf32>
    %cst_76 = arith.constant 3.200000e+01 : f32
    %162 = vector.broadcast %cst_76 : f32 to vector<64x1xf32>
    %163 = arith.divf %161, %162 : vector<64x1xf32>
    %164 = vector.broadcast %156 : vector<64x1xf32> to vector<64x32xf32>
    %165 = arith.subf %152, %164 : vector<64x32xf32>
    %cst_77 = arith.constant 9.99999974E-6 : f32
    %166 = vector.broadcast %cst_77 : f32 to vector<64x1xf32>
    %167 = arith.addf %163, %166 : vector<64x1xf32>
    %168 = math.rsqrt %167 : vector<64x1xf32>
    %169 = vector.broadcast %168 : vector<64x1xf32> to vector<64x32xf32>
    %170 = arith.mulf %165, %169 : vector<64x32xf32>
    %c0_78 = arith.constant 0 : index
    %c0_79 = arith.constant 0 : index
    %171 = vector.load %arg11[%c0_78, %c0_79] : memref<1x32xf32, #tpu.memory_space<vmem>>, vector<1x32xf32>
    %172 = vector.shape_cast %171 : vector<1x32xf32> to vector<32xf32>
    %173 = vector.shape_cast %172 : vector<32xf32> to vector<1x32xf32>
    %174 = vector.broadcast %173 : vector<1x32xf32> to vector<64x32xf32>
    %175 = arith.mulf %170, %174 : vector<64x32xf32>
    %c0_80 = arith.constant 0 : index
    %c0_81 = arith.constant 0 : index
    %176 = vector.load %arg12[%c0_80, %c0_81] : memref<1x32xf32, #tpu.memory_space<vmem>>, vector<1x32xf32>
    %177 = vector.shape_cast %176 : vector<1x32xf32> to vector<32xf32>
    %178 = vector.shape_cast %177 : vector<32xf32> to vector<1x32xf32>
    %179 = vector.broadcast %178 : vector<1x32xf32> to vector<64x32xf32>
    %180 = arith.addf %175, %179 : vector<64x32xf32>
    %c0_82 = arith.constant 0 : index
    %c0_83 = arith.constant 0 : index
    %181 = vector.load %arg13[%c0_82, %c0_83] : memref<32x128xf32, #tpu.memory_space<vmem>>, vector<32x128xf32>
    %cst_84 = arith.constant dense<0.000000e+00> : vector<64x128xf32>
    %182 = tpu.matmul %180, %181, %cst_84 {dimension_numbers = #tpu.dot_dimension_numbers<[1], [0], [0], [1], [0, 0, 1, 1], [], []>} : vector<64x32xf32>, vector<32x128xf32>, vector<64x128xf32> -> vector<64x128xf32>
    %c0_85 = arith.constant 0 : index
    %c0_86 = arith.constant 0 : index
    %183 = vector.load %arg14[%c0_85, %c0_86] : memref<1x128xf32, #tpu.memory_space<vmem>>, vector<1x128xf32>
    %184 = vector.shape_cast %183 : vector<1x128xf32> to vector<128xf32>
    %185 = vector.shape_cast %184 : vector<128xf32> to vector<1x128xf32>
    %186 = vector.broadcast %185 : vector<1x128xf32> to vector<64x128xf32>
    %187 = arith.addf %182, %186 : vector<64x128xf32>
    %cst_87 = arith.constant 5.000000e-01 : f32
    %188 = vector.broadcast %cst_87 : f32 to vector<64x128xf32>
    %189 = arith.mulf %188, %187 : vector<64x128xf32>
    %cst_88 = arith.constant 0.707106769 : f32
    %190 = vector.broadcast %cst_88 : f32 to vector<64x128xf32>
    %191 = arith.mulf %187, %190 : vector<64x128xf32>
    %cst_89 = arith.constant 0.000000e+00 : f32
    %192 = vector.broadcast %cst_89 : f32 to vector<64x128xf32>
    %193 = arith.cmpf oge, %191, %192 : vector<64x128xf32>
    %cst_90 = arith.constant 1.000000e+00 : f32
    %cst_91 = arith.constant -1.000000e+00 : f32
    %194 = vector.broadcast %cst_90 : f32 to vector<64x128xf32>
    %195 = vector.broadcast %cst_91 : f32 to vector<64x128xf32>
    %196 = arith.select %193, %194, %195 : vector<64x128xi1>, vector<64x128xf32>
    %197 = math.absf %191 : vector<64x128xf32>
    %cst_92 = arith.constant 0.327591091 : f32
    %198 = vector.broadcast %cst_92 : f32 to vector<64x128xf32>
    %199 = arith.mulf %198, %197 : vector<64x128xf32>
    %cst_93 = arith.constant 1.000000e+00 : f32
    %200 = vector.broadcast %cst_93 : f32 to vector<64x128xf32>
    %201 = arith.addf %200, %199 : vector<64x128xf32>
    %cst_94 = arith.constant 1.000000e+00 : f32
    %202 = vector.broadcast %cst_94 : f32 to vector<64x128xf32>
    %203 = arith.divf %202, %201 : vector<64x128xf32>
    %cst_95 = arith.constant 1.06140542 : f32
    %204 = vector.broadcast %cst_95 : f32 to vector<64x128xf32>
    %205 = arith.mulf %204, %203 : vector<64x128xf32>
    %cst_96 = arith.constant -1.45315206 : f32
    %206 = vector.broadcast %cst_96 : f32 to vector<64x128xf32>
    %207 = arith.addf %205, %206 : vector<64x128xf32>
    %208 = arith.mulf %207, %203 : vector<64x128xf32>
    %cst_97 = arith.constant 1.42141378 : f32
    %209 = vector.broadcast %cst_97 : f32 to vector<64x128xf32>
    %210 = arith.addf %208, %209 : vector<64x128xf32>
    %211 = arith.mulf %210, %203 : vector<64x128xf32>
    %cst_98 = arith.constant -0.284496725 : f32
    %212 = vector.broadcast %cst_98 : f32 to vector<64x128xf32>
    %213 = arith.addf %211, %212 : vector<64x128xf32>
    %214 = arith.mulf %213, %203 : vector<64x128xf32>
    %cst_99 = arith.constant 0.254829586 : f32
    %215 = vector.broadcast %cst_99 : f32 to vector<64x128xf32>
    %216 = arith.addf %214, %215 : vector<64x128xf32>
    %217 = arith.mulf %216, %203 : vector<64x128xf32>
    %cst_100 = arith.constant 0.000000e+00 : f32
    %218 = vector.broadcast %cst_100 : f32 to vector<64x128xf32>
    %219 = arith.subf %218, %197 : vector<64x128xf32>
    %220 = arith.mulf %219, %197 : vector<64x128xf32>
    %221 = math.exp %220 : vector<64x128xf32>
    %222 = arith.mulf %217, %221 : vector<64x128xf32>
    %cst_101 = arith.constant 1.000000e+00 : f32
    %223 = vector.broadcast %cst_101 : f32 to vector<64x128xf32>
    %224 = arith.subf %223, %222 : vector<64x128xf32>
    %225 = arith.mulf %196, %224 : vector<64x128xf32>
    %cst_102 = arith.constant 1.000000e+00 : f32
    %226 = vector.broadcast %cst_102 : f32 to vector<64x128xf32>
    %227 = arith.addf %226, %225 : vector<64x128xf32>
    %228 = arith.mulf %189, %227 : vector<64x128xf32>
    %c0_103 = arith.constant 0 : index
    %c0_104 = arith.constant 0 : index
    %229 = vector.load %arg15[%c0_103, %c0_104] : memref<128x32xf32, #tpu.memory_space<vmem>>, vector<128x32xf32>
    %cst_105 = arith.constant dense<0.000000e+00> : vector<64x32xf32>
    %230 = tpu.matmul %228, %229, %cst_105 {dimension_numbers = #tpu.dot_dimension_numbers<[1], [0], [0], [1], [0, 0, 1, 1], [], []>} : vector<64x128xf32>, vector<128x32xf32>, vector<64x32xf32> -> vector<64x32xf32>
    %c0_106 = arith.constant 0 : index
    %c0_107 = arith.constant 0 : index
    %231 = vector.load %arg16[%c0_106, %c0_107] : memref<1x32xf32, #tpu.memory_space<vmem>>, vector<1x32xf32>
    %232 = vector.shape_cast %231 : vector<1x32xf32> to vector<32xf32>
    %233 = vector.shape_cast %232 : vector<32xf32> to vector<1x32xf32>
    %234 = vector.broadcast %233 : vector<1x32xf32> to vector<64x32xf32>
    %235 = arith.addf %230, %234 : vector<64x32xf32>
    %236 = arith.addf %152, %235 : vector<64x32xf32>
    %c0_108 = arith.constant 0 : index
    %c0_109 = arith.constant 0 : index
    %237 = vector.load %arg17[%c0_108, %c0_109] : memref<64x32xf32, #tpu.memory_space<vmem>>, vector<64x32xf32>
    tpu.vector_store %arg17[%c0_108, %c0_109], %236 {strides = array<i32>} : memref<64x32xf32, #tpu.memory_space<vmem>>, vector<64x32xf32>,
    return
  }
  func.func @transform_0(%arg0: i32) -> (i32, i32) {
    %c0_i32 = arith.constant 0 : i32
    %c0_i32_0 = arith.constant 0 : i32
    return %arg0, %c0_i32 : i32, i32
  }
  func.func @transform_1(%arg0: i32) -> (i32, i32) {
    %c0_i32 = arith.constant 0 : i32
    %c0_i32_0 = arith.constant 0 : i32
    %c0_i32_1 = arith.constant 0 : i32
    return %c0_i32, %c0_i32_0 : i32, i32
  }
  func.func @transform_2(%arg0: i32) -> (i32, i32) {
    %c0_i32 = arith.constant 0 : i32
    %c0_i32_0 = arith.constant 0 : i32
    %c0_i32_1 = arith.constant 0 : i32
    return %c0_i32, %c0_i32_0 : i32, i32
  }
  func.func @transform_3(%arg0: i32) -> (i32, i32) {
    %c0_i32 = arith.constant 0 : i32
    %c0_i32_0 = arith.constant 0 : i32
    %c0_i32_1 = arith.constant 0 : i32
    return %c0_i32, %c0_i32_0 : i32, i32
  }
  func.func @transform_4(%arg0: i32) -> (i32, i32) {
    %c0_i32 = arith.constant 0 : i32
    %c0_i32_0 = arith.constant 0 : i32
    %c0_i32_1 = arith.constant 0 : i32
    return %c0_i32, %c0_i32_0 : i32, i32
  }
  func.func @transform_5(%arg0: i32) -> (i32, i32, i32) {
    %c0_i32 = arith.constant 0 : i32
    %c0_i32_0 = arith.constant 0 : i32
    %c0_i32_1 = arith.constant 0 : i32
    %c0_i32_2 = arith.constant 0 : i32
    return %c0_i32, %c0_i32_0, %c0_i32_1 : i32, i32, i32
  }
  func.func @transform_6(%arg0: i32) -> (i32, i32, i32) {
    %c0_i32 = arith.constant 0 : i32
    %c0_i32_0 = arith.constant 0 : i32
    %c0_i32_1 = arith.constant 0 : i32
    %c0_i32_2 = arith.constant 0 : i32
    return %c0_i32, %c0_i32_0, %c0_i32_1 : i32, i32, i32
  }
  func.func @transform_7(%arg0: i32) -> i32 {
    %c0_i32 = arith.constant 0 : i32
    %c0_i32_0 = arith.constant 0 : i32
    return %c0_i32 : i32
  }
  func.func @transform_8(%arg0: i32) -> (i32, i32, i32) {
    %c0_i32 = arith.constant 0 : i32
    %c0_i32_0 = arith.constant 0 : i32
    %c0_i32_1 = arith.constant 0 : i32
    %c0_i32_2 = arith.constant 0 : i32
    return %c0_i32, %c0_i32_0, %c0_i32_1 : i32, i32, i32
  }
  func.func @transform_9(%arg0: i32) -> (i32, i32) {
    %c0_i32 = arith.constant 0 : i32
    %c0_i32_0 = arith.constant 0 : i32
    %c0_i32_1 = arith.constant 0 : i32
    return %c0_i32, %c0_i32_0 : i32, i32
  }
  func.func @transform_10(%arg0: i32) -> (i32, i32) {
    %c0_i32 = arith.constant 0 : i32
    %c0_i32_0 = arith.constant 0 : i32
    %c0_i32_1 = arith.constant 0 : i32
    return %c0_i32, %c0_i32_0 : i32, i32
  }
  func.func @transform_11(%arg0: i32) -> (i32, i32) {
    %c0_i32 = arith.constant 0 : i32
    %c0_i32_0 = arith.constant 0 : i32
    %c0_i32_1 = arith.constant 0 : i32
    return %c0_i32, %c0_i32_0 : i32, i32
  }
  func.func @transform_12(%arg0: i32) -> (i32, i32) {
    %c0_i32 = arith.constant 0 : i32
    %c0_i32_0 = arith.constant 0 : i32
    %c0_i32_1 = arith.constant 0 : i32
    return %c0_i32, %c0_i32_0 : i32, i32
  }
  func.func @transform_13(%arg0: i32) -> (i32, i32) {
    %c0_i32 = arith.constant 0 : i32
    %c0_i32_0 = arith.constant 0 : i32
    %c0_i32_1 = arith.constant 0 : i32
    return %c0_i32, %c0_i32_0 : i32, i32
  }
  func.func @transform_14(%arg0: i32) -> (i32, i32) {
    %c0_i32 = arith.constant 0 : i32
    %c0_i32_0 = arith.constant 0 : i32
    %c0_i32_1 = arith.constant 0 : i32
    return %c0_i32, %c0_i32_0 : i32, i32
  }
  func.func @transform_15(%arg0: i32) -> (i32, i32) {
    %c0_i32 = arith.constant 0 : i32
    %c0_i32_0 = arith.constant 0 : i32
    %c0_i32_1 = arith.constant 0 : i32
    return %c0_i32, %c0_i32_0 : i32, i32
  }
  func.func @transform_16(%arg0: i32) -> (i32, i32) {
    %c0_i32 = arith.constant 0 : i32
    %c0_i32_0 = arith.constant 0 : i32
    return %arg0, %c0_i32 : i32, i32
  }
}

</mosaic_0001>

<llo_original>
// kernel: swin_block_forward.1
$region0: #{swin_block_forward.1}
  #allocation0 [shape = 'u32[]', space=smem, size = 0x4, offset = 0x4, fixed_abs, tag = 'smem constant byte address 0x4 - core index']
  #allocation1 [shape = 'u32[144,128]{1,0:T(1,128)}', space=vmem, size = 0x12000, scoped, tag = 'internal scratch']
  %s0 = inlined_call_operand.vmem [shape: f32[128,32], index: 0, kind: input, shape index: {}]
  %s1 = inlined_call_operand.vmem [shape: f32[1,32], index: 1, kind: input, shape index: {}]
  %s2 = inlined_call_operand.vmem [shape: f32[1,32], index: 2, kind: input, shape index: {}]
  %s3 = inlined_call_operand.vmem [shape: f32[32,96], index: 3, kind: input, shape index: {}]
  %s4 = inlined_call_operand.vmem [shape: f32[1,96], index: 4, kind: input, shape index: {}]
  %s5 = inlined_call_operand.vmem [shape: f32[4,64,64], index: 5, kind: input, shape index: {}]
  %s6 = inlined_call_operand.vmem [shape: f32[4,64,64], index: 6, kind: input, shape index: {}]
  %s7 = inlined_call_operand.vmem [shape: f32[4], index: 7, kind: input, shape index: {}]
  %s8 = inlined_call_operand.vmem [shape: f32[4,8,32], index: 8, kind: input, shape index: {}]
  %s9 = inlined_call_operand.vmem [shape: f32[1,32], index: 9, kind: input, shape index: {}]
  %s10 = inlined_call_operand.vmem [shape: f32[1,32], index: 10, kind: input, shape index: {}]
  %s11 = inlined_call_operand.vmem [shape: f32[1,32], index: 11, kind: input, shape index: {}]
  %s12 = inlined_call_operand.vmem [shape: f32[32,128], index: 12, kind: input, shape index: {}]
  %s13 = inlined_call_operand.vmem [shape: f32[1,128], index: 13, kind: input, shape index: {}]
  %s14 = inlined_call_operand.vmem [shape: f32[128,32], index: 14, kind: input, shape index: {}]
  %s15 = inlined_call_operand.vmem [shape: f32[1,32], index: 15, kind: input, shape index: {}]
  %s16 = inlined_call_operand.vmem [shape: f32[128,32], index: 16, kind: output, shape index: {}]
  %s17 = sld [smem:[#allocation0]]
  $region101: #{swin_block_forward.1} parent=0
    _
  %s19 = ssub.s32 1, %s17
  %s20 = scalar_select 0, %s19, %s17
  $region1: #{swin_block_forward.1} parent=0
    #allocation2 [shape = 'u8[512]{0}', space=smem, size = 0x200, scoped, tag = 'input window, operand 7, single buffered']
    #allocation3 [shape = 's32[2]{0}', space=sflag, size = 0x8, scoped, tag = 'scoped memory for swin_block_forward.1']
    %21 = vsyncpa [#allocation3], 0
    loop: start=0, step=1, limit=4
    $region2: #{swin_block_forward.1} parent=1 // loop_pre_header
      _
    $region3: #{swin_block_forward.1} parent=1 // loop_header
      %s23 = sphi 0, %s27
      %p24 = scmp.ge.s32.totalorder %s23, 4
      %s33 = sphi 0, %s35
      %s36 = sphi 0, %s33
      %s37 = sphi 0, %s36
      %s53 = sphi 0, %s37
      %s57 = sphi 0, %s57
      %s59 = sphi 0, %s57
      %s60 = sphi 0, %s59
      %s74 = sphi 0, %s60
      %s78 = sphi 0, %s78
      %s80 = sphi 0, %s78
      %s81 = sphi 0, %s80
      %s95 = sphi 0, %s81
      %s99 = sphi 0, %s99
      %s101 = sphi 0, %s99
      %s102 = sphi 0, %s101
      %s116 = sphi 0, %s102
      %s120 = sphi 0, %s120
      %s122 = sphi 0, %s120
      %s123 = sphi 0, %s122
      %s137 = sphi 0, %s123
      %s141 = sphi 0, %s141
      %s143 = sphi 0, %s141
      %s144 = sphi 0, %s143
      %s158 = sphi 0, %s144
      %s162 = sphi 0, %s162
      %s164 = sphi 0, %s162
      %s165 = sphi 0, %s164
      %s179 = sphi 0, %s165
      %s183 = sphi 0, %s183
      %s185 = sphi 0, %s183
      %s186 = sphi 0, %s185
      %s200 = sphi 0, %s186
      %s204 = sphi 0, %s204
      %s206 = sphi 0, %s204
      %s207 = sphi 0, %s206
      %s221 = sphi 0, %s207
      %s225 = sphi 0, %s225
      %s227 = sphi 0, %s225
      %s228 = sphi 0, %s227
      %s242 = sphi 0, %s228
      %s246 = sphi 0, %s246
      %s248 = sphi 0, %s246
      %s249 = sphi 0, %s248
      %s263 = sphi 0, %s249
      %s267 = sphi 0, %s267
      %s269 = sphi 0, %s267
      %s270 = sphi 0, %s269
      %s284 = sphi 0, %s270
      %s288 = sphi 0, %s288
      %s290 = sphi 0, %s288
      %s291 = sphi 0, %s290
      %s305 = sphi 0, %s291
      %s309 = sphi 0, %s309
      %s311 = sphi 0, %s309
      %s312 = sphi 0, %s311
      %s326 = sphi 0, %s312
      %s330 = sphi 0, %s330
      %s332 = sphi 0, %s330
      %s333 = sphi 0, %s332
      %s347 = sphi 0, %s333
      %s351 = sphi 0, %s351
      %s353 = sphi 0, %s351
      %s354 = sphi 0, %s353
      %s368 = sphi 0, %s354
      %s374 = sphi 0, %s376
      %s377 = sphi 0, %s374
      %s378 = sphi 0, %s377
      %s394 = sphi 0, %s378
    $region4: #{swin_block_forward.1} parent=1 // loop_header_branch
      %26 = sbr.rel (%p24) target = $region8
    $region5: #{swin_block_forward.1} parent=1 // loop_body
      %s28 = ssub.s32 %s23, 1
      %s29 = ssub.s32 %s23, 2
      %s30 = sadd.s32 %s23, 1
      %s31 = ssub.s32 %s23, %s30
      %p32 = scmp.eq.s32.totalorder %s31, 0
      %s34 = sadd.s32 %s33, 1
      %s35 = scalar_select %p32, %s33, %s34
      %p38 = pneg %p32
      %p39 = scmp.eq.s32.totalorder %s23, 1
      %p40 = por %p38, %p39
      %p41 = scmp.ne.s32.totalorder %s33, %s36
      %p42 = scmp.eq.s32.totalorder %s23, 0
      %p43 = por %p41, %p42
      %p44 = scmp.ne.s32.totalorder %s33, %s36
      %p45 = scmp.eq.s32.totalorder %s28, 1
      %p46 = por %p44, %p45
      %p47 = scmp.ne.s32.totalorder %s36, %s37
      %p48 = scmp.eq.s32.totalorder %s28, 0
      %p49 = por %p47, %p48
      %p50 = scmp.ne.s32.totalorder %s36, %s37
      %p51 = scmp.eq.s32.totalorder %s29, 1
      %p52 = por %p50, %p51
      %p54 = scmp.ne.s32.totalorder %s37, %s53
      %p55 = scmp.eq.s32.totalorder %s29, 0
      %p56 = por %p54, %p55
      %s58 = sadd.s32 %s57, 1
      %p61 = scmp.eq.s32.totalorder %s23, 1
      %p62 = scmp.ne.s32.totalorder %s57, %s59
      %p63 = scmp.eq.s32.totalorder %s23, 0
      %p64 = por %p62, %p63
      %p65 = scmp.ne.s32.totalorder %s57, %s59
      %p66 = scmp.eq.s32.totalorder %s28, 1
      %p67 = por %p65, %p66
      %p68 = scmp.ne.s32.totalorder %s59, %s60
      %p69 = scmp.eq.s32.totalorder %s28, 0
      %p70 = por %p68, %p69
      %p71 = scmp.ne.s32.totalorder %s59, %s60
      %p72 = scmp.eq.s32.totalorder %s29, 1
      %p73 = por %p71, %p72
      %p75 = scmp.ne.s32.totalorder %s60, %s74
      %p76 = scmp.eq.s32.totalorder %s29, 0
      %p77 = por %p75, %p76
      %s79 = sadd.s32 %s78, 1
      %p82 = scmp.eq.s32.totalorder %s23, 1
      %p83 = scmp.ne.s32.totalorder %s78, %s80
      %p84 = scmp.eq.s32.totalorder %s23, 0
      %p85 = por %p83, %p84
      %p86 = scmp.ne.s32.totalorder %s78, %s80
      %p87 = scmp.eq.s32.totalorder %s28, 1
      %p88 = por %p86, %p87
      %p89 = scmp.ne.s32.totalorder %s80, %s81
      %p90 = scmp.eq.s32.totalorder %s28, 0
      %p91 = por %p89, %p90
      %p92 = scmp.ne.s32.totalorder %s80, %s81
      %p93 = scmp.eq.s32.totalorder %s29, 1
      %p94 = por %p92, %p93
      %p96 = scmp.ne.s32.totalorder %s81, %s95
      %p97 = scmp.eq.s32.totalorder %s29, 0
      %p98 = por %p96, %p97
      %s100 = sadd.s32 %s99, 1
      %p103 = scmp.eq.s32.totalorder %s23, 1
      %p104 = scmp.ne.s32.totalorder %s99, %s101
      %p105 = scmp.eq.s32.totalorder %s23, 0
      %p106 = por %p104, %p105
      %p107 = scmp.ne.s32.totalorder %s99, %s101
      %p108 = scmp.eq.s32.totalorder %s28, 1
      %p109 = por %p107, %p108
      %p110 = scmp.ne.s32.totalorder %s101, %s102
      %p111 = scmp.eq.s32.totalorder %s28, 0
      %p112 = por %p110, %p111
      %p113 = scmp.ne.s32.totalorder %s101, %s102
      %p114 = scmp.eq.s32.totalorder %s29, 1
      %p115 = por %p113, %p114
      %p117 = scmp.ne.s32.totalorder %s102, %s116
      %p118 = scmp.eq.s32.totalorder %s29, 0
      %p119 = por %p117, %p118
      %s121 = sadd.s32 %s120, 1
      %p124 = scmp.eq.s32.totalorder %s23, 1
      %p125 = scmp.ne.s32.totalorder %s120, %s122
      %p126 = scmp.eq.s32.totalorder %s23, 0
      %p127 = por %p125, %p126
      %p128 = scmp.ne.s32.totalorder %s120, %s122
      %p129 = scmp.eq.s32.totalorder %s28, 1
      %p130 = por %p128, %p129
      %p131 = scmp.ne.s32.totalorder %s122, %s123
      %p132 = scmp.eq.s32.totalorder %s28, 0
      %p133 = por %p131, %p132
      %p134 = scmp.ne.s32.totalorder %s122, %s123
      %p135 = scmp.eq.s32.totalorder %s29, 1
      %p136 = por %p134, %p135
      %p138 = scmp.ne.s32.totalorder %s123, %s137
      %p139 = scmp.eq.s32.totalorder %s29, 0
      %p140 = por %p138, %p139
      %s142 = sadd.s32 %s141, 1
      %p145 = scmp.eq.s32.totalorder %s23, 1
      %p146 = scmp.ne.s32.totalorder %s141, %s143
      %p147 = scmp.eq.s32.totalorder %s23, 0
      %p148 = por %p146, %p147
      %p149 = scmp.ne.s32.totalorder %s141, %s143
      %p150 = scmp.eq.s32.totalorder %s28, 1
      %p151 = por %p149, %p150
      %p152 = scmp.ne.s32.totalorder %s143, %s144
      %p153 = scmp.eq.s32.totalorder %s28, 0
      %p154 = por %p152, %p153
      %p155 = scmp.ne.s32.totalorder %s143, %s144
      %p156 = scmp.eq.s32.totalorder %s29, 1
      %p157 = por %p155, %p156
      %p159 = scmp.ne.s32.totalorder %s144, %s158
      %p160 = scmp.eq.s32.totalorder %s29, 0
      %p161 = por %p159, %p160
      %s163 = sadd.s32 %s162, 1
      %p166 = scmp.eq.s32.totalorder %s23, 1
      %p167 = scmp.ne.s32.totalorder %s162, %s164
      %p168 = scmp.eq.s32.totalorder %s23, 0
      %p169 = por %p167, %p168
      %p170 = scmp.ne.s32.totalorder %s162, %s164
      %p171 = scmp.eq.s32.totalorder %s28, 1
      %p172 = por %p170, %p171
      %p173 = scmp.ne.s32.totalorder %s164, %s165
      %p174 = scmp.eq.s32.totalorder %s28, 0
      %p175 = por %p173, %p174
      %p176 = scmp.ne.s32.totalorder %s164, %s165
      %p177 = scmp.eq.s32.totalorder %s29, 1
      %p178 = por %p176, %p177
      %p180 = scmp.ne.s32.totalorder %s165, %s179
      %p181 = scmp.eq.s32.totalorder %s29, 0
      %p182 = por %p180, %p181
      %s184 = sadd.s32 %s183, 1
      %p187 = scmp.eq.s32.totalorder %s23, 1
      %p188 = scmp.ne.s32.totalorder %s183, %s185
      %p189 = scmp.eq.s32.totalorder %s23, 0
      %p190 = por %p188, %p189
      %p191 = scmp.ne.s32.totalorder %s183, %s185
      %p192 = scmp.eq.s32.totalorder %s28, 1
      %p193 = por %p191, %p192
      %p194 = scmp.ne.s32.totalorder %s185, %s186
      %p195 = scmp.eq.s32.totalorder %s28, 0
      %p196 = por %p194, %p195
      %p197 = scmp.ne.s32.totalorder %s185, %s186
      %p198 = scmp.eq.s32.totalorder %s29, 1
      %p199 = por %p197, %p198
      %p201 = scmp.ne.s32.totalorder %s186, %s200
      %p202 = scmp.eq.s32.totalorder %s29, 0
      %p203 = por %p201, %p202
      %s205 = sadd.s32 %s204, 1
      %p208 = scmp.eq.s32.totalorder %s23, 1
      %p209 = scmp.ne.s32.totalorder %s204, %s206
      %p210 = scmp.eq.s32.totalorder %s23, 0
      %p211 = por %p209, %p210
      %p212 = scmp.ne.s32.totalorder %s204, %s206
      %p213 = scmp.eq.s32.totalorder %s28, 1
      %p214 = por %p212, %p213
      %p215 = scmp.ne.s32.totalorder %s206, %s207
      %p216 = scmp.eq.s32.totalorder %s28, 0
      %p217 = por %p215, %p216
      %p218 = scmp.ne.s32.totalorder %s206, %s207
      %p219 = scmp.eq.s32.totalorder %s29, 1
      %p220 = por %p218, %p219
      %p222 = scmp.ne.s32.totalorder %s207, %s221
      %p223 = scmp.eq.s32.totalorder %s29, 0
      %p224 = por %p222, %p223
      %s226 = sadd.s32 %s225, 1
      %p229 = scmp.eq.s32.totalorder %s23, 1
      %p230 = scmp.ne.s32.totalorder %s225, %s227
      %p231 = scmp.eq.s32.totalorder %s23, 0
      %p232 = por %p230, %p231
      %p233 = scmp.ne.s32.totalorder %s225, %s227
      %p234 = scmp.eq.s32.totalorder %s28, 1
      %p235 = por %p233, %p234
      %p236 = scmp.ne.s32.totalorder %s227, %s228
      %p237 = scmp.eq.s32.totalorder %s28, 0
      %p238 = por %p236, %p237
      %p239 = scmp.ne.s32.totalorder %s227, %s228
      %p240 = scmp.eq.s32.totalorder %s29, 1
      %p241 = por %p239, %p240
      %p243 = scmp.ne.s32.totalorder %s228, %s242
      %p244 = scmp.eq.s32.totalorder %s29, 0
      %p245 = por %p243, %p244
      %s247 = sadd.s32 %s246, 1
      %p250 = scmp.eq.s32.totalorder %s23, 1
      %p251 = scmp.ne.s32.totalorder %s246, %s248
      %p252 = scmp.eq.s32.totalorder %s23, 0
      %p253 = por %p251, %p252
      %p254 = scmp.ne.s32.totalorder %s246, %s248
      %p255 = scmp.eq.s32.totalorder %s28, 1
      %p256 = por %p254, %p255
      %p257 = scmp.ne.s32.totalorder %s248, %s249
      %p258 = scmp.eq.s32.totalorder %s28, 0
      %p259 = por %p257, %p258
      %p260 = scmp.ne.s32.totalorder %s248, %s249
      %p261 = scmp.eq.s32.totalorder %s29, 1
      %p262 = por %p260, %p261
      %p264 = scmp.ne.s32.totalorder %s249, %s263
      %p265 = scmp.eq.s32.totalorder %s29, 0
      %p266 = por %p264, %p265
      %s268 = sadd.s32 %s267, 1
      %p271 = scmp.eq.s32.totalorder %s23, 1
      %p272 = scmp.ne.s32.totalorder %s267, %s269
      %p273 = scmp.eq.s32.totalorder %s23, 0
      %p274 = por %p272, %p273
      %p275 = scmp.ne.s32.totalorder %s267, %s269
      %p276 = scmp.eq.s32.totalorder %s28, 1
      %p277 = por %p275, %p276
      %p278 = scmp.ne.s32.totalorder %s269, %s270
      %p279 = scmp.eq.s32.totalorder %s28, 0
      %p280 = por %p278, %p279
      %p281 = scmp.ne.s32.totalorder %s269, %s270
      %p282 = scmp.eq.s32.totalorder %s29, 1
      %p283 = por %p281, %p282
      %p285 = scmp.ne.s32.totalorder %s270, %s284
      %p286 = scmp.eq.s32.totalorder %s29, 0
      %p287 = por %p285, %p286
      %s289 = sadd.s32 %s288, 1
      %p292 = scmp.eq.s32.totalorder %s23, 1
      %p293 = scmp.ne.s32.totalorder %s288, %s290
      %p294 = scmp.eq.s32.totalorder %s23, 0
      %p295 = por %p293, %p294
      %p296 = scmp.ne.s32.totalorder %s288, %s290
      %p297 = scmp.eq.s32.totalorder %s28, 1
      %p298 = por %p296, %p297
      %p299 = scmp.ne.s32.totalorder %s290, %s291
      %p300 = scmp.eq.s32.totalorder %s28, 0
      %p301 = por %p299, %p300
      %p302 = scmp.ne.s32.totalorder %s290, %s291
      %p303 = scmp.eq.s32.totalorder %s29, 1
      %p304 = por %p302, %p303
      %p306 = scmp.ne.s32.totalorder %s291, %s305
      %p307 = scmp.eq.s32.totalorder %s29, 0
      %p308 = por %p306, %p307
      %s310 = sadd.s32 %s309, 1
      %p313 = scmp.eq.s32.totalorder %s23, 1
      %p314 = scmp.ne.s32.totalorder %s309, %s311
      %p315 = scmp.eq.s32.totalorder %s23, 0
      %p316 = por %p314, %p315
      %p317 = scmp.ne.s32.totalorder %s309, %s311
      %p318 = scmp.eq.s32.totalorder %s28, 1
      %p319 = por %p317, %p318
      %p320 = scmp.ne.s32.totalorder %s311, %s312
      %p321 = scmp.eq.s32.totalorder %s28, 0
      %p322 = por %p320, %p321
      %p323 = scmp.ne.s32.totalorder %s311, %s312
      %p324 = scmp.eq.s32.totalorder %s29, 1
      %p325 = por %p323, %p324
      %p327 = scmp.ne.s32.totalorder %s312, %s326
      %p328 = scmp.eq.s32.totalorder %s29, 0
      %p329 = por %p327, %p328
      %s331 = sadd.s32 %s330, 1
      %p334 = scmp.eq.s32.totalorder %s23, 1
      %p335 = scmp.ne.s32.totalorder %s330, %s332
      %p336 = scmp.eq.s32.totalorder %s23, 0
      %p337 = por %p335, %p336
      %p338 = scmp.ne.s32.totalorder %s330, %s332
      %p339 = scmp.eq.s32.totalorder %s28, 1
      %p340 = por %p338, %p339
      %p341 = scmp.ne.s32.totalorder %s332, %s333
      %p342 = scmp.eq.s32.totalorder %s28, 0
      %p343 = por %p341, %p342
      %p344 = scmp.ne.s32.totalorder %s332, %s333
      %p345 = scmp.eq.s32.totalorder %s29, 1
      %p346 = por %p344, %p345
      %p348 = scmp.ne.s32.totalorder %s333, %s347
      %p349 = scmp.eq.s32.totalorder %s29, 0
      %p350 = por %p348, %p349
      %s352 = sadd.s32 %s351, 1
      %p355 = scmp.eq.s32.totalorder %s23, 1
      %p356 = scmp.ne.s32.totalorder %s351, %s353
      %p357 = scmp.eq.s32.totalorder %s23, 0
      %p358 = por %p356, %p357
      %p359 = scmp.ne.s32.totalorder %s351, %s353
      %p360 = scmp.eq.s32.totalorder %s28, 1
      %p361 = por %p359, %p360
      %p362 = scmp.ne.s32.totalorder %s353, %s354
      %p363 = scmp.eq.s32.totalorder %s28, 0
      %p364 = por %p362, %p363
      %p365 = scmp.ne.s32.totalorder %s353, %s354
      %p366 = scmp.eq.s32.totalorder %s29, 1
      %p367 = por %p365, %p366
      %p369 = scmp.ne.s32.totalorder %s354, %s368
      %p370 = scmp.eq.s32.totalorder %s29, 0
      %p371 = por %p369, %p370
      %s372 = ssub.s32 %s23, %s30
      %p373 = scmp.eq.s32.totalorder %s372, 0
      %s375 = sadd.s32 %s374, 1
      %s376 = scalar_select %p373, %s374, %s375
      %p379 = pneg %p373
      %p380 = scmp.eq.s32.totalorder %s23, 1
      %p381 = por %p379, %p380
      %p382 = scmp.ne.s32.totalorder %s374, %s377
      %p383 = scmp.eq.s32.totalorder %s23, 0
      %p384 = por %p382, %p383
      %p385 = scmp.ne.s32.totalorder %s374, %s377
      %p386 = scmp.eq.s32.totalorder %s28, 1
      %p387 = por %p385, %p386
      %p388 = scmp.ne.s32.totalorder %s377, %s378
      %p389 = scmp.eq.s32.totalorder %s28, 0
      %p390 = por %p388, %p389
      %p391 = scmp.ne.s32.totalorder %s377, %s378
      %p392 = scmp.eq.s32.totalorder %s29, 1
      %p393 = por %p391, %p392
      %p395 = scmp.ne.s32.totalorder %s378, %s394
      %p396 = scmp.eq.s32.totalorder %s29, 0
      %p397 = por %p395, %p396
      %p398 = scmp.le.s32.totalorder 1, %s23
      %p399 = scmp.lt.s32.totalorder %s23, 3
      %p400 = pnand %p398, %p399
      %p401 = pneg %p400
      // Predicated region
      $region9: #{swin_block_forward.1} parent=5 // pred_check
        _
      $region10: #{swin_block_forward.1} parent=5 // pred_check_branch
        %403 = sbr.rel (%p400) target = $region12
      $region11: #{swin_block_forward.1} parent=5 // pred_region
        %s404 = ssub.s32 %s23, 1
        // Predicated region
        $region13: #{swin_block_forward.1} parent=11 // pred_check
          %p405 = pneg %p70
        $region14: #{swin_block_forward.1} parent=11 // pred_check_branch
          %407 = sbr.rel (%p405) target = $region16
        $region15: #{swin_block_forward.1} parent=11 // pred_region
          _
        $region16: #{swin_block_forward.1} parent=11 // pred_fallthru
          _
        // Predicated region
        $region17: #{swin_block_forward.1} parent=11 // pred_check
          %p408 = pneg %p91
        $region18: #{swin_block_forward.1} parent=11 // pred_check_branch
          %410 = sbr.rel (%p408) target = $region20
        $region19: #{swin_block_forward.1} parent=11 // pred_region
          _
        $region20: #{swin_block_forward.1} parent=11 // pred_fallthru
          _
        // Predicated region
        $region21: #{swin_block_forward.1} parent=11 // pred_check
          %p411 = pneg %p112
        $region22: #{swin_block_forward.1} parent=11 // pred_check_branch
          %413 = sbr.rel (%p411) target = $region24
        $region23: #{swin_block_forward.1} parent=11 // pred_region
          _
        $region24: #{swin_block_forward.1} parent=11 // pred_fallthru
          _
        // Predicated region
        $region25: #{swin_block_forward.1} parent=11 // pred_check
          %p414 = pneg %p133
        $region26: #{swin_block_forward.1} parent=11 // pred_check_branch
          %416 = sbr.rel (%p414) target = $region28
        $region27: #{swin_block_forward.1} parent=11 // pred_region
          _
        $region28: #{swin_block_forward.1} parent=11 // pred_fallthru
          _
        // Predicated region
        $region29: #{swin_block_forward.1} parent=11 // pred_check
          %p417 = pneg %p154
        $region30: #{swin_block_forward.1} parent=11 // pred_check_branch
          %419 = sbr.rel (%p417) target = $region32
        $region31: #{swin_block_forward.1} parent=11 // pred_region
          _
        $region32: #{swin_block_forward.1} parent=11 // pred_fallthru
          _
        // Predicated region
        $region33: #{swin_block_forward.1} parent=11 // pred_check
          %p420 = pneg %p175
        $region34: #{swin_block_forward.1} parent=11 // pred_check_branch
          %422 = sbr.rel (%p420) target = $region36
        $region35: #{swin_block_forward.1} parent=11 // pred_region
          _
        $region36: #{swin_block_forward.1} parent=11 // pred_fallthru
          _
        // Predicated region
        $region37: #{swin_block_forward.1} parent=11 // pred_check
          %p423 = pneg %p196
        $region38: #{swin_block_forward.1} parent=11 // pred_check_branch
          %425 = sbr.rel (%p423) target = $region40
        $region39: #{swin_block_forward.1} parent=11 // pred_region
          %s427 = ssub.s32 16, 16
          %428 = vsyncadd [#allocation3], %s427
          %s430 = sshll.u32 %s7, 4
          %s431 = int_to_ptr.vmem [resolvable:$true] %s430
          %433 = dma.vmem_to_smem %s431, 16, [#allocation2], [#allocation3]
        $region40: #{swin_block_forward.1} parent=11 // pred_fallthru
          _
        // Predicated region
        $region41: #{swin_block_forward.1} parent=11 // pred_check
          %p434 = pneg %p217
        $region42: #{swin_block_forward.1} parent=11 // pred_check_branch
          %436 = sbr.rel (%p434) target = $region44
        $region43: #{swin_block_forward.1} parent=11 // pred_region
          _
        $region44: #{swin_block_forward.1} parent=11 // pred_fallthru
          _
        // Predicated region
        $region45: #{swin_block_forward.1} parent=11 // pred_check
          %p437 = pneg %p238
        $region46: #{swin_block_forward.1} parent=11 // pred_check_branch
          %439 = sbr.rel (%p437) target = $region48
        $region47: #{swin_block_forward.1} parent=11 // pred_region
          _
        $region48: #{swin_block_forward.1} parent=11 // pred_fallthru
          _
        // Predicated region
        $region49: #{swin_block_forward.1} parent=11 // pred_check
          %p440 = pneg %p259
        $region50: #{swin_block_forward.1} parent=11 // pred_check_branch
          %442 = sbr.rel (%p440) target = $region52
        $region51: #{swin_block_forward.1} parent=11 // pred_region
          _
        $region52: #{swin_block_forward.1} parent=11 // pred_fallthru
          _
        // Predicated region
        $region53: #{swin_block_forward.1} parent=11 // pred_check
          %p443 = pneg %p280
        $region54: #{swin_block_forward.1} parent=11 // pred_check_branch
          %445 = sbr.rel (%p443) target = $region56
        $region55: #{swin_block_forward.1} parent=11 // pred_region
          _
        $region56: #{swin_block_forward.1} parent=11 // pred_fallthru
          _
        // Predicated region
        $region57: #{swin_block_forward.1} parent=11 // pred_check
          %p446 = pneg %p301
        $region58: #{swin_block_forward.1} parent=11 // pred_check_branch
          %448 = sbr.rel (%p446) target = $region60
        $region59: #{swin_block_forward.1} parent=11 // pred_region
          _
        $region60: #{swin_block_forward.1} parent=11 // pred_fallthru
          _
        // Predicated region
        $region61: #{swin_block_forward.1} parent=11 // pred_check
          %p449 = pneg %p322
        $region62: #{swin_block_forward.1} parent=11 // pred_check_branch
          %451 = sbr.rel (%p449) target = $region64
        $region63: #{swin_block_forward.1} parent=11 // pred_region
          _
        $region64: #{swin_block_forward.1} parent=11 // pred_fallthru
          _
        // Predicated region
        $region65: #{swin_block_forward.1} parent=11 // pred_check
          %p452 = pneg %p343
        $region66: #{swin_block_forward.1} parent=11 // pred_check_branch
          %454 = sbr.rel (%p452) target = $region68
        $region67: #{swin_block_forward.1} parent=11 // pred_region
          _
        $region68: #{swin_block_forward.1} parent=11 // pred_fallthru
          _
        // Predicated region
        $region69: #{swin_block_forward.1} parent=11 // pred_check
          %p455 = pneg %p364
        $region70: #{swin_block_forward.1} parent=11 // pred_check_branch
          %457 = sbr.rel (%p455) target = $region72
        $region71: #{swin_block_forward.1} parent=11 // pred_region
          _
        $region72: #{swin_block_forward.1} parent=11 // pred_fallthru
          _
      $region12: #{swin_block_forward.1} parent=5 // pred_fallthru
        _
      %p458 = scmp.lt.s32.totalorder %s23, 2
      // Predicated region
      $region73: #{swin_block_forward.1} parent=5 // pred_check
        %p459 = pneg %p458
      $region74: #{swin_block_forward.1} parent=5 // pred_check_branch
        %461 = sbr.rel (%p459) target = $region76
      $region75: #{swin_block_forward.1} parent=5 // pred_region
        // Predicated region
        $region77: #{swin_block_forward.1} parent=75 // pred_check
          %p462 = pneg %p43
        $region78: #{swin_block_forward.1} parent=75 // pred_check_branch
          %464 = sbr.rel (%p462) target = $region80
        $region79: #{swin_block_forward.1} parent=75 // pred_region
          %s465 = smul.u32 8, %s23
          %p466 = scmp.lt.s32.totalorder %s465, 15
          %s467 = scalar_select %p466, %s465, 15
          %s468 = smul.addr %s467, 8
          %s469 = scalar_lea.vmem %s0, %s468
          %s470 = smul.u32 8, %s23
        $region80: #{swin_block_forward.1} parent=75 // pred_fallthru
          _
      $region76: #{swin_block_forward.1} parent=5 // pred_fallthru
        _
      %p471 = scmp.le.s32.totalorder 1, %s23
      %p472 = scmp.lt.s32.totalorder %s23, 3
      %p473 = pnand %p471, %p472
      %p474 = pneg %p473
      // Predicated region
      $region81: #{swin_block_forward.1} parent=5 // pred_check
        _
      $region82: #{swin_block_forward.1} parent=5 // pred_check_branch
        %476 = sbr.rel (%p473) target = $region84
      $region83: #{swin_block_forward.1} parent=5 // pred_region
        %s477 = ssub.s32 %s23, 1
        // Predicated region
        $region85: #{swin_block_forward.1} parent=83 // pred_check
          %p478 = pneg %p196
        $region86: #{swin_block_forward.1} parent=83 // pred_check_branch
          %480 = sbr.rel (%p478) target = $region88
        $region87: #{swin_block_forward.1} parent=83 // pred_region
          %481 = dma.done [#allocation3], 16
        $region88: #{swin_block_forward.1} parent=83 // pred_fallthru
          _
        %482 = sfence
        %s483 = smul.u32 8, %s28
        %p484 = scmp.lt.s32.totalorder %s483, 15
        %s485 = scalar_select %p484, %s483, 15
        %s486 = smul.addr %s485, 8
        %s487 = scalar_lea.vmem %s0, %s486
        %p488 = pneg %p49
        %p489 = pneg %p46
        %p490 = pneg %p70
        %p491 = pneg %p67
        %p492 = pneg %p91
        %p493 = pneg %p88
        %p494 = pneg %p112
        %p495 = pneg %p109
        %p496 = pneg %p133
        %p497 = pneg %p130
        %p498 = pneg %p154
        %p499 = pneg %p151
        %p500 = pneg %p175
        %p501 = pneg %p172
        %p502 = pneg %p196
        %p503 = pneg %p193
        %p504 = pneg %p217
        %p505 = pneg %p214
        %p506 = pneg %p238
        %p507 = pneg %p235
        %p508 = pneg %p259
        %p509 = pneg %p256
        %p510 = pneg %p280
        %p511 = pneg %p277
        %p512 = pneg %p301
        %p513 = pneg %p298
        %p514 = pneg %p322
        %p515 = pneg %p319
        %p516 = pneg %p343
        %p517 = pneg %p340
        %p518 = pneg %p364
        %p519 = pneg %p361
        %p520 = pneg %p390
        %p521 = pneg %p387
        %s522 = smul.u32 8, %s28
        %p523 = scmp.lt.s32.totalorder %s522, 15
        %s524 = scalar_select %p523, %s522, 15
        %s525 = smul.addr %s524, 8
        %s526 = scalar_lea.vmem %s16, %s525
        %s527 = smul.u32 8, %s28
        %p528 = scmp.lt.s32.totalorder %s527, 15
        %s529 = scalar_select %p528, %s527, 15
        %s530 = smul.addr %s529, 8
        %s531 = scalar_lea.vmem %s0, %s530
        %s532 = smul.u32 8, %s28
        %s533 = smul.u32 8, %s28
        %p534 = scmp.lt.s32.totalorder %s533, 15
        %s535 = scalar_select %p534, %s533, 15
        %s536 = smul.addr %s535, 8
        %s537 = scalar_lea.vmem %s16, %s536
        %s538 = smul.u32 8, %s28
        %v539 = vld [vmem:[%s531] sm:$0xff]
        %v540 = vld [vmem:[%s531 + $0x8] sm:$0xff]
        %v541 = vld [vmem:[%s531 + $0x10] sm:$0xff]
        %v542 = vld [vmem:[%s531 + $0x18] sm:$0xff]
        %v543 = vld [vmem:[%s531 + $0x20] sm:$0xff]
        %v544 = vld [vmem:[%s531 + $0x28] sm:$0xff]
        %v545 = vld [vmem:[%s531 + $0x30] sm:$0xff]
        %v546 = vld [vmem:[%s531 + $0x38] sm:$0xff]
        %vm547 = vcmask 261120
        %v548 = vsel %vm547, %v539, 0.0
        %549 = vadd.xlane.f32.xlu0 %v548
        %v550 = vpop.xlane.xlu0 %549
        %v551 = vsel %vm547, %v540, 0.0
        %552 = vadd.xlane.f32.xlu0 %v551
        %v553 = vpop.xlane.xlu0 %552
        %v554 = vsel %vm547, %v541, 0.0
        %555 = vadd.xlane.f32.xlu0 %v554
        %v556 = vpop.xlane.xlu0 %555
        %v557 = vsel %vm547, %v542, 0.0
        %558 = vadd.xlane.f32.xlu0 %v557
        %v559 = vpop.xlane.xlu0 %558
        %v560 = vsel %vm547, %v543, 0.0
        %561 = vadd.xlane.f32.xlu0 %v560
        %v562 = vpop.xlane.xlu0 %561
        %v563 = vsel %vm547, %v544, 0.0
        %564 = vadd.xlane.f32.xlu0 %v563
        %v565 = vpop.xlane.xlu0 %564
        %v566 = vsel %vm547, %v545, 0.0
        %567 = vadd.xlane.f32.xlu0 %v566
        %v568 = vpop.xlane.xlu0 %567
        %v569 = vsel %vm547, %v546, 0.0
        %570 = vadd.xlane.f32.xlu0 %v569
        %v571 = vpop.xlane.xlu0 %570
        %v572 = vrcp.pop 32.0
        %v573 = vmul.f32 %v550, %v572
        %v574 = vmul.f32 %v553, %v572
        %v575 = vmul.f32 %v556, %v572
        %v576 = vmul.f32 %v559, %v572
        %v577 = vmul.f32 %v562, %v572
        %v578 = vmul.f32 %v565, %v572
        %v579 = vmul.f32 %v568, %v572
        %v580 = vmul.f32 %v571, %v572
        %v581 = vsub.f32 %v539, %v573
        %v582 = vsub.f32 %v540, %v574
        %v583 = vsub.f32 %v541, %v575
        %v584 = vsub.f32 %v542, %v576
        %v585 = vsub.f32 %v543, %v577
        %v586 = vsub.f32 %v544, %v578
        %v587 = vsub.f32 %v545, %v579
        %v588 = vsub.f32 %v546, %v580
        %v589 = vmul.f32 %v581, %v581
        %v590 = vmul.f32 %v582, %v582
        %v591 = vmul.f32 %v583, %v583
        %v592 = vmul.f32 %v584, %v584
        %v593 = vmul.f32 %v585, %v585
        %v594 = vmul.f32 %v586, %v586
        %v595 = vmul.f32 %v587, %v587
        %v596 = vmul.f32 %v588, %v588
        %v597 = vsel %vm547, %v589, 0.0
        %598 = vadd.xlane.f32.xlu0 %v597
        %v599 = vpop.xlane.xlu0 %598
        %v600 = vsel %vm547, %v590, 0.0
        %601 = vadd.xlane.f32.xlu0 %v600
        %v602 = vpop.xlane.xlu0 %601
        %v603 = vsel %vm547, %v591, 0.0
        %604 = vadd.xlane.f32.xlu0 %v603
        %v605 = vpop.xlane.xlu0 %604
        %v606 = vsel %vm547, %v592, 0.0
        %607 = vadd.xlane.f32.xlu0 %v606
        %v608 = vpop.xlane.xlu0 %607
        %v609 = vsel %vm547, %v593, 0.0
        %610 = vadd.xlane.f32.xlu0 %v609
        %v611 = vpop.xlane.xlu0 %610
        %v612 = vsel %vm547, %v594, 0.0
        %613 = vadd.xlane.f32.xlu0 %v612
        %v614 = vpop.xlane.xlu0 %613
        %v615 = vsel %vm547, %v595, 0.0
        %616 = vadd.xlane.f32.xlu0 %v615
        %v617 = vpop.xlane.xlu0 %616
        %v618 = vsel %vm547, %v596, 0.0
        %619 = vadd.xlane.f32.xlu0 %v618
        %v620 = vpop.xlane.xlu0 %619
        %v621 = vmul.f32 %v599, %v572
        %v622 = vmul.f32 %v602, %v572
        %v623 = vmul.f32 %v605, %v572
        %v624 = vmul.f32 %v608, %v572
        %v625 = vmul.f32 %v611, %v572
        %v626 = vmul.f32 %v614, %v572
        %v627 = vmul.f32 %v617, %v572
        %v628 = vmul.f32 %v620, %v572
        %v629 = vadd.f32 %v621, 1e-05
        %v630 = vadd.f32 %v622, 1e-05
        %v631 = vadd.f32 %v623, 1e-05
        %v632 = vadd.f32 %v624, 1e-05
        %v633 = vadd.f32 %v625, 1e-05
        %v634 = vadd.f32 %v626, 1e-05
        %v635 = vadd.f32 %v627, 1e-05
        %v636 = vadd.f32 %v628, 1e-05
        %v637 = vrsqrt.pop %v629
        %v638 = vrsqrt.pop %v630
        %v639 = vrsqrt.pop %v631
        %v640 = vrsqrt.pop %v632
        %v641 = vrsqrt.pop %v633
        %v642 = vrsqrt.pop %v634
        %v643 = vrsqrt.pop %v635
        %v644 = vrsqrt.pop %v636
        %v645 = vmul.f32 %v581, %v637
        %v646 = vmul.f32 %v582, %v638
        %v647 = vmul.f32 %v583, %v639
        %v648 = vmul.f32 %v584, %v640
        %v649 = vmul.f32 %v585, %v641
        %v650 = vmul.f32 %v586, %v642
        %v651 = vmul.f32 %v587, %v643
        %v652 = vmul.f32 %v588, %v644
        %v653 = vld [vmem:[%s1] sm:$0x1]
        %v655 = vlaneseq
        %v656 = vshrl.u32 %v655, 7
        %v657 = vsub.s32 0, %v656
        %v658 = vrot.slane %v653, %v657
        %v660 = vmul.f32 %v645, %v658
        %v661 = vmul.f32 %v646, %v658
        %v662 = vmul.f32 %v647, %v658
        %v663 = vmul.f32 %v648, %v658
        %v664 = vmul.f32 %v649, %v658
        %v665 = vmul.f32 %v650, %v658
        %v666 = vmul.f32 %v651, %v658
        %v667 = vmul.f32 %v652, %v658
        %v668 = vld [vmem:[%s2] sm:$0x1]
        %v670 = vlaneseq
        %v671 = vshrl.u32 %v670, 7
        %v672 = vsub.s32 0, %v671
        %v673 = vrot.slane %v668, %v672
        %v675 = vadd.f32 %v660, %v673
        %v676 = vadd.f32 %v661, %v673
        %v677 = vadd.f32 %v662, %v673
        %v678 = vadd.f32 %v663, %v673
        %v679 = vadd.f32 %v664, %v673
        %v680 = vadd.f32 %v665, %v673
        %v681 = vadd.f32 %v666, %v673
        %v682 = vadd.f32 %v667, %v673
        %v683 = vld [vmem:[%s3] sm:$0xff]
        %v684 = vld [vmem:[%s3 + $0x8] sm:$0xff]
        %v685 = vld [vmem:[%s3 + $0x10] sm:$0xff]
        %v686 = vld [vmem:[%s3 + $0x18] sm:$0xff]
        %v687 = vld [vmem:[%s4] sm:$0x1]
        %v689 = vlaneseq
        %v690 = vshrl.u32 %v689, 7
        %v691 = vsub.s32 0, %v690
        %v692 = vrot.slane %v687, %v691
        %v695 = vsel %vm547, %v675, 0
        %v698 = vsel %vm547, %v676, 0
        %v701 = vsel %vm547, %v677, 0
        %v704 = vsel %vm547, %v678, 0
        %v707 = vsel %vm547, %v679, 0
        %v710 = vsel %vm547, %v680, 0
        %v713 = vsel %vm547, %v681, 0
        %v716 = vsel %vm547, %v682, 0
        %718 = vmatprep.subr.mxu0 0.0
        %719 = vmatpush1.msra.mxu0 %v683
        %720 = vmatprep.subr.mxu0 0.0
        %721 = vmatpush1.msra.mxu0 %v684
        %722 = vmatprep.subr.mxu0 0.0
        %723 = vmatpush1.msra.mxu0 %v685
        %724 = vmatprep.subr.mxu0 0.0
        %725 = vmatpush1.msra.mxu0 %v686
        %726 = vmatprep.subr.mxu0 0.0
        %727 = vmatpush1.msra.mxu0 0.0
        %728 = vmatprep.subr.mxu0 0.0
        %729 = vmatpush1.msra.mxu0 0.0
        %730 = vmatprep.subr.mxu0 0.0
        %731 = vmatpush1.msra.mxu0 0.0
        %732 = vmatprep.subr.mxu0 0.0
        %733 = vmatpush1.msra.mxu0 0.0
        %734 = vmatprep.subr.mxu0 0.0
        %735 = vmatpush1.msra.mxu0 0.0
        %736 = vmatprep.subr.mxu0 0.0
        %737 = vmatpush1.msra.mxu0 0.0
        %738 = vmatprep.subr.mxu0 0.0
        %739 = vmatpush1.msra.mxu0 0.0
        %740 = vmatprep.subr.mxu0 0.0
        %741 = vmatpush1.msra.mxu0 0.0
        %742 = vmatprep.subr.mxu0 0.0
        %743 = vmatpush1.msra.mxu0 0.0
        %744 = vmatprep.subr.mxu0 0.0
        %745 = vmatpush1.msra.mxu0 0.0
        %746 = vmatprep.subr.mxu0 0.0
        %747 = vmatpush1.msra.mxu0 0.0
        %748 = vmatprep.subr.mxu0 0.0
        %749 = vmatpush1.msra.mxu0 0.0
        %750 = vmatprep.subr.mxu0 0.0
        %751 = vmatpush1.msra.mxu0 0.0
        %752 = vmatprep.subr.mxu0 0.0
        %753 = vmatpush1.msra.mxu0 0.0
        %754 = vmatprep.subr.mxu0 0.0
        %755 = vmatpush1.msra.mxu0 0.0
        %756 = vmatprep.subr.mxu0 0.0
        %757 = vmatpush1.msra.mxu0 0.0
        %758 = vmatprep.subr.mxu0 0.0
        %759 = vmatpush1.msra.mxu0 0.0
        %760 = vmatprep.subr.mxu0 0.0
        %761 = vmatpush1.msra.mxu0 0.0
        %762 = vmatprep.subr.mxu0 0.0
        %763 = vmatpush1.msra.mxu0 0.0
        %764 = vmatprep.subr.mxu0 0.0
        %765 = vmatpush1.msra.mxu0 0.0
        %766 = vmatprep.subr.mxu0 0.0
        %767 = vmatpush1.msra.mxu0 0.0
        %768 = vmatprep.subr.mxu0 0.0
        %769 = vmatpush1.msra.mxu0 0.0
        %770 = vmatprep.subr.mxu0 0.0
        %771 = vmatpush1.msra.mxu0 0.0
        %772 = vmatprep.subr.mxu0 0.0
        %773 = vmatpush1.msra.mxu0 0.0
        %774 = vmatprep.subr.mxu0 0.0
        %775 = vmatpush1.msra.mxu0 0.0
        %776 = vmatprep.subr.mxu0 0.0
        %777 = vmatpush1.msra.mxu0 0.0
        %778 = vmatprep.subr.mxu0 0.0
        %779 = vmatpush1.msra.mxu0 0.0
        %780 = vmatprep.subr.mxu0 0.0
        %781 = vmatpush1.msra.mxu0 0.0
        %782 = vmatprep.mubr.f32.mxu0 0.0
        %783 = vmatmul.mubr.f32.gmra.mrb[0].mxu0 %v695
        %v784 = vpop.f32.mrb[0].mxu0
        %v785 = vadd.f32 %v692, %v784
        %v786 = vpop.f32.mrb[0].mxu0
        %787 = vmatprep.mubr.f32.mxu0 0.0
        %788 = vmatmul.mubr.f32.gmra.mrb[0].mxu0 %v698
        %v789 = vpop.f32.mrb[0].mxu0
        %v790 = vadd.f32 %v692, %v789
        %v791 = vpop.f32.mrb[0].mxu0
        %792 = vmatprep.mubr.f32.mxu0 0.0
        %793 = vmatmul.mubr.f32.gmra.mrb[0].mxu0 %v701
        %v794 = vpop.f32.mrb[0].mxu0
        %v795 = vadd.f32 %v692, %v794
        %v796 = vpop.f32.mrb[0].mxu0
        %797 = vmatprep.mubr.f32.mxu0 0.0
        %798 = vmatmul.mubr.f32.gmra.mrb[0].mxu0 %v704
        %v799 = vpop.f32.mrb[0].mxu0
        %v800 = vadd.f32 %v692, %v799
        %v801 = vpop.f32.mrb[0].mxu0
        %802 = vmatprep.mubr.f32.mxu0 0.0
        %803 = vmatmul.mubr.f32.gmra.mrb[0].mxu0 %v707
        %v804 = vpop.f32.mrb[0].mxu0
        %v805 = vadd.f32 %v692, %v804
        %v806 = vpop.f32.mrb[0].mxu0
        %807 = vmatprep.mubr.f32.mxu0 0.0
        %808 = vmatmul.mubr.f32.gmra.mrb[0].mxu0 %v710
        %v809 = vpop.f32.mrb[0].mxu0
        %v810 = vadd.f32 %v692, %v809
        %v811 = vpop.f32.mrb[0].mxu0
        %812 = vmatprep.mubr.f32.mxu0 0.0
        %813 = vmatmul.mubr.f32.gmra.mrb[0].mxu0 %v713
        %v814 = vpop.f32.mrb[0].mxu0
        %v815 = vadd.f32 %v692, %v814
        %v816 = vpop.f32.mrb[0].mxu0
        %817 = vmatprep.mubr.f32.mxu0 0.0
        %818 = vmatmul.mubr.f32.gmra.mrb[0].mxu0 %v716
        %v819 = vpop.f32.mrb[0].mxu0
        %v820 = vadd.f32 %v692, %v819
        %v821 = vpop.f32.mrb[0].mxu0
        %822 = vdwg.mxu0
        %v823 = vld [vmem:[%s5] sm:$0xff]
        %v824 = vld [vmem:[%s5 + $0x8] sm:$0xff]
        %v825 = vld [vmem:[%s5 + $0x10] sm:$0xff]
        %v826 = vld [vmem:[%s5 + $0x18] sm:$0xff]
        %v827 = vld [vmem:[%s5 + $0x20] sm:$0xff]
        %v828 = vld [vmem:[%s5 + $0x28] sm:$0xff]
        %v829 = vld [vmem:[%s5 + $0x30] sm:$0xff]
        %v830 = vld [vmem:[%s5 + $0x38] sm:$0xff]
        %839 = vrot.lane.b32.xlu0 %v785, 96
        %v840 = vpop.permute.xlu0 %839
        %841 = vrot.lane.b32.xlu0 %v790, 96
        %v842 = vpop.permute.xlu0 %841
        %843 = vrot.lane.b32.xlu0 %v795, 96
        %v844 = vpop.permute.xlu0 %843
        %845 = vrot.lane.b32.xlu0 %v800, 96
        %v846 = vpop.permute.xlu0 %845
        %847 = vrot.lane.b32.xlu0 %v805, 96
        %v848 = vpop.permute.xlu0 %847
        %849 = vrot.lane.b32.xlu0 %v810, 96
        %v850 = vpop.permute.xlu0 %849
        %851 = vrot.lane.b32.xlu0 %v815, 96
        %v852 = vpop.permute.xlu0 %851
        %853 = vrot.lane.b32.xlu0 %v820, 96
        %v854 = vpop.permute.xlu0 %853
        %vm855 = vcmask 64512
        %v856 = vsel %vm855, %v785, 0
        %v858 = vsel %vm855, %v790, 0
        %v860 = vsel %vm855, %v795, 0
        %v862 = vsel %vm855, %v800, 0
        %v864 = vsel %vm855, %v805, 0
        %v866 = vsel %vm855, %v810, 0
        %v868 = vsel %vm855, %v815, 0
        %v870 = vsel %vm855, %v820, 0
        %v872 = vsel %vm855, %v840, 0
        %v874 = vsel %vm855, %v842, 0
        %v876 = vsel %vm855, %v844, 0
        %v878 = vsel %vm855, %v846, 0
        %v880 = vsel %vm855, %v848, 0
        %v882 = vsel %vm855, %v850, 0
        %v884 = vsel %vm855, %v852, 0
        %v886 = vsel %vm855, %v854, 0
        %888 = vmatprep.subr.mxu0 0.0
        %889 = vmatpush1.xpose.msra.mxu0 %v872
        %890 = vmatprep.subr.mxu0 0.0
        %891 = vmatpush1.xpose.msra.mxu0 %v874
        %892 = vmatprep.subr.mxu0 0.0
        %893 = vmatpush1.xpose.msra.mxu0 %v876
        %894 = vmatprep.subr.mxu0 0.0
        %895 = vmatpush1.xpose.msra.mxu0 %v878
        %896 = vmatprep.subr.mxu0 0.0
        %897 = vmatpush1.xpose.msra.mxu0 %v880
        %898 = vmatprep.subr.mxu0 0.0
        %899 = vmatpush1.xpose.msra.mxu0 %v882
        %900 = vmatprep.subr.mxu0 0.0
        %901 = vmatpush1.xpose.msra.mxu0 %v884
        %902 = vmatprep.subr.mxu0 0.0
        %903 = vmatpush1.xpose.msra.mxu0 %v886
        %904 = vmatprep.subr.mxu0 0.0
        %905 = vmatpush1.xpose.msra.mxu0 0.0
        %906 = vmatprep.subr.mxu0 0.0
        %907 = vmatpush1.xpose.msra.mxu0 0.0
        %908 = vmatprep.subr.mxu0 0.0
        %909 = vmatpush1.xpose.msra.mxu0 0.0
        %910 = vmatprep.subr.mxu0 0.0
        %911 = vmatpush1.xpose.msra.mxu0 0.0
        %912 = vmatprep.subr.mxu0 0.0
        %913 = vmatpush1.xpose.msra.mxu0 0.0
        %914 = vmatprep.subr.mxu0 0.0
        %915 = vmatpush1.xpose.msra.mxu0 0.0
        %916 = vmatprep.subr.mxu0 0.0
        %917 = vmatpush1.xpose.msra.mxu0 0.0
        %918 = vmatprep.subr.mxu0 0.0
        %919 = vmatpush1.xpose.msra.mxu0 0.0
        %920 = vmatprep.subr.mxu0 0.0
        %921 = vmatpush1.xpose.msra.mxu0 0.0
        %922 = vmatprep.subr.mxu0 0.0
        %923 = vmatpush1.xpose.msra.mxu0 0.0
        %924 = vmatprep.subr.mxu0 0.0
        %925 = vmatpush1.xpose.msra.mxu0 0.0
        %926 = vmatprep.subr.mxu0 0.0
        %927 = vmatpush1.xpose.msra.mxu0 0.0
        %928 = vmatprep.subr.mxu0 0.0
        %929 = vmatpush1.xpose.msra.mxu0 0.0
        %930 = vmatprep.subr.mxu0 0.0
        %931 = vmatpush1.xpose.msra.mxu0 0.0
        %932 = vmatprep.subr.mxu0 0.0
        %933 = vmatpush1.xpose.msra.mxu0 0.0
        %934 = vmatprep.subr.mxu0 0.0
        %935 = vmatpush1.xpose.msra.mxu0 0.0
        %936 = vmatprep.subr.mxu0 0.0
        %937 = vmatpush1.xpose.msra.mxu0 0.0
        %938 = vmatprep.subr.mxu0 0.0
        %939 = vmatpush1.xpose.msra.mxu0 0.0
        %940 = vmatprep.subr.mxu0 0.0
        %941 = vmatpush1.xpose.msra.mxu0 0.0
        %942 = vmatprep.subr.mxu0 0.0
        %943 = vmatpush1.xpose.msra.mxu0 0.0
        %944 = vmatprep.subr.mxu0 0.0
        %945 = vmatpush1.xpose.msra.mxu0 0.0
        %946 = vmatprep.subr.mxu0 0.0
        %947 = vmatpush1.xpose.msra.mxu0 0.0
        %948 = vmatprep.subr.mxu0 0.0
        %949 = vmatpush1.xpose.msra.mxu0 0.0
        %950 = vmatprep.subr.mxu0 0.0
        %951 = vmatpush1.xpose.msra.mxu0 0.0
        %952 = vmatprep.mubr.f32.mxu0 0.0
        %953 = vmatmul.mubr.f32.gmra.mrb[0].mxu0 %v856
        %v954 = vpop.f32.mrb[0].mxu0
        %v955 = vadd.f32 %v823, %v954
        %v956 = vpop.f32.mrb[0].mxu0
        %957 = vmatprep.mubr.f32.mxu0 0.0
        %958 = vmatmul.mubr.f32.gmra.mrb[0].mxu0 %v858
        %v959 = vpop.f32.mrb[0].mxu0
        %v960 = vadd.f32 %v824, %v959
        %v961 = vpop.f32.mrb[0].mxu0
        %962 = vmatprep.mubr.f32.mxu0 0.0
        %963 = vmatmul.mubr.f32.gmra.mrb[0].mxu0 %v860
        %v964 = vpop.f32.mrb[0].mxu0
        %v965 = vadd.f32 %v825, %v964
        %v966 = vpop.f32.mrb[0].mxu0
        %967 = vmatprep.mubr.f32.mxu0 0.0
        %968 = vmatmul.mubr.f32.gmra.mrb[0].mxu0 %v862
        %v969 = vpop.f32.mrb[0].mxu0
        %v970 = vadd.f32 %v826, %v969
        %v971 = vpop.f32.mrb[0].mxu0
        %972 = vmatprep.mubr.f32.mxu0 0.0
        %973 = vmatmul.mubr.f32.gmra.mrb[0].mxu0 %v864
        %v974 = vpop.f32.mrb[0].mxu0
        %v975 = vadd.f32 %v827, %v974
        %v976 = vpop.f32.mrb[0].mxu0
        %977 = vmatprep.mubr.f32.mxu0 0.0
        %978 = vmatmul.mubr.f32.gmra.mrb[0].mxu0 %v866
        %v979 = vpop.f32.mrb[0].mxu0
        %v980 = vadd.f32 %v828, %v979
        %v981 = vpop.f32.mrb[0].mxu0
        %982 = vmatprep.mubr.f32.mxu0 0.0
        %983 = vmatmul.mubr.f32.gmra.mrb[0].mxu0 %v868
        %v984 = vpop.f32.mrb[0].mxu0
        %v985 = vadd.f32 %v829, %v984
        %v986 = vpop.f32.mrb[0].mxu0
        %987 = vmatprep.mubr.f32.mxu0 0.0
        %988 = vmatmul.mubr.f32.gmra.mrb[0].mxu0 %v870
        %v989 = vpop.f32.mrb[0].mxu0
        %v990 = vadd.f32 %v830, %v989
        %v991 = vpop.f32.mrb[0].mxu0
        %992 = vdwg.mxu0
        %vm993 = vcmask 523264
        %v994 = vsel %vm993, %v955, -inf
        %995 = vmax.xlane.f32.xlu0 %v994
        %v996 = vpop.xlane.xlu0 %995
        %v997 = vsel %vm993, %v960, -inf
        %998 = vmax.xlane.f32.xlu0 %v997
        %v999 = vpop.xlane.xlu0 %998
        %v1000 = vsel %vm993, %v965, -inf
        %1001 = vmax.xlane.f32.xlu0 %v1000
        %v1002 = vpop.xlane.xlu0 %1001
        %v1003 = vsel %vm993, %v970, -inf
        %1004 = vmax.xlane.f32.xlu0 %v1003
        %v1005 = vpop.xlane.xlu0 %1004
        %v1006 = vsel %vm993, %v975, -inf
        %1007 = vmax.xlane.f32.xlu0 %v1006
        %v1008 = vpop.xlane.xlu0 %1007
        %v1009 = vsel %vm993, %v980, -inf
        %1010 = vmax.xlane.f32.xlu0 %v1009
        %v1011 = vpop.xlane.xlu0 %1010
        %v1012 = vsel %vm993, %v985, -inf
        %1013 = vmax.xlane.f32.xlu0 %v1012
        %v1014 = vpop.xlane.xlu0 %1013
        %v1015 = vsel %vm993, %v990, -inf
        %1016 = vmax.xlane.f32.xlu0 %v1015
        %v1017 = vpop.xlane.xlu0 %1016
        %v1018 = vsub.f32 %v955, %v996
        %v1019 = vsub.f32 %v960, %v999
        %v1020 = vsub.f32 %v965, %v1002
        %v1021 = vsub.f32 %v970, %v1005
        %v1022 = vsub.f32 %v975, %v1008
        %v1023 = vsub.f32 %v980, %v1011
        %v1024 = vsub.f32 %v985, %v1014
        %v1025 = vsub.f32 %v990, %v1017
        %v1026 = vmul.f32 %v1018, 1.442695
        %v1027 = vpow.pop %v1026
        %v1028 = vmul.f32 %v1019, 1.442695
        %v1029 = vpow.pop %v1028
        %v1030 = vmul.f32 %v1020, 1.442695
        %v1031 = vpow.pop %v1030
        %v1032 = vmul.f32 %v1021, 1.442695
        %v1033 = vpow.pop %v1032
        %v1034 = vmul.f32 %v1022, 1.442695
        %v1035 = vpow.pop %v1034
        %v1036 = vmul.f32 %v1023, 1.442695
        %v1037 = vpow.pop %v1036
        %v1038 = vmul.f32 %v1024, 1.442695
        %v1039 = vpow.pop %v1038
        %v1040 = vmul.f32 %v1025, 1.442695
        %v1041 = vpow.pop %v1040
        %v1042 = vsel %vm993, %v1027, 0.0
        %1043 = vadd.xlane.f32.xlu0 %v1042
        %v1044 = vpop.xlane.xlu0 %1043
        %v1045 = vsel %vm993, %v1029, 0.0
        %1046 = vadd.xlane.f32.xlu0 %v1045
        %v1047 = vpop.xlane.xlu0 %1046
        %v1048 = vsel %vm993, %v1031, 0.0
        %1049 = vadd.xlane.f32.xlu0 %v1048
        %v1050 = vpop.xlane.xlu0 %1049
        %v1051 = vsel %vm993, %v1033, 0.0
        %1052 = vadd.xlane.f32.xlu0 %v1051
        %v1053 = vpop.xlane.xlu0 %1052
        %v1054 = vsel %vm993, %v1035, 0.0
        %1055 = vadd.xlane.f32.xlu0 %v1054
        %v1056 = vpop.xlane.xlu0 %1055
        %v1057 = vsel %vm993, %v1037, 0.0
        %1058 = vadd.xlane.f32.xlu0 %v1057
        %v1059 = vpop.xlane.xlu0 %1058
        %v1060 = vsel %vm993, %v1039, 0.0
        %1061 = vadd.xlane.f32.xlu0 %v1060
        %v1062 = vpop.xlane.xlu0 %1061
        %v1063 = vsel %vm993, %v1041, 0.0
        %1064 = vadd.xlane.f32.xlu0 %v1063
        %v1065 = vpop.xlane.xlu0 %1064
        %v1066 = vrcp.pop %v1044
        %v1067 = vrcp.pop %v1047
        %v1068 = vrcp.pop %v1050
        %v1069 = vrcp.pop %v1053
        %v1070 = vrcp.pop %v1056
        %v1071 = vrcp.pop %v1059
        %v1072 = vrcp.pop %v1062
        %v1073 = vrcp.pop %v1065
        %v1074 = vmul.f32 %v1027, %v1066
        %v1075 = vmul.f32 %v1029, %v1067
        %v1076 = vmul.f32 %v1031, %v1068
        %v1077 = vmul.f32 %v1033, %v1069
        %v1078 = vmul.f32 %v1035, %v1070
        %v1079 = vmul.f32 %v1037, %v1071
        %v1080 = vmul.f32 %v1039, %v1072
        %v1081 = vmul.f32 %v1041, %v1073
        %s1082 = sld [smem:[#allocation2]]
        %v1083 = vstv %s1082
        %v1084 = vmul.f32 %v1074, %v1083
        %v1085 = vmul.f32 %v1075, %v1083
        %v1086 = vmul.f32 %v1076, %v1083
        %v1087 = vmul.f32 %v1077, %v1083
        %v1088 = vmul.f32 %v1078, %v1083
        %v1089 = vmul.f32 %v1079, %v1083
        %v1090 = vmul.f32 %v1080, %v1083
        %v1091 = vmul.f32 %v1081, %v1083
        %v1092 = vld [vmem:[%s6] sm:$0xff]
        %v1093 = vld [vmem:[%s6 + $0x8] sm:$0xff]
        %v1094 = vld [vmem:[%s6 + $0x10] sm:$0xff]
        %v1095 = vld [vmem:[%s6 + $0x18] sm:$0xff]
        %v1096 = vld [vmem:[%s6 + $0x20] sm:$0xff]
        %v1097 = vld [vmem:[%s6 + $0x28] sm:$0xff]
        %v1098 = vld [vmem:[%s6 + $0x30] sm:$0xff]
        %v1099 = vld [vmem:[%s6 + $0x38] sm:$0xff]
        %v1100 = vsub.f32 %v1084, %v1092
        %v1101 = vsub.f32 %v1085, %v1093
        %v1102 = vsub.f32 %v1086, %v1094
        %v1103 = vsub.f32 %v1087, %v1095
        %v1104 = vsub.f32 %v1088, %v1096
        %v1105 = vsub.f32 %v1089, %v1097
        %v1106 = vsub.f32 %v1090, %v1098
        %v1107 = vsub.f32 %v1091, %v1099
        %1108 = vrot.lane.b32.xlu0 %v785, 64
        %v1109 = vpop.permute.xlu0 %1108
        %1110 = vrot.lane.b32.xlu0 %v790, 64
        %v1111 = vpop.permute.xlu0 %1110
        %1112 = vrot.lane.b32.xlu0 %v795, 64
        %v1113 = vpop.permute.xlu0 %1112
        %1114 = vrot.lane.b32.xlu0 %v800, 64
        %v1115 = vpop.permute.xlu0 %1114
        %1116 = vrot.lane.b32.xlu0 %v805, 64
        %v1117 = vpop.permute.xlu0 %1116
        %1118 = vrot.lane.b32.xlu0 %v810, 64
        %v1119 = vpop.permute.xlu0 %1118
        %1120 = vrot.lane.b32.xlu0 %v815, 64
        %v1121 = vpop.permute.xlu0 %1120
        %1122 = vrot.lane.b32.xlu0 %v820, 64
        %v1123 = vpop.permute.xlu0 %1122
        %v1133 = vsel %vm993, %v1100, 0
        %v1136 = vsel %vm993, %v1101, 0
        %v1139 = vsel %vm993, %v1102, 0
        %v1142 = vsel %vm993, %v1103, 0
        %v1145 = vsel %vm993, %v1104, 0
        %v1148 = vsel %vm993, %v1105, 0
        %v1151 = vsel %vm993, %v1106, 0
        %v1154 = vsel %vm993, %v1107, 0
        %1156 = vmatprep.subr.mxu0 0.0
        %1157 = vmatpush1.msra.mxu0 %v1109
        %1158 = vmatprep.subr.mxu0 0.0
        %1159 = vmatpush1.msra.mxu0 %v1111
        %1160 = vmatprep.subr.mxu0 0.0
        %1161 = vmatpush1.msra.mxu0 %v1113
        %1162 = vmatprep.subr.mxu0 0.0
        %1163 = vmatpush1.msra.mxu0 %v1115
        %1164 = vmatprep.subr.mxu0 0.0
        %1165 = vmatpush1.msra.mxu0 %v1117
        %1166 = vmatprep.subr.mxu0 0.0
        %1167 = vmatpush1.msra.mxu0 %v1119
        %1168 = vmatprep.subr.mxu0 0.0
        %1169 = vmatpush1.msra.mxu0 %v1121
        %1170 = vmatprep.subr.mxu0 0.0
        %1171 = vmatpush1.msra.mxu0 %v1123
        %1172 = vmatprep.subr.mxu0 0.0
        %1173 = vmatpush1.msra.mxu0 0.0
        %1174 = vmatprep.subr.mxu0 0.0
        %1175 = vmatpush1.msra.mxu0 0.0
        %1176 = vmatprep.subr.mxu0 0.0
        %1177 = vmatpush1.msra.mxu0 0.0
        %1178 = vmatprep.subr.mxu0 0.0
        %1179 = vmatpush1.msra.mxu0 0.0
        %1180 = vmatprep.subr.mxu0 0.0
        %1181 = vmatpush1.msra.mxu0 0.0
        %1182 = vmatprep.subr.mxu0 0.0
        %1183 = vmatpush1.msra.mxu0 0.0
        %1184 = vmatprep.subr.mxu0 0.0
        %1185 = vmatpush1.msra.mxu0 0.0
        %1186 = vmatprep.subr.mxu0 0.0
        %1187 = vmatpush1.msra.mxu0 0.0
        %1188 = vmatprep.subr.mxu0 0.0
        %1189 = vmatpush1.msra.mxu0 0.0
        %1190 = vmatprep.subr.mxu0 0.0
        %1191 = vmatpush1.msra.mxu0 0.0
        %1192 = vmatprep.subr.mxu0 0.0
        %1193 = vmatpush1.msra.mxu0 0.0
        %1194 = vmatprep.subr.mxu0 0.0
        %1195 = vmatpush1.msra.mxu0 0.0
        %1196 = vmatprep.subr.mxu0 0.0
        %1197 = vmatpush1.msra.mxu0 0.0
        %1198 = vmatprep.subr.mxu0 0.0
        %1199 = vmatpush1.msra.mxu0 0.0
        %1200 = vmatprep.subr.mxu0 0.0
        %1201 = vmatpush1.msra.mxu0 0.0
        %1202 = vmatprep.subr.mxu0 0.0
        %1203 = vmatpush1.msra.mxu0 0.0
        %1204 = vmatprep.subr.mxu0 0.0
        %1205 = vmatpush1.msra.mxu0 0.0
        %1206 = vmatprep.subr.mxu0 0.0
        %1207 = vmatpush1.msra.mxu0 0.0
        %1208 = vmatprep.subr.mxu0 0.0
        %1209 = vmatpush1.msra.mxu0 0.0
        %1210 = vmatprep.subr.mxu0 0.0
        %1211 = vmatpush1.msra.mxu0 0.0
        %1212 = vmatprep.subr.mxu0 0.0
        %1213 = vmatpush1.msra.mxu0 0.0
        %1214 = vmatprep.subr.mxu0 0.0
        %1215 = vmatpush1.msra.mxu0 0.0
        %1216 = vmatprep.subr.mxu0 0.0
        %1217 = vmatpush1.msra.mxu0 0.0
        %1218 = vmatprep.subr.mxu0 0.0
        %1219 = vmatpush1.msra.mxu0 0.0
        %1220 = vmatprep.mubr.f32.mxu0 0.0
        %1221 = vmatmul.mubr.f32.gmra.mrb[0].mxu0 %v1133
        %v1222 = vpop.f32.mrb[0].mxu0
        %v1223 = vadd.f32 0.0, %v1222
        %v1224 = vpop.f32.mrb[0].mxu0
        %1225 = vmatprep.mubr.f32.mxu0 0.0
        %1226 = vmatmul.mubr.f32.gmra.mrb[0].mxu0 %v1136
        %v1227 = vpop.f32.mrb[0].mxu0
        %v1228 = vadd.f32 0.0, %v1227
        %v1229 = vpop.f32.mrb[0].mxu0
        %1230 = vmatprep.mubr.f32.mxu0 0.0
        %1231 = vmatmul.mubr.f32.gmra.mrb[0].mxu0 %v1139
        %v1232 = vpop.f32.mrb[0].mxu0
        %v1233 = vadd.f32 0.0, %v1232
        %v1234 = vpop.f32.mrb[0].mxu0
        %1235 = vmatprep.mubr.f32.mxu0 0.0
        %1236 = vmatmul.mubr.f32.gmra.mrb[0].mxu0 %v1142
        %v1237 = vpop.f32.mrb[0].mxu0
        %v1238 = vadd.f32 0.0, %v1237
        %v1239 = vpop.f32.mrb[0].mxu0
        %1240 = vmatprep.mubr.f32.mxu0 0.0
        %1241 = vmatmul.mubr.f32.gmra.mrb[0].mxu0 %v1145
        %v1242 = vpop.f32.mrb[0].mxu0
        %v1243 = vadd.f32 0.0, %v1242
        %v1244 = vpop.f32.mrb[0].mxu0
        %1245 = vmatprep.mubr.f32.mxu0 0.0
        %1246 = vmatmul.mubr.f32.gmra.mrb[0].mxu0 %v1148
        %v1247 = vpop.f32.mrb[0].mxu0
        %v1248 = vadd.f32 0.0, %v1247
        %v1249 = vpop.f32.mrb[0].mxu0
        %1250 = vmatprep.mubr.f32.mxu0 0.0
        %1251 = vmatmul.mubr.f32.gmra.mrb[0].mxu0 %v1151
        %v1252 = vpop.f32.mrb[0].mxu0
        %v1253 = vadd.f32 0.0, %v1252
        %v1254 = vpop.f32.mrb[0].mxu0
        %1255 = vmatprep.mubr.f32.mxu0 0.0
        %1256 = vmatmul.mubr.f32.gmra.mrb[0].mxu0 %v1154
        %v1257 = vpop.f32.mrb[0].mxu0
        %v1258 = vadd.f32 0.0, %v1257
        %v1259 = vpop.f32.mrb[0].mxu0
        %1260 = vdwg.mxu0
        %v1261 = vld [vmem:[%s8] sm:$0xff]
        %s1262 = scalar_lea.vmem %s5, 64
        %v1263 = vld [vmem:[%s1262] sm:$0xff]
        %v1264 = vld [vmem:[%s1262 + $0x8] sm:$0xff]
        %v1265 = vld [vmem:[%s1262 + $0x10] sm:$0xff]
        %v1266 = vld [vmem:[%s1262 + $0x18] sm:$0xff]
        %v1267 = vld [vmem:[%s1262 + $0x20] sm:$0xff]
        %v1268 = vld [vmem:[%s1262 + $0x28] sm:$0xff]
        %v1269 = vld [vmem:[%s1262 + $0x30] sm:$0xff]
        %v1270 = vld [vmem:[%s1262 + $0x38] sm:$0xff]
        %1271 = vrot.lane.b32.xlu0 %v785, 120
        %v1272 = vpop.permute.xlu0 %1271
        %1273 = vrot.lane.b32.xlu0 %v790, 120
        %v1274 = vpop.permute.xlu0 %1273
        %1275 = vrot.lane.b32.xlu0 %v795, 120
        %v1276 = vpop.permute.xlu0 %1275
        %1277 = vrot.lane.b32.xlu0 %v800, 120
        %v1278 = vpop.permute.xlu0 %1277
        %1279 = vrot.lane.b32.xlu0 %v805, 120
        %v1280 = vpop.permute.xlu0 %1279
        %1281 = vrot.lane.b32.xlu0 %v810, 120
        %v1282 = vpop.permute.xlu0 %1281
        %1283 = vrot.lane.b32.xlu0 %v815, 120
        %v1284 = vpop.permute.xlu0 %1283
        %1285 = vrot.lane.b32.xlu0 %v820, 120
        %v1286 = vpop.permute.xlu0 %1285
        %1287 = vrot.lane.b32.xlu0 %v785, 88
        %v1288 = vpop.permute.xlu0 %1287
        %1289 = vrot.lane.b32.xlu0 %v790, 88
        %v1290 = vpop.permute.xlu0 %1289
        %1291 = vrot.lane.b32.xlu0 %v795, 88
        %v1292 = vpop.permute.xlu0 %1291
        %1293 = vrot.lane.b32.xlu0 %v800, 88
        %v1294 = vpop.permute.xlu0 %1293
        %1295 = vrot.lane.b32.xlu0 %v805, 88
        %v1296 = vpop.permute.xlu0 %1295
        %1297 = vrot.lane.b32.xlu0 %v810, 88
        %v1298 = vpop.permute.xlu0 %1297
        %1299 = vrot.lane.b32.xlu0 %v815, 88
        %v1300 = vpop.permute.xlu0 %1299
        %1301 = vrot.lane.b32.xlu0 %v820, 88
        %v1302 = vpop.permute.xlu0 %1301
        %v1303 = vsel %vm855, %v1272, 0
        %v1305 = vsel %vm855, %v1274, 0
        %v1307 = vsel %vm855, %v1276, 0
        %v1309 = vsel %vm855, %v1278, 0
        %v1311 = vsel %vm855, %v1280, 0
        %v1313 = vsel %vm855, %v1282, 0
        %v1315 = vsel %vm855, %v1284, 0
        %v1317 = vsel %vm855, %v1286, 0
        %v1319 = vsel %vm855, %v1288, 0
        %v1321 = vsel %vm855, %v1290, 0
        %v1323 = vsel %vm855, %v1292, 0
        %v1325 = vsel %vm855, %v1294, 0
        %v1327 = vsel %vm855, %v1296, 0
        %v1329 = vsel %vm855, %v1298, 0
        %v1331 = vsel %vm855, %v1300, 0
        %v1333 = vsel %vm855, %v1302, 0
        %1335 = vmatprep.subr.mxu0 0.0
        %1336 = vmatpush1.xpose.msra.mxu0 %v1319
        %1337 = vmatprep.subr.mxu0 0.0
        %1338 = vmatpush1.xpose.msra.mxu0 %v1321
        %1339 = vmatprep.subr.mxu0 0.0
        %1340 = vmatpush1.xpose.msra.mxu0 %v1323
        %1341 = vmatprep.subr.mxu0 0.0
        %1342 = vmatpush1.xpose.msra.mxu0 %v1325
        %1343 = vmatprep.subr.mxu0 0.0
        %1344 = vmatpush1.xpose.msra.mxu0 %v1327
        %1345 = vmatprep.subr.mxu0 0.0
        %1346 = vmatpush1.xpose.msra.mxu0 %v1329
        %1347 = vmatprep.subr.mxu0 0.0
        %1348 = vmatpush1.xpose.msra.mxu0 %v1331
        %1349 = vmatprep.subr.mxu0 0.0
        %1350 = vmatpush1.xpose.msra.mxu0 %v1333
        %1351 = vmatprep.subr.mxu0 0.0
        %1352 = vmatpush1.xpose.msra.mxu0 0.0
        %1353 = vmatprep.subr.mxu0 0.0
        %1354 = vmatpush1.xpose.msra.mxu0 0.0
        %1355 = vmatprep.subr.mxu0 0.0
        %1356 = vmatpush1.xpose.msra.mxu0 0.0
        %1357 = vmatprep.subr.mxu0 0.0
        %1358 = vmatpush1.xpose.msra.mxu0 0.0
        %1359 = vmatprep.subr.mxu0 0.0
        %1360 = vmatpush1.xpose.msra.mxu0 0.0
        %1361 = vmatprep.subr.mxu0 0.0
        %1362 = vmatpush1.xpose.msra.mxu0 0.0
        %1363 = vmatprep.subr.mxu0 0.0
        %1364 = vmatpush1.xpose.msra.mxu0 0.0
        %1365 = vmatprep.subr.mxu0 0.0
        %1366 = vmatpush1.xpose.msra.mxu0 0.0
        %1367 = vmatprep.subr.mxu0 0.0
        %1368 = vmatpush1.xpose.msra.mxu0 0.0
        %1369 = vmatprep.subr.mxu0 0.0
        %1370 = vmatpush1.xpose.msra.mxu0 0.0
        %1371 = vmatprep.subr.mxu0 0.0
        %1372 = vmatpush1.xpose.msra.mxu0 0.0
        %1373 = vmatprep.subr.mxu0 0.0
        %1374 = vmatpush1.xpose.msra.mxu0 0.0
        %1375 = vmatprep.subr.mxu0 0.0
        %1376 = vmatpush1.xpose.msra.mxu0 0.0
        %1377 = vmatprep.subr.mxu0 0.0
        %1378 = vmatpush1.xpose.msra.mxu0 0.0
        %1379 = vmatprep.subr.mxu0 0.0
        %1380 = vmatpush1.xpose.msra.mxu0 0.0
        %1381 = vmatprep.subr.mxu0 0.0
        %1382 = vmatpush1.xpose.msra.mxu0 0.0
        %1383 = vmatprep.subr.mxu0 0.0
        %1384 = vmatpush1.xpose.msra.mxu0 0.0
        %1385 = vmatprep.subr.mxu0 0.0
        %1386 = vmatpush1.xpose.msra.mxu0 0.0
        %1387 = vmatprep.subr.mxu0 0.0
        %1388 = vmatpush1.xpose.msra.mxu0 0.0
        %1389 = vmatprep.subr.mxu0 0.0
        %1390 = vmatpush1.xpose.msra.mxu0 0.0
        %1391 = vmatprep.subr.mxu0 0.0
        %1392 = vmatpush1.xpose.msra.mxu0 0.0
        %1393 = vmatprep.subr.mxu0 0.0
        %1394 = vmatpush1.xpose.msra.mxu0 0.0
        %1395 = vmatprep.subr.mxu0 0.0
        %1396 = vmatpush1.xpose.msra.mxu0 0.0
        %1397 = vmatprep.subr.mxu0 0.0
        %1398 = vmatpush1.xpose.msra.mxu0 0.0
        %1399 = vmatprep.mubr.f32.mxu0 0.0
        %1400 = vmatmul.mubr.f32.gmra.mrb[0].mxu0 %v1303
        %v1401 = vpop.f32.mrb[0].mxu0
        %v1402 = vadd.f32 %v1263, %v1401
        %v1403 = vpop.f32.mrb[0].mxu0
        %1404 = vmatprep.mubr.f32.mxu0 0.0
        %1405 = vmatmul.mubr.f32.gmra.mrb[0].mxu0 %v1305
        %v1406 = vpop.f32.mrb[0].mxu0
        %v1407 = vadd.f32 %v1264, %v1406
        %v1408 = vpop.f32.mrb[0].mxu0
        %1409 = vmatprep.mubr.f32.mxu0 0.0
        %1410 = vmatmul.mubr.f32.gmra.mrb[0].mxu0 %v1307
        %v1411 = vpop.f32.mrb[0].mxu0
        %v1412 = vadd.f32 %v1265, %v1411
        %v1413 = vpop.f32.mrb[0].mxu0
        %1414 = vmatprep.mubr.f32.mxu0 0.0
        %1415 = vmatmul.mubr.f32.gmra.mrb[0].mxu0 %v1309
        %v1416 = vpop.f32.mrb[0].mxu0
        %v1417 = vadd.f32 %v1266, %v1416
        %v1418 = vpop.f32.mrb[0].mxu0
        %1419 = vmatprep.mubr.f32.mxu0 0.0
        %1420 = vmatmul.mubr.f32.gmra.mrb[0].mxu0 %v1311
        %v1421 = vpop.f32.mrb[0].mxu0
        %v1422 = vadd.f32 %v1267, %v1421
        %v1423 = vpop.f32.mrb[0].mxu0
        %1424 = vmatprep.mubr.f32.mxu0 0.0
        %1425 = vmatmul.mubr.f32.gmra.mrb[0].mxu0 %v1313
        %v1426 = vpop.f32.mrb[0].mxu0
        %v1427 = vadd.f32 %v1268, %v1426
        %v1428 = vpop.f32.mrb[0].mxu0
        %1429 = vmatprep.mubr.f32.mxu0 0.0
        %1430 = vmatmul.mubr.f32.gmra.mrb[0].mxu0 %v1315
        %v1431 = vpop.f32.mrb[0].mxu0
        %v1432 = vadd.f32 %v1269, %v1431
        %v1433 = vpop.f32.mrb[0].mxu0
        %1434 = vmatprep.mubr.f32.mxu0 0.0
        %1435 = vmatmul.mubr.f32.gmra.mrb[0].mxu0 %v1317
        %v1436 = vpop.f32.mrb[0].mxu0
        %v1437 = vadd.f32 %v1270, %v1436
        %v1438 = vpop.f32.mrb[0].mxu0
        %1439 = vdwg.mxu0
        %v1440 = vsel %vm993, %v1402, -inf
        %1441 = vmax.xlane.f32.xlu0 %v1440
        %v1442 = vpop.xlane.xlu0 %1441
        %v1443 = vsel %vm993, %v1407, -inf
        %1444 = vmax.xlane.f32.xlu0 %v1443
        %v1445 = vpop.xlane.xlu0 %1444
        %v1446 = vsel %vm993, %v1412, -inf
        %1447 = vmax.xlane.f32.xlu0 %v1446
        %v1448 = vpop.xlane.xlu0 %1447
        %v1449 = vsel %vm993, %v1417, -inf
        %1450 = vmax.xlane.f32.xlu0 %v1449
        %v1451 = vpop.xlane.xlu0 %1450
        %v1452 = vsel %vm993, %v1422, -inf
        %1453 = vmax.xlane.f32.xlu0 %v1452
        %v1454 = vpop.xlane.xlu0 %1453
        %v1455 = vsel %vm993, %v1427, -inf
        %1456 = vmax.xlane.f32.xlu0 %v1455
        %v1457 = vpop.xlane.xlu0 %1456
        %v1458 = vsel %vm993, %v1432, -inf
        %1459 = vmax.xlane.f32.xlu0 %v1458
        %v1460 = vpop.xlane.xlu0 %1459
        %v1461 = vsel %vm993, %v1437, -inf
        %1462 = vmax.xlane.f32.xlu0 %v1461
        %v1463 = vpop.xlane.xlu0 %1462
        %v1464 = vsub.f32 %v1402, %v1442
        %v1465 = vsub.f32 %v1407, %v1445
        %v1466 = vsub.f32 %v1412, %v1448
        %v1467 = vsub.f32 %v1417, %v1451
        %v1468 = vsub.f32 %v1422, %v1454
        %v1469 = vsub.f32 %v1427, %v1457
        %v1470 = vsub.f32 %v1432, %v1460
        %v1471 = vsub.f32 %v1437, %v1463
        %v1472 = vmul.f32 %v1464, 1.442695
        %v1473 = vpow.pop %v1472
        %v1474 = vmul.f32 %v1465, 1.442695
        %v1475 = vpow.pop %v1474
        %v1476 = vmul.f32 %v1466, 1.442695
        %v1477 = vpow.pop %v1476
        %v1478 = vmul.f32 %v1467, 1.442695
        %v1479 = vpow.pop %v1478
        %v1480 = vmul.f32 %v1468, 1.442695
        %v1481 = vpow.pop %v1480
        %v1482 = vmul.f32 %v1469, 1.442695
        %v1483 = vpow.pop %v1482
        %v1484 = vmul.f32 %v1470, 1.442695
        %v1485 = vpow.pop %v1484
        %v1486 = vmul.f32 %v1471, 1.442695
        %v1487 = vpow.pop %v1486
        %v1488 = vsel %vm993, %v1473, 0.0
        %1489 = vadd.xlane.f32.xlu0 %v1488
        %v1490 = vpop.xlane.xlu0 %1489
        %v1491 = vsel %vm993, %v1475, 0.0
        %1492 = vadd.xlane.f32.xlu0 %v1491
        %v1493 = vpop.xlane.xlu0 %1492
        %v1494 = vsel %vm993, %v1477, 0.0
        %1495 = vadd.xlane.f32.xlu0 %v1494
        %v1496 = vpop.xlane.xlu0 %1495
        %v1497 = vsel %vm993, %v1479, 0.0
        %1498 = vadd.xlane.f32.xlu0 %v1497
        %v1499 = vpop.xlane.xlu0 %1498
        %v1500 = vsel %vm993, %v1481, 0.0
        %1501 = vadd.xlane.f32.xlu0 %v1500
        %v1502 = vpop.xlane.xlu0 %1501
        %v1503 = vsel %vm993, %v1483, 0.0
        %1504 = vadd.xlane.f32.xlu0 %v1503
        %v1505 = vpop.xlane.xlu0 %1504
        %v1506 = vsel %vm993, %v1485, 0.0
        %1507 = vadd.xlane.f32.xlu0 %v1506
        %v1508 = vpop.xlane.xlu0 %1507
        %v1509 = vsel %vm993, %v1487, 0.0
        %1510 = vadd.xlane.f32.xlu0 %v1509
        %v1511 = vpop.xlane.xlu0 %1510
        %v1512 = vrcp.pop %v1490
        %v1513 = vrcp.pop %v1493
        %v1514 = vrcp.pop %v1496
        %v1515 = vrcp.pop %v1499
        %v1516 = vrcp.pop %v1502
        %v1517 = vrcp.pop %v1505
        %v1518 = vrcp.pop %v1508
        %v1519 = vrcp.pop %v1511
        %v1520 = vmul.f32 %v1473, %v1512
        %v1521 = vmul.f32 %v1475, %v1513
        %v1522 = vmul.f32 %v1477, %v1514
        %v1523 = vmul.f32 %v1479, %v1515
        %v1524 = vmul.f32 %v1481, %v1516
        %v1525 = vmul.f32 %v1483, %v1517
        %v1526 = vmul.f32 %v1485, %v1518
        %v1527 = vmul.f32 %v1487, %v1519
        %s1528 = sld [smem:[#allocation2 + $0x1]]
        %v1529 = vstv %s1528
        %v1530 = vmul.f32 %v1520, %v1529
        %v1531 = vmul.f32 %v1521, %v1529
        %v1532 = vmul.f32 %v1522, %v1529
        %v1533 = vmul.f32 %v1523, %v1529
        %v1534 = vmul.f32 %v1524, %v1529
        %v1535 = vmul.f32 %v1525, %v1529
        %v1536 = vmul.f32 %v1526, %v1529
        %v1537 = vmul.f32 %v1527, %v1529
        %s1538 = scalar_lea.vmem %s6, 64
        %v1539 = vld [vmem:[%s1538] sm:$0xff]
        %v1540 = vld [vmem:[%s1538 + $0x8] sm:$0xff]
        %v1541 = vld [vmem:[%s1538 + $0x10] sm:$0xff]
        %v1542 = vld [vmem:[%s1538 + $0x18] sm:$0xff]
        %v1543 = vld [vmem:[%s1538 + $0x20] sm:$0xff]
        %v1544 = vld [vmem:[%s1538 + $0x28] sm:$0xff]
        %v1545 = vld [vmem:[%s1538 + $0x30] sm:$0xff]
        %v1546 = vld [vmem:[%s1538 + $0x38] sm:$0xff]
        %v1547 = vsub.f32 %v1530, %v1539
        %v1548 = vsub.f32 %v1531, %v1540
        %v1549 = vsub.f32 %v1532, %v1541
        %v1550 = vsub.f32 %v1533, %v1542
        %v1551 = vsub.f32 %v1534, %v1543
        %v1552 = vsub.f32 %v1535, %v1544
        %v1553 = vsub.f32 %v1536, %v1545
        %v1554 = vsub.f32 %v1537, %v1546
        %1555 = vrot.lane.b32.xlu0 %v785, 56
        %v1556 = vpop.permute.xlu0 %1555
        %1557 = vrot.lane.b32.xlu0 %v790, 56
        %v1558 = vpop.permute.xlu0 %1557
        %1559 = vrot.lane.b32.xlu0 %v795, 56
        %v1560 = vpop.permute.xlu0 %1559
        %1561 = vrot.lane.b32.xlu0 %v800, 56
        %v1562 = vpop.permute.xlu0 %1561
        %1563 = vrot.lane.b32.xlu0 %v805, 56
        %v1564 = vpop.permute.xlu0 %1563
        %1565 = vrot.lane.b32.xlu0 %v810, 56
        %v1566 = vpop.permute.xlu0 %1565
        %1567 = vrot.lane.b32.xlu0 %v815, 56
        %v1568 = vpop.permute.xlu0 %1567
        %1569 = vrot.lane.b32.xlu0 %v820, 56
        %v1570 = vpop.permute.xlu0 %1569
        %v1580 = vsel %vm993, %v1547, 0
        %v1583 = vsel %vm993, %v1548, 0
        %v1586 = vsel %vm993, %v1549, 0
        %v1589 = vsel %vm993, %v1550, 0
        %v1592 = vsel %vm993, %v1551, 0
        %v1595 = vsel %vm993, %v1552, 0
        %v1598 = vsel %vm993, %v1553, 0
        %v1601 = vsel %vm993, %v1554, 0
        %1603 = vmatprep.subr.mxu0 0.0
        %1604 = vmatpush1.msra.mxu0 %v1556
        %1605 = vmatprep.subr.mxu0 0.0
        %1606 = vmatpush1.msra.mxu0 %v1558
        %1607 = vmatprep.subr.mxu0 0.0
        %1608 = vmatpush1.msra.mxu0 %v1560
        %1609 = vmatprep.subr.mxu0 0.0
        %1610 = vmatpush1.msra.mxu0 %v1562
        %1611 = vmatprep.subr.mxu0 0.0
        %1612 = vmatpush1.msra.mxu0 %v1564
        %1613 = vmatprep.subr.mxu0 0.0
        %1614 = vmatpush1.msra.mxu0 %v1566
        %1615 = vmatprep.subr.mxu0 0.0
        %1616 = vmatpush1.msra.mxu0 %v1568
        %1617 = vmatprep.subr.mxu0 0.0
        %1618 = vmatpush1.msra.mxu0 %v1570
        %1619 = vmatprep.subr.mxu0 0.0
        %1620 = vmatpush1.msra.mxu0 0.0
        %1621 = vmatprep.subr.mxu0 0.0
        %1622 = vmatpush1.msra.mxu0 0.0
        %1623 = vmatprep.subr.mxu0 0.0
        %1624 = vmatpush1.msra.mxu0 0.0
        %1625 = vmatprep.subr.mxu0 0.0
        %1626 = vmatpush1.msra.mxu0 0.0
        %1627 = vmatprep.subr.mxu0 0.0
        %1628 = vmatpush1.msra.mxu0 0.0
        %1629 = vmatprep.subr.mxu0 0.0
        %1630 = vmatpush1.msra.mxu0 0.0
        %1631 = vmatprep.subr.mxu0 0.0
        %1632 = vmatpush1.msra.mxu0 0.0
        %1633 = vmatprep.subr.mxu0 0.0
        %1634 = vmatpush1.msra.mxu0 0.0
        %1635 = vmatprep.subr.mxu0 0.0
        %1636 = vmatpush1.msra.mxu0 0.0
        %1637 = vmatprep.subr.mxu0 0.0
        %1638 = vmatpush1.msra.mxu0 0.0
        %1639 = vmatprep.subr.mxu0 0.0
        %1640 = vmatpush1.msra.mxu0 0.0
        %1641 = vmatprep.subr.mxu0 0.0
        %1642 = vmatpush1.msra.mxu0 0.0
        %1643 = vmatprep.subr.mxu0 0.0
        %1644 = vmatpush1.msra.mxu0 0.0
        %1645 = vmatprep.subr.mxu0 0.0
        %1646 = vmatpush1.msra.mxu0 0.0
        %1647 = vmatprep.subr.mxu0 0.0
        %1648 = vmatpush1.msra.mxu0 0.0
        %1649 = vmatprep.subr.mxu0 0.0
        %1650 = vmatpush1.msra.mxu0 0.0
        %1651 = vmatprep.subr.mxu0 0.0
        %1652 = vmatpush1.msra.mxu0 0.0
        %1653 = vmatprep.subr.mxu0 0.0
        %1654 = vmatpush1.msra.mxu0 0.0
        %1655 = vmatprep.subr.mxu0 0.0
        %1656 = vmatpush1.msra.mxu0 0.0
        %1657 = vmatprep.subr.mxu0 0.0
        %1658 = vmatpush1.msra.mxu0 0.0
        %1659 = vmatprep.subr.mxu0 0.0
        %1660 = vmatpush1.msra.mxu0 0.0
        %1661 = vmatprep.subr.mxu0 0.0
        %1662 = vmatpush1.msra.mxu0 0.0
        %1663 = vmatprep.subr.mxu0 0.0
        %1664 = vmatpush1.msra.mxu0 0.0
        %1665 = vmatprep.subr.mxu0 0.0
        %1666 = vmatpush1.msra.mxu0 0.0
        %1667 = vmatprep.mubr.f32.mxu0 0.0
        %1668 = vmatmul.mubr.f32.gmra.mrb[0].mxu0 %v1580
        %v1669 = vpop.f32.mrb[0].mxu0
        %v1670 = vadd.f32 0.0, %v1669
        %v1671 = vpop.f32.mrb[0].mxu0
        %1672 = vmatprep.mubr.f32.mxu0 0.0
        %1673 = vmatmul.mubr.f32.gmra.mrb[0].mxu0 %v1583
        %v1674 = vpop.f32.mrb[0].mxu0
        %v1675 = vadd.f32 0.0, %v1674
        %v1676 = vpop.f32.mrb[0].mxu0
        %1677 = vmatprep.mubr.f32.mxu0 0.0
        %1678 = vmatmul.mubr.f32.gmra.mrb[0].mxu0 %v1586
        %v1679 = vpop.f32.mrb[0].mxu0
        %v1680 = vadd.f32 0.0, %v1679
        %v1681 = vpop.f32.mrb[0].mxu0
        %1682 = vmatprep.mubr.f32.mxu0 0.0
        %1683 = vmatmul.mubr.f32.gmra.mrb[0].mxu0 %v1589
        %v1684 = vpop.f32.mrb[0].mxu0
        %v1685 = vadd.f32 0.0, %v1684
        %v1686 = vpop.f32.mrb[0].mxu0
        %1687 = vmatprep.mubr.f32.mxu0 0.0
        %1688 = vmatmul.mubr.f32.gmra.mrb[0].mxu0 %v1592
        %v1689 = vpop.f32.mrb[0].mxu0
        %v1690 = vadd.f32 0.0, %v1689
        %v1691 = vpop.f32.mrb[0].mxu0
        %1692 = vmatprep.mubr.f32.mxu0 0.0
        %1693 = vmatmul.mubr.f32.gmra.mrb[0].mxu0 %v1595
        %v1694 = vpop.f32.mrb[0].mxu0
        %v1695 = vadd.f32 0.0, %v1694
        %v1696 = vpop.f32.mrb[0].mxu0
        %1697 = vmatprep.mubr.f32.mxu0 0.0
        %1698 = vmatmul.mubr.f32.gmra.mrb[0].mxu0 %v1598
        %v1699 = vpop.f32.mrb[0].mxu0
        %v1700 = vadd.f32 0.0, %v1699
        %v1701 = vpop.f32.mrb[0].mxu0
        %1702 = vmatprep.mubr.f32.mxu0 0.0
        %1703 = vmatmul.mubr.f32.gmra.mrb[0].mxu0 %v1601
        %v1704 = vpop.f32.mrb[0].mxu0
        %v1705 = vadd.f32 0.0, %v1704
        %v1706 = vpop.f32.mrb[0].mxu0
        %1707 = vdwg.mxu0
        %s1708 = scalar_lea.vmem %s8, 8
        %v1709 = vld [vmem:[%s1708] sm:$0xff]
        %v1711 = vsel %vm855, %v1670, 0
        %v1714 = vsel %vm855, %v1675, 0
        %v1717 = vsel %vm855, %v1680, 0
        %v1720 = vsel %vm855, %v1685, 0
        %v1723 = vsel %vm855, %v1690, 0
        %v1726 = vsel %vm855, %v1695, 0
        %v1729 = vsel %vm855, %v1700, 0
        %v1732 = vsel %vm855, %v1705, 0
        %1734 = vmatprep.subr.mxu0 0.0
        %1735 = vmatpush1.msra.mxu0 %v1709
        %1736 = vmatprep.subr.mxu0 0.0
        %1737 = vmatpush1.msra.mxu0 0.0
        %1738 = vmatprep.subr.mxu0 0.0
        %1739 = vmatpush1.msra.mxu0 0.0
        %1740 = vmatprep.subr.mxu0 0.0
        %1741 = vmatpush1.msra.mxu0 0.0
        %1742 = vmatprep.subr.mxu0 0.0
        %1743 = vmatpush1.msra.mxu0 0.0
        %1744 = vmatprep.subr.mxu0 0.0
        %1745 = vmatpush1.msra.mxu0 0.0
        %1746 = vmatprep.subr.mxu0 0.0
        %1747 = vmatpush1.msra.mxu0 0.0
        %1748 = vmatprep.subr.mxu0 0.0
        %1749 = vmatpush1.msra.mxu0 0.0
        %1750 = vmatprep.subr.mxu0 0.0
        %1751 = vmatpush1.msra.mxu0 0.0
        %1752 = vmatprep.subr.mxu0 0.0
        %1753 = vmatpush1.msra.mxu0 0.0
        %1754 = vmatprep.subr.mxu0 0.0
        %1755 = vmatpush1.msra.mxu0 0.0
        %1756 = vmatprep.subr.mxu0 0.0
        %1757 = vmatpush1.msra.mxu0 0.0
        %1758 = vmatprep.subr.mxu0 0.0
        %1759 = vmatpush1.msra.mxu0 0.0
        %1760 = vmatprep.subr.mxu0 0.0
        %1761 = vmatpush1.msra.mxu0 0.0
        %1762 = vmatprep.subr.mxu0 0.0
        %1763 = vmatpush1.msra.mxu0 0.0
        %1764 = vmatprep.subr.mxu0 0.0
        %1765 = vmatpush1.msra.mxu0 0.0
        %1766 = vmatprep.subr.mxu0 0.0
        %1767 = vmatpush1.msra.mxu0 0.0
        %1768 = vmatprep.subr.mxu0 0.0
        %1769 = vmatpush1.msra.mxu0 0.0
        %1770 = vmatprep.subr.mxu0 0.0
        %1771 = vmatpush1.msra.mxu0 0.0
        %1772 = vmatprep.subr.mxu0 0.0
        %1773 = vmatpush1.msra.mxu0 0.0
        %1774 = vmatprep.subr.mxu0 0.0
        %1775 = vmatpush1.msra.mxu0 0.0
        %1776 = vmatprep.subr.mxu0 0.0
        %1777 = vmatpush1.msra.mxu0 0.0
        %1778 = vmatprep.subr.mxu0 0.0
        %1779 = vmatpush1.msra.mxu0 0.0
        %1780 = vmatprep.subr.mxu0 0.0
        %1781 = vmatpush1.msra.mxu0 0.0
        %1782 = vmatprep.subr.mxu0 0.0
        %1783 = vmatpush1.msra.mxu0 0.0
        %1784 = vmatprep.subr.mxu0 0.0
        %1785 = vmatpush1.msra.mxu0 0.0
        %1786 = vmatprep.subr.mxu0 0.0
        %1787 = vmatpush1.msra.mxu0 0.0
        %1788 = vmatprep.subr.mxu0 0.0
        %1789 = vmatpush1.msra.mxu0 0.0
        %1790 = vmatprep.subr.mxu0 0.0
        %1791 = vmatpush1.msra.mxu0 0.0
        %1792 = vmatprep.subr.mxu0 0.0
        %1793 = vmatpush1.msra.mxu0 0.0
        %1794 = vmatprep.subr.mxu0 0.0
        %1795 = vmatpush1.msra.mxu0 0.0
        %1796 = vmatprep.subr.mxu0 0.0
        %1797 = vmatpush1.msra.mxu0 0.0
        %1798 = vmatprep.mubr.f32.mxu0 0.0
        %1799 = vmatmul.mubr.f32.gmra.mrb[0].mxu0 %v1711
        %v1800 = vpop.f32.mrb[0].mxu0
        %v1801 = vadd.f32 0.0, %v1800
        %v1802 = vpop.f32.mrb[0].mxu0
        %1803 = vmatprep.mubr.f32.mxu0 0.0
        %1804 = vmatmul.mubr.f32.gmra.mrb[0].mxu0 %v1714
        %v1805 = vpop.f32.mrb[0].mxu0
        %v1806 = vadd.f32 0.0, %v1805
        %v1807 = vpop.f32.mrb[0].mxu0
        %1808 = vmatprep.mubr.f32.mxu0 0.0
        %1809 = vmatmul.mubr.f32.gmra.mrb[0].mxu0 %v1717
        %v1810 = vpop.f32.mrb[0].mxu0
        %v1811 = vadd.f32 0.0, %v1810
        %v1812 = vpop.f32.mrb[0].mxu0
        %1813 = vmatprep.mubr.f32.mxu0 0.0
        %1814 = vmatmul.mubr.f32.gmra.mrb[0].mxu0 %v1720
        %v1815 = vpop.f32.mrb[0].mxu0
        %v1816 = vadd.f32 0.0, %v1815
        %v1817 = vpop.f32.mrb[0].mxu0
        %1818 = vmatprep.mubr.f32.mxu0 0.0
        %1819 = vmatmul.mubr.f32.gmra.mrb[0].mxu0 %v1723
        %v1820 = vpop.f32.mrb[0].mxu0
        %v1821 = vadd.f32 0.0, %v1820
        %v1822 = vpop.f32.mrb[0].mxu0
        %1823 = vmatprep.mubr.f32.mxu0 0.0
        %1824 = vmatmul.mubr.f32.gmra.mrb[0].mxu0 %v1726
        %v1825 = vpop.f32.mrb[0].mxu0
        %v1826 = vadd.f32 0.0, %v1825
        %v1827 = vpop.f32.mrb[0].mxu0
        %1828 = vmatprep.mubr.f32.mxu0 0.0
        %1829 = vmatmul.mubr.f32.gmra.mrb[0].mxu0 %v1729
        %v1830 = vpop.f32.mrb[0].mxu0
        %v1831 = vadd.f32 0.0, %v1830
        %v1832 = vpop.f32.mrb[0].mxu0
        %1833 = vmatprep.mubr.f32.mxu0 0.0
        %1834 = vmatmul.mubr.f32.gmra.mrb[0].mxu0 %v1732
        %v1835 = vpop.f32.mrb[0].mxu0
        %v1836 = vadd.f32 0.0, %v1835
        %v1837 = vpop.f32.mrb[0].mxu0
        %1838 = vdwg.mxu0
        %v1840 = vsel %vm855, %v1223, 0
        %v1843 = vsel %vm855, %v1228, 0
        %v1846 = vsel %vm855, %v1233, 0
        %v1849 = vsel %vm855, %v1238, 0
        %v1852 = vsel %vm855, %v1243, 0
        %v1855 = vsel %vm855, %v1248, 0
        %v1858 = vsel %vm855, %v1253, 0
        %v1861 = vsel %vm855, %v1258, 0
        %1863 = vmatprep.subr.mxu0 0.0
        %1864 = vmatpush1.msra.mxu0 %v1261
        %1865 = vmatprep.subr.mxu0 0.0
        %1866 = vmatpush1.msra.mxu0 0.0
        %1867 = vmatprep.subr.mxu0 0.0
        %1868 = vmatpush1.msra.mxu0 0.0
        %1869 = vmatprep.subr.mxu0 0.0
        %1870 = vmatpush1.msra.mxu0 0.0
        %1871 = vmatprep.subr.mxu0 0.0
        %1872 = vmatpush1.msra.mxu0 0.0
        %1873 = vmatprep.subr.mxu0 0.0
        %1874 = vmatpush1.msra.mxu0 0.0
        %1875 = vmatprep.subr.mxu0 0.0
        %1876 = vmatpush1.msra.mxu0 0.0
        %1877 = vmatprep.subr.mxu0 0.0
        %1878 = vmatpush1.msra.mxu0 0.0
        %1879 = vmatprep.subr.mxu0 0.0
        %1880 = vmatpush1.msra.mxu0 0.0
        %1881 = vmatprep.subr.mxu0 0.0
        %1882 = vmatpush1.msra.mxu0 0.0
        %1883 = vmatprep.subr.mxu0 0.0
        %1884 = vmatpush1.msra.mxu0 0.0
        %1885 = vmatprep.subr.mxu0 0.0
        %1886 = vmatpush1.msra.mxu0 0.0
        %1887 = vmatprep.subr.mxu0 0.0
        %1888 = vmatpush1.msra.mxu0 0.0
        %1889 = vmatprep.subr.mxu0 0.0
        %1890 = vmatpush1.msra.mxu0 0.0
        %1891 = vmatprep.subr.mxu0 0.0
        %1892 = vmatpush1.msra.mxu0 0.0
        %1893 = vmatprep.subr.mxu0 0.0
        %1894 = vmatpush1.msra.mxu0 0.0
        %1895 = vmatprep.subr.mxu0 0.0
        %1896 = vmatpush1.msra.mxu0 0.0
        %1897 = vmatprep.subr.mxu0 0.0
        %1898 = vmatpush1.msra.mxu0 0.0
        %1899 = vmatprep.subr.mxu0 0.0
        %1900 = vmatpush1.msra.mxu0 0.0
        %1901 = vmatprep.subr.mxu0 0.0
        %1902 = vmatpush1.msra.mxu0 0.0
        %1903 = vmatprep.subr.mxu0 0.0
        %1904 = vmatpush1.msra.mxu0 0.0
        %1905 = vmatprep.subr.mxu0 0.0
        %1906 = vmatpush1.msra.mxu0 0.0
        %1907 = vmatprep.subr.mxu0 0.0
        %1908 = vmatpush1.msra.mxu0 0.0
        %1909 = vmatprep.subr.mxu0 0.0
        %1910 = vmatpush1.msra.mxu0 0.0
        %1911 = vmatprep.subr.mxu0 0.0
        %1912 = vmatpush1.msra.mxu0 0.0
        %1913 = vmatprep.subr.mxu0 0.0
        %1914 = vmatpush1.msra.mxu0 0.0
        %1915 = vmatprep.subr.mxu0 0.0
        %1916 = vmatpush1.msra.mxu0 0.0
        %1917 = vmatprep.subr.mxu0 0.0
        %1918 = vmatpush1.msra.mxu0 0.0
        %1919 = vmatprep.subr.mxu0 0.0
        %1920 = vmatpush1.msra.mxu0 0.0
        %1921 = vmatprep.subr.mxu0 0.0
        %1922 = vmatpush1.msra.mxu0 0.0
        %1923 = vmatprep.subr.mxu0 0.0
        %1924 = vmatpush1.msra.mxu0 0.0
        %1925 = vmatprep.subr.mxu0 0.0
        %1926 = vmatpush1.msra.mxu0 0.0
        %1927 = vmatprep.mubr.f32.mxu0 0.0
        %1928 = vmatmul.mubr.f32.gmra.mrb[0].mxu0 %v1840
        %v1929 = vpop.f32.mrb[0].mxu0
        %v1930 = vadd.f32 %v1801, %v1929
        %v1931 = vpop.f32.mrb[0].mxu0
        %1932 = vmatprep.mubr.f32.mxu0 0.0
        %1933 = vmatmul.mubr.f32.gmra.mrb[0].mxu0 %v1843
        %v1934 = vpop.f32.mrb[0].mxu0
        %v1935 = vadd.f32 %v1806, %v1934
        %v1936 = vpop.f32.mrb[0].mxu0
        %1937 = vmatprep.mubr.f32.mxu0 0.0
        %1938 = vmatmul.mubr.f32.gmra.mrb[0].mxu0 %v1846
        %v1939 = vpop.f32.mrb[0].mxu0
        %v1940 = vadd.f32 %v1811, %v1939
        %v1941 = vpop.f32.mrb[0].mxu0
        %1942 = vmatprep.mubr.f32.mxu0 0.0
        %1943 = vmatmul.mubr.f32.gmra.mrb[0].mxu0 %v1849
        %v1944 = vpop.f32.mrb[0].mxu0
        %v1945 = vadd.f32 %v1816, %v1944
        %v1946 = vpop.f32.mrb[0].mxu0
        %1947 = vmatprep.mubr.f32.mxu0 0.0
        %1948 = vmatmul.mubr.f32.gmra.mrb[0].mxu0 %v1852
        %v1949 = vpop.f32.mrb[0].mxu0
        %v1950 = vadd.f32 %v1821, %v1949
        %v1951 = vpop.f32.mrb[0].mxu0
        %1952 = vmatprep.mubr.f32.mxu0 0.0
        %1953 = vmatmul.mubr.f32.gmra.mrb[0].mxu0 %v1855
        %v1954 = vpop.f32.mrb[0].mxu0
        %v1955 = vadd.f32 %v1826, %v1954
        %v1956 = vpop.f32.mrb[0].mxu0
        %1957 = vmatprep.mubr.f32.mxu0 0.0
        %1958 = vmatmul.mubr.f32.gmra.mrb[0].mxu0 %v1858
        %v1959 = vpop.f32.mrb[0].mxu0
        %v1960 = vadd.f32 %v1831, %v1959
        %v1961 = vpop.f32.mrb[0].mxu0
        %1962 = vmatprep.mubr.f32.mxu0 0.0
        %1963 = vmatmul.mubr.f32.gmra.mrb[0].mxu0 %v1861
        %v1964 = vpop.f32.mrb[0].mxu0
        %v1965 = vadd.f32 %v1836, %v1964
        %v1966 = vpop.f32.mrb[0].mxu0
        %1967 = vdwg.mxu0
        %s1968 = scalar_lea.vmem %s5, 128
        %v1969 = vld [vmem:[%s1968] sm:$0xff]
        %v1970 = vld [vmem:[%s1968 + $0x8] sm:$0xff]
        %v1971 = vld [vmem:[%s1968 + $0x10] sm:$0xff]
        %v1972 = vld [vmem:[%s1968 + $0x18] sm:$0xff]
        %v1973 = vld [vmem:[%s1968 + $0x20] sm:$0xff]
        %v1974 = vld [vmem:[%s1968 + $0x28] sm:$0xff]
        %v1975 = vld [vmem:[%s1968 + $0x30] sm:$0xff]
        %v1976 = vld [vmem:[%s1968 + $0x38] sm:$0xff]
        %1977 = vrot.lane.b32.xlu0 %v785, 112
        %v1978 = vpop.permute.xlu0 %1977
        %1979 = vrot.lane.b32.xlu0 %v790, 112
        %v1980 = vpop.permute.xlu0 %1979
        %1981 = vrot.lane.b32.xlu0 %v795, 112
        %v1982 = vpop.permute.xlu0 %1981
        %1983 = vrot.lane.b32.xlu0 %v800, 112
        %v1984 = vpop.permute.xlu0 %1983
        %1985 = vrot.lane.b32.xlu0 %v805, 112
        %v1986 = vpop.permute.xlu0 %1985
        %1987 = vrot.lane.b32.xlu0 %v810, 112
        %v1988 = vpop.permute.xlu0 %1987
        %1989 = vrot.lane.b32.xlu0 %v815, 112
        %v1990 = vpop.permute.xlu0 %1989
        %1991 = vrot.lane.b32.xlu0 %v820, 112
        %v1992 = vpop.permute.xlu0 %1991
        %1993 = vrot.lane.b32.xlu0 %v785, 80
        %v1994 = vpop.permute.xlu0 %1993
        %1995 = vrot.lane.b32.xlu0 %v790, 80
        %v1996 = vpop.permute.xlu0 %1995
        %1997 = vrot.lane.b32.xlu0 %v795, 80
        %v1998 = vpop.permute.xlu0 %1997
        %1999 = vrot.lane.b32.xlu0 %v800, 80
        %v2000 = vpop.permute.xlu0 %1999
        %2001 = vrot.lane.b32.xlu0 %v805, 80
        %v2002 = vpop.permute.xlu0 %2001
        %2003 = vrot.lane.b32.xlu0 %v810, 80
        %v2004 = vpop.permute.xlu0 %2003
        %2005 = vrot.lane.b32.xlu0 %v815, 80
        %v2006 = vpop.permute.xlu0 %2005
        %2007 = vrot.lane.b32.xlu0 %v820, 80
        %v2008 = vpop.permute.xlu0 %2007
        %v2009 = vsel %vm855, %v1978, 0
        %v2011 = vsel %vm855, %v1980, 0
        %v2013 = vsel %vm855, %v1982, 0
        %v2015 = vsel %vm855, %v1984, 0
        %v2017 = vsel %vm855, %v1986, 0
        %v2019 = vsel %vm855, %v1988, 0
        %v2021 = vsel %vm855, %v1990, 0
        %v2023 = vsel %vm855, %v1992, 0
        %v2025 = vsel %vm855, %v1994, 0
        %v2027 = vsel %vm855, %v1996, 0
        %v2029 = vsel %vm855, %v1998, 0
        %v2031 = vsel %vm855, %v2000, 0
        %v2033 = vsel %vm855, %v2002, 0
        %v2035 = vsel %vm855, %v2004, 0
        %v2037 = vsel %vm855, %v2006, 0
        %v2039 = vsel %vm855, %v2008, 0
        %2041 = vmatprep.subr.mxu0 0.0
        %2042 = vmatpush1.xpose.msra.mxu0 %v2025
        %2043 = vmatprep.subr.mxu0 0.0
        %2044 = vmatpush1.xpose.msra.mxu0 %v2027
        %2045 = vmatprep.subr.mxu0 0.0
        %2046 = vmatpush1.xpose.msra.mxu0 %v2029
        %2047 = vmatprep.subr.mxu0 0.0
        %2048 = vmatpush1.xpose.msra.mxu0 %v2031
        %2049 = vmatprep.subr.mxu0 0.0
        %2050 = vmatpush1.xpose.msra.mxu0 %v2033
        %2051 = vmatprep.subr.mxu0 0.0
        %2052 = vmatpush1.xpose.msra.mxu0 %v2035
        %2053 = vmatprep.subr.mxu0 0.0
        %2054 = vmatpush1.xpose.msra.mxu0 %v2037
        %2055 = vmatprep.subr.mxu0 0.0
        %2056 = vmatpush1.xpose.msra.mxu0 %v2039
        %2057 = vmatprep.subr.mxu0 0.0
        %2058 = vmatpush1.xpose.msra.mxu0 0.0
        %2059 = vmatprep.subr.mxu0 0.0
        %2060 = vmatpush1.xpose.msra.mxu0 0.0
        %2061 = vmatprep.subr.mxu0 0.0
        %2062 = vmatpush1.xpose.msra.mxu0 0.0
        %2063 = vmatprep.subr.mxu0 0.0
        %2064 = vmatpush1.xpose.msra.mxu0 0.0
        %2065 = vmatprep.subr.mxu0 0.0
        %2066 = vmatpush1.xpose.msra.mxu0 0.0
        %2067 = vmatprep.subr.mxu0 0.0
        %2068 = vmatpush1.xpose.msra.mxu0 0.0
        %2069 = vmatprep.subr.mxu0 0.0
        %2070 = vmatpush1.xpose.msra.mxu0 0.0
        %2071 = vmatprep.subr.mxu0 0.0
        %2072 = vmatpush1.xpose.msra.mxu0 0.0
        %2073 = vmatprep.subr.mxu0 0.0
        %2074 = vmatpush1.xpose.msra.mxu0 0.0
        %2075 = vmatprep.subr.mxu0 0.0
        %2076 = vmatpush1.xpose.msra.mxu0 0.0
        %2077 = vmatprep.subr.mxu0 0.0
        %2078 = vmatpush1.xpose.msra.mxu0 0.0
        %2079 = vmatprep.subr.mxu0 0.0
        %2080 = vmatpush1.xpose.msra.mxu0 0.0
        %2081 = vmatprep.subr.mxu0 0.0
        %2082 = vmatpush1.xpose.msra.mxu0 0.0
        %2083 = vmatprep.subr.mxu0 0.0
        %2084 = vmatpush1.xpose.msra.mxu0 0.0
        %2085 = vmatprep.subr.mxu0 0.0
        %2086 = vmatpush1.xpose.msra.mxu0 0.0
        %2087 = vmatprep.subr.mxu0 0.0
        %2088 = vmatpush1.xpose.msra.mxu0 0.0
        %2089 = vmatprep.subr.mxu0 0.0
        %2090 = vmatpush1.xpose.msra.mxu0 0.0
        %2091 = vmatprep.subr.mxu0 0.0
        %2092 = vmatpush1.xpose.msra.mxu0 0.0
        %2093 = vmatprep.subr.mxu0 0.0
        %2094 = vmatpush1.xpose.msra.mxu0 0.0
        %2095 = vmatprep.subr.mxu0 0.0
        %2096 = vmatpush1.xpose.msra.mxu0 0.0
        %2097 = vmatprep.subr.mxu0 0.0
        %2098 = vmatpush1.xpose.msra.mxu0 0.0
        %2099 = vmatprep.subr.mxu0 0.0
        %2100 = vmatpush1.xpose.msra.mxu0 0.0
        %2101 = vmatprep.subr.mxu0 0.0
        %2102 = vmatpush1.xpose.msra.mxu0 0.0
        %2103 = vmatprep.subr.mxu0 0.0
        %2104 = vmatpush1.xpose.msra.mxu0 0.0
        %2105 = vmatprep.mubr.f32.mxu0 0.0
        %2106 = vmatmul.mubr.f32.gmra.mrb[0].mxu0 %v2009
        %v2107 = vpop.f32.mrb[0].mxu0
        %v2108 = vadd.f32 %v1969, %v2107
        %v2109 = vpop.f32.mrb[0].mxu0
        %2110 = vmatprep.mubr.f32.mxu0 0.0
        %2111 = vmatmul.mubr.f32.gmra.mrb[0].mxu0 %v2011
        %v2112 = vpop.f32.mrb[0].mxu0
        %v2113 = vadd.f32 %v1970, %v2112
        %v2114 = vpop.f32.mrb[0].mxu0
        %2115 = vmatprep.mubr.f32.mxu0 0.0
        %2116 = vmatmul.mubr.f32.gmra.mrb[0].mxu0 %v2013
        %v2117 = vpop.f32.mrb[0].mxu0
        %v2118 = vadd.f32 %v1971, %v2117
        %v2119 = vpop.f32.mrb[0].mxu0
        %2120 = vmatprep.mubr.f32.mxu0 0.0
        %2121 = vmatmul.mubr.f32.gmra.mrb[0].mxu0 %v2015
        %v2122 = vpop.f32.mrb[0].mxu0
        %v2123 = vadd.f32 %v1972, %v2122
        %v2124 = vpop.f32.mrb[0].mxu0
        %2125 = vmatprep.mubr.f32.mxu0 0.0
        %2126 = vmatmul.mubr.f32.gmra.mrb[0].mxu0 %v2017
        %v2127 = vpop.f32.mrb[0].mxu0
        %v2128 = vadd.f32 %v1973, %v2127
        %v2129 = vpop.f32.mrb[0].mxu0
        %2130 = vmatprep.mubr.f32.mxu0 0.0
        %2131 = vmatmul.mubr.f32.gmra.mrb[0].mxu0 %v2019
        %v2132 = vpop.f32.mrb[0].mxu0
        %v2133 = vadd.f32 %v1974, %v2132
        %v2134 = vpop.f32.mrb[0].mxu0
        %2135 = vmatprep.mubr.f32.mxu0 0.0
        %2136 = vmatmul.mubr.f32.gmra.mrb[0].mxu0 %v2021
        %v2137 = vpop.f32.mrb[0].mxu0
        %v2138 = vadd.f32 %v1975, %v2137
        %v2139 = vpop.f32.mrb[0].mxu0
        %2140 = vmatprep.mubr.f32.mxu0 0.0
        %2141 = vmatmul.mubr.f32.gmra.mrb[0].mxu0 %v2023
        %v2142 = vpop.f32.mrb[0].mxu0
        %v2143 = vadd.f32 %v1976, %v2142
        %v2144 = vpop.f32.mrb[0].mxu0
        %2145 = vdwg.mxu0
        %v2146 = vsel %vm993, %v2108, -inf
        %2147 = vmax.xlane.f32.xlu0 %v2146
        %v2148 = vpop.xlane.xlu0 %2147
        %v2149 = vsel %vm993, %v2113, -inf
        %2150 = vmax.xlane.f32.xlu0 %v2149
        %v2151 = vpop.xlane.xlu0 %2150
        %v2152 = vsel %vm993, %v2118, -inf
        %2153 = vmax.xlane.f32.xlu0 %v2152
        %v2154 = vpop.xlane.xlu0 %2153
        %v2155 = vsel %vm993, %v2123, -inf
        %2156 = vmax.xlane.f32.xlu0 %v2155
        %v2157 = vpop.xlane.xlu0 %2156
        %v2158 = vsel %vm993, %v2128, -inf
        %2159 = vmax.xlane.f32.xlu0 %v2158
        %v2160 = vpop.xlane.xlu0 %2159
        %v2161 = vsel %vm993, %v2133, -inf
        %2162 = vmax.xlane.f32.xlu0 %v2161
        %v2163 = vpop.xlane.xlu0 %2162
        %v2164 = vsel %vm993, %v2138, -inf
        %2165 = vmax.xlane.f32.xlu0 %v2164
        %v2166 = vpop.xlane.xlu0 %2165
        %v2167 = vsel %vm993, %v2143, -inf
        %2168 = vmax.xlane.f32.xlu0 %v2167
        %v2169 = vpop.xlane.xlu0 %2168
        %v2170 = vsub.f32 %v2108, %v2148
        %v2171 = vsub.f32 %v2113, %v2151
        %v2172 = vsub.f32 %v2118, %v2154
        %v2173 = vsub.f32 %v2123, %v2157
        %v2174 = vsub.f32 %v2128, %v2160
        %v2175 = vsub.f32 %v2133, %v2163
        %v2176 = vsub.f32 %v2138, %v2166
        %v2177 = vsub.f32 %v2143, %v2169
        %v2178 = vmul.f32 %v2170, 1.442695
        %v2179 = vpow.pop %v2178
        %v2180 = vmul.f32 %v2171, 1.442695
        %v2181 = vpow.pop %v2180
        %v2182 = vmul.f32 %v2172, 1.442695
        %v2183 = vpow.pop %v2182
        %v2184 = vmul.f32 %v2173, 1.442695
        %v2185 = vpow.pop %v2184
        %v2186 = vmul.f32 %v2174, 1.442695
        %v2187 = vpow.pop %v2186
        %v2188 = vmul.f32 %v2175, 1.442695
        %v2189 = vpow.pop %v2188
        %v2190 = vmul.f32 %v2176, 1.442695
        %v2191 = vpow.pop %v2190
        %v2192 = vmul.f32 %v2177, 1.442695
        %v2193 = vpow.pop %v2192
        %v2194 = vsel %vm993, %v2179, 0.0
        %2195 = vadd.xlane.f32.xlu0 %v2194
        %v2196 = vpop.xlane.xlu0 %2195
        %v2197 = vsel %vm993, %v2181, 0.0
        %2198 = vadd.xlane.f32.xlu0 %v2197
        %v2199 = vpop.xlane.xlu0 %2198
        %v2200 = vsel %vm993, %v2183, 0.0
        %2201 = vadd.xlane.f32.xlu0 %v2200
        %v2202 = vpop.xlane.xlu0 %2201
        %v2203 = vsel %vm993, %v2185, 0.0
        %2204 = vadd.xlane.f32.xlu0 %v2203
        %v2205 = vpop.xlane.xlu0 %2204
        %v2206 = vsel %vm993, %v2187, 0.0
        %2207 = vadd.xlane.f32.xlu0 %v2206
        %v2208 = vpop.xlane.xlu0 %2207
        %v2209 = vsel %vm993, %v2189, 0.0
        %2210 = vadd.xlane.f32.xlu0 %v2209
        %v2211 = vpop.xlane.xlu0 %2210
        %v2212 = vsel %vm993, %v2191, 0.0
        %2213 = vadd.xlane.f32.xlu0 %v2212
        %v2214 = vpop.xlane.xlu0 %2213
        %v2215 = vsel %vm993, %v2193, 0.0
        %2216 = vadd.xlane.f32.xlu0 %v2215
        %v2217 = vpop.xlane.xlu0 %2216
        %v2218 = vrcp.pop %v2196
        %v2219 = vrcp.pop %v2199
        %v2220 = vrcp.pop %v2202
        %v2221 = vrcp.pop %v2205
        %v2222 = vrcp.pop %v2208
        %v2223 = vrcp.pop %v2211
        %v2224 = vrcp.pop %v2214
        %v2225 = vrcp.pop %v2217
        %v2226 = vmul.f32 %v2179, %v2218
        %v2227 = vmul.f32 %v2181, %v2219
        %v2228 = vmul.f32 %v2183, %v2220
        %v2229 = vmul.f32 %v2185, %v2221
        %v2230 = vmul.f32 %v2187, %v2222
        %v2231 = vmul.f32 %v2189, %v2223
        %v2232 = vmul.f32 %v2191, %v2224
        %v2233 = vmul.f32 %v2193, %v2225
        %s2234 = sld [smem:[#allocation2 + $0x2]]
        %v2235 = vstv %s2234
        %v2236 = vmul.f32 %v2226, %v2235
        %v2237 = vmul.f32 %v2227, %v2235
        %v2238 = vmul.f32 %v2228, %v2235
        %v2239 = vmul.f32 %v2229, %v2235
        %v2240 = vmul.f32 %v2230, %v2235
        %v2241 = vmul.f32 %v2231, %v2235
        %v2242 = vmul.f32 %v2232, %v2235
        %v2243 = vmul.f32 %v2233, %v2235
        %s2244 = scalar_lea.vmem %s6, 128
        %v2245 = vld [vmem:[%s2244] sm:$0xff]
        %v2246 = vld [vmem:[%s2244 + $0x8] sm:$0xff]
        %v2247 = vld [vmem:[%s2244 + $0x10] sm:$0xff]
        %v2248 = vld [vmem:[%s2244 + $0x18] sm:$0xff]
        %v2249 = vld [vmem:[%s2244 + $0x20] sm:$0xff]
        %v2250 = vld [vmem:[%s2244 + $0x28] sm:$0xff]
        %v2251 = vld [vmem:[%s2244 + $0x30] sm:$0xff]
        %v2252 = vld [vmem:[%s2244 + $0x38] sm:$0xff]
        %v2253 = vsub.f32 %v2236, %v2245
        %v2254 = vsub.f32 %v2237, %v2246
        %v2255 = vsub.f32 %v2238, %v2247
        %v2256 = vsub.f32 %v2239, %v2248
        %v2257 = vsub.f32 %v2240, %v2249
        %v2258 = vsub.f32 %v2241, %v2250
        %v2259 = vsub.f32 %v2242, %v2251
        %v2260 = vsub.f32 %v2243, %v2252
        %2261 = vrot.lane.b32.xlu0 %v785, 48
        %v2262 = vpop.permute.xlu0 %2261
        %2263 = vrot.lane.b32.xlu0 %v790, 48
        %v2264 = vpop.permute.xlu0 %2263
        %2265 = vrot.lane.b32.xlu0 %v795, 48
        %v2266 = vpop.permute.xlu0 %2265
        %2267 = vrot.lane.b32.xlu0 %v800, 48
        %v2268 = vpop.permute.xlu0 %2267
        %2269 = vrot.lane.b32.xlu0 %v805, 48
        %v2270 = vpop.permute.xlu0 %2269
        %2271 = vrot.lane.b32.xlu0 %v810, 48
        %v2272 = vpop.permute.xlu0 %2271
        %2273 = vrot.lane.b32.xlu0 %v815, 48
        %v2274 = vpop.permute.xlu0 %2273
        %2275 = vrot.lane.b32.xlu0 %v820, 48
        %v2276 = vpop.permute.xlu0 %2275
        %v2286 = vsel %vm993, %v2253, 0
        %v2289 = vsel %vm993, %v2254, 0
        %v2292 = vsel %vm993, %v2255, 0
        %v2295 = vsel %vm993, %v2256, 0
        %v2298 = vsel %vm993, %v2257, 0
        %v2301 = vsel %vm993, %v2258, 0
        %v2304 = vsel %vm993, %v2259, 0
        %v2307 = vsel %vm993, %v2260, 0
        %2309 = vmatprep.subr.mxu0 0.0
        %2310 = vmatpush1.msra.mxu0 %v2262
        %2311 = vmatprep.subr.mxu0 0.0
        %2312 = vmatpush1.msra.mxu0 %v2264
        %2313 = vmatprep.subr.mxu0 0.0
        %2314 = vmatpush1.msra.mxu0 %v2266
        %2315 = vmatprep.subr.mxu0 0.0
        %2316 = vmatpush1.msra.mxu0 %v2268
        %2317 = vmatprep.subr.mxu0 0.0
        %2318 = vmatpush1.msra.mxu0 %v2270
        %2319 = vmatprep.subr.mxu0 0.0
        %2320 = vmatpush1.msra.mxu0 %v2272
        %2321 = vmatprep.subr.mxu0 0.0
        %2322 = vmatpush1.msra.mxu0 %v2274
        %2323 = vmatprep.subr.mxu0 0.0
        %2324 = vmatpush1.msra.mxu0 %v2276
        %2325 = vmatprep.subr.mxu0 0.0
        %2326 = vmatpush1.msra.mxu0 0.0
        %2327 = vmatprep.subr.mxu0 0.0
        %2328 = vmatpush1.msra.mxu0 0.0
        %2329 = vmatprep.subr.mxu0 0.0
        %2330 = vmatpush1.msra.mxu0 0.0
        %2331 = vmatprep.subr.mxu0 0.0
        %2332 = vmatpush1.msra.mxu0 0.0
        %2333 = vmatprep.subr.mxu0 0.0
        %2334 = vmatpush1.msra.mxu0 0.0
        %2335 = vmatprep.subr.mxu0 0.0
        %2336 = vmatpush1.msra.mxu0 0.0
        %2337 = vmatprep.subr.mxu0 0.0
        %2338 = vmatpush1.msra.mxu0 0.0
        %2339 = vmatprep.subr.mxu0 0.0
        %2340 = vmatpush1.msra.mxu0 0.0
        %2341 = vmatprep.subr.mxu0 0.0
        %2342 = vmatpush1.msra.mxu0 0.0
        %2343 = vmatprep.subr.mxu0 0.0
        %2344 = vmatpush1.msra.mxu0 0.0
        %2345 = vmatprep.subr.mxu0 0.0
        %2346 = vmatpush1.msra.mxu0 0.0
        %2347 = vmatprep.subr.mxu0 0.0
        %2348 = vmatpush1.msra.mxu0 0.0
        %2349 = vmatprep.subr.mxu0 0.0
        %2350 = vmatpush1.msra.mxu0 0.0
        %2351 = vmatprep.subr.mxu0 0.0
        %2352 = vmatpush1.msra.mxu0 0.0
        %2353 = vmatprep.subr.mxu0 0.0
        %2354 = vmatpush1.msra.mxu0 0.0
        %2355 = vmatprep.subr.mxu0 0.0
        %2356 = vmatpush1.msra.mxu0 0.0
        %2357 = vmatprep.subr.mxu0 0.0
        %2358 = vmatpush1.msra.mxu0 0.0
        %2359 = vmatprep.subr.mxu0 0.0
        %2360 = vmatpush1.msra.mxu0 0.0
        %2361 = vmatprep.subr.mxu0 0.0
        %2362 = vmatpush1.msra.mxu0 0.0
        %2363 = vmatprep.subr.mxu0 0.0
        %2364 = vmatpush1.msra.mxu0 0.0
        %2365 = vmatprep.subr.mxu0 0.0
        %2366 = vmatpush1.msra.mxu0 0.0
        %2367 = vmatprep.subr.mxu0 0.0
        %2368 = vmatpush1.msra.mxu0 0.0
        %2369 = vmatprep.subr.mxu0 0.0
        %2370 = vmatpush1.msra.mxu0 0.0
        %2371 = vmatprep.subr.mxu0 0.0
        %2372 = vmatpush1.msra.mxu0 0.0
        %2373 = vmatprep.mubr.f32.mxu0 0.0
        %2374 = vmatmul.mubr.f32.gmra.mrb[0].mxu0 %v2286
        %v2375 = vpop.f32.mrb[0].mxu0
        %v2376 = vadd.f32 0.0, %v2375
        %v2377 = vpop.f32.mrb[0].mxu0
        %2378 = vmatprep.mubr.f32.mxu0 0.0
        %2379 = vmatmul.mubr.f32.gmra.mrb[0].mxu0 %v2289
        %v2380 = vpop.f32.mrb[0].mxu0
        %v2381 = vadd.f32 0.0, %v2380
        %v2382 = vpop.f32.mrb[0].mxu0
        %2383 = vmatprep.mubr.f32.mxu0 0.0
        %2384 = vmatmul.mubr.f32.gmra.mrb[0].mxu0 %v2292
        %v2385 = vpop.f32.mrb[0].mxu0
        %v2386 = vadd.f32 0.0, %v2385
        %v2387 = vpop.f32.mrb[0].mxu0
        %2388 = vmatprep.mubr.f32.mxu0 0.0
        %2389 = vmatmul.mubr.f32.gmra.mrb[0].mxu0 %v2295
        %v2390 = vpop.f32.mrb[0].mxu0
        %v2391 = vadd.f32 0.0, %v2390
        %v2392 = vpop.f32.mrb[0].mxu0
        %2393 = vmatprep.mubr.f32.mxu0 0.0
        %2394 = vmatmul.mubr.f32.gmra.mrb[0].mxu0 %v2298
        %v2395 = vpop.f32.mrb[0].mxu0
        %v2396 = vadd.f32 0.0, %v2395
        %v2397 = vpop.f32.mrb[0].mxu0
        %2398 = vmatprep.mubr.f32.mxu0 0.0
        %2399 = vmatmul.mubr.f32.gmra.mrb[0].mxu0 %v2301
        %v2400 = vpop.f32.mrb[0].mxu0
        %v2401 = vadd.f32 0.0, %v2400
        %v2402 = vpop.f32.mrb[0].mxu0
        %2403 = vmatprep.mubr.f32.mxu0 0.0
        %2404 = vmatmul.mubr.f32.gmra.mrb[0].mxu0 %v2304
        %v2405 = vpop.f32.mrb[0].mxu0
        %v2406 = vadd.f32 0.0, %v2405
        %v2407 = vpop.f32.mrb[0].mxu0
        %2408 = vmatprep.mubr.f32.mxu0 0.0
        %2409 = vmatmul.mubr.f32.gmra.mrb[0].mxu0 %v2307
        %v2410 = vpop.f32.mrb[0].mxu0
        %v2411 = vadd.f32 0.0, %v2410
        %v2412 = vpop.f32.mrb[0].mxu0
        %2413 = vdwg.mxu0
        %s2414 = scalar_lea.vmem %s8, 16
        %v2415 = vld [vmem:[%s2414] sm:$0xff]
        %v2417 = vsel %vm855, %v2376, 0
        %v2420 = vsel %vm855, %v2381, 0
        %v2423 = vsel %vm855, %v2386, 0
        %v2426 = vsel %vm855, %v2391, 0
        %v2429 = vsel %vm855, %v2396, 0
        %v2432 = vsel %vm855, %v2401, 0
        %v2435 = vsel %vm855, %v2406, 0
        %v2438 = vsel %vm855, %v2411, 0
        %2440 = vmatprep.subr.mxu0 0.0
        %2441 = vmatpush1.msra.mxu0 %v2415
        %2442 = vmatprep.subr.mxu0 0.0
        %2443 = vmatpush1.msra.mxu0 0.0
        %2444 = vmatprep.subr.mxu0 0.0
        %2445 = vmatpush1.msra.mxu0 0.0
        %2446 = vmatprep.subr.mxu0 0.0
        %2447 = vmatpush1.msra.mxu0 0.0
        %2448 = vmatprep.subr.mxu0 0.0
        %2449 = vmatpush1.msra.mxu0 0.0
        %2450 = vmatprep.subr.mxu0 0.0
        %2451 = vmatpush1.msra.mxu0 0.0
        %2452 = vmatprep.subr.mxu0 0.0
        %2453 = vmatpush1.msra.mxu0 0.0
        %2454 = vmatprep.subr.mxu0 0.0
        %2455 = vmatpush1.msra.mxu0 0.0
        %2456 = vmatprep.subr.mxu0 0.0
        %2457 = vmatpush1.msra.mxu0 0.0
        %2458 = vmatprep.subr.mxu0 0.0
        %2459 = vmatpush1.msra.mxu0 0.0
        %2460 = vmatprep.subr.mxu0 0.0
        %2461 = vmatpush1.msra.mxu0 0.0
        %2462 = vmatprep.subr.mxu0 0.0
        %2463 = vmatpush1.msra.mxu0 0.0
        %2464 = vmatprep.subr.mxu0 0.0
        %2465 = vmatpush1.msra.mxu0 0.0
        %2466 = vmatprep.subr.mxu0 0.0
        %2467 = vmatpush1.msra.mxu0 0.0
        %2468 = vmatprep.subr.mxu0 0.0
        %2469 = vmatpush1.msra.mxu0 0.0
        %2470 = vmatprep.subr.mxu0 0.0
        %2471 = vmatpush1.msra.mxu0 0.0
        %2472 = vmatprep.subr.mxu0 0.0
        %2473 = vmatpush1.msra.mxu0 0.0
        %2474 = vmatprep.subr.mxu0 0.0
        %2475 = vmatpush1.msra.mxu0 0.0
        %2476 = vmatprep.subr.mxu0 0.0
        %2477 = vmatpush1.msra.mxu0 0.0
        %2478 = vmatprep.subr.mxu0 0.0
        %2479 = vmatpush1.msra.mxu0 0.0
        %2480 = vmatprep.subr.mxu0 0.0
        %2481 = vmatpush1.msra.mxu0 0.0
        %2482 = vmatprep.subr.mxu0 0.0
        %2483 = vmatpush1.msra.mxu0 0.0
        %2484 = vmatprep.subr.mxu0 0.0
        %2485 = vmatpush1.msra.mxu0 0.0
        %2486 = vmatprep.subr.mxu0 0.0
        %2487 = vmatpush1.msra.mxu0 0.0
        %2488 = vmatprep.subr.mxu0 0.0
        %2489 = vmatpush1.msra.mxu0 0.0
        %2490 = vmatprep.subr.mxu0 0.0
        %2491 = vmatpush1.msra.mxu0 0.0
        %2492 = vmatprep.subr.mxu0 0.0
        %2493 = vmatpush1.msra.mxu0 0.0
        %2494 = vmatprep.subr.mxu0 0.0
        %2495 = vmatpush1.msra.mxu0 0.0
        %2496 = vmatprep.subr.mxu0 0.0
        %2497 = vmatpush1.msra.mxu0 0.0
        %2498 = vmatprep.subr.mxu0 0.0
        %2499 = vmatpush1.msra.mxu0 0.0
        %2500 = vmatprep.subr.mxu0 0.0
        %2501 = vmatpush1.msra.mxu0 0.0
        %2502 = vmatprep.subr.mxu0 0.0
        %2503 = vmatpush1.msra.mxu0 0.0
        %2504 = vmatprep.mubr.f32.mxu0 0.0
        %2505 = vmatmul.mubr.f32.gmra.mrb[0].mxu0 %v2417
        %v2506 = vpop.f32.mrb[0].mxu0
        %v2507 = vadd.f32 0.0, %v2506
        %v2508 = vpop.f32.mrb[0].mxu0
        %2509 = vmatprep.mubr.f32.mxu0 0.0
        %2510 = vmatmul.mubr.f32.gmra.mrb[0].mxu0 %v2420
        %v2511 = vpop.f32.mrb[0].mxu0
        %v2512 = vadd.f32 0.0, %v2511
        %v2513 = vpop.f32.mrb[0].mxu0
        %2514 = vmatprep.mubr.f32.mxu0 0.0
        %2515 = vmatmul.mubr.f32.gmra.mrb[0].mxu0 %v2423
        %v2516 = vpop.f32.mrb[0].mxu0
        %v2517 = vadd.f32 0.0, %v2516
        %v2518 = vpop.f32.mrb[0].mxu0
        %2519 = vmatprep.mubr.f32.mxu0 0.0
        %2520 = vmatmul.mubr.f32.gmra.mrb[0].mxu0 %v2426
        %v2521 = vpop.f32.mrb[0].mxu0
        %v2522 = vadd.f32 0.0, %v2521
        %v2523 = vpop.f32.mrb[0].mxu0
        %2524 = vmatprep.mubr.f32.mxu0 0.0
        %2525 = vmatmul.mubr.f32.gmra.mrb[0].mxu0 %v2429
        %v2526 = vpop.f32.mrb[0].mxu0
        %v2527 = vadd.f32 0.0, %v2526
        %v2528 = vpop.f32.mrb[0].mxu0
        %2529 = vmatprep.mubr.f32.mxu0 0.0
        %2530 = vmatmul.mubr.f32.gmra.mrb[0].mxu0 %v2432
        %v2531 = vpop.f32.mrb[0].mxu0
        %v2532 = vadd.f32 0.0, %v2531
        %v2533 = vpop.f32.mrb[0].mxu0
        %2534 = vmatprep.mubr.f32.mxu0 0.0
        %2535 = vmatmul.mubr.f32.gmra.mrb[0].mxu0 %v2435
        %v2536 = vpop.f32.mrb[0].mxu0
        %v2537 = vadd.f32 0.0, %v2536
        %v2538 = vpop.f32.mrb[0].mxu0
        %2539 = vmatprep.mubr.f32.mxu0 0.0
        %2540 = vmatmul.mubr.f32.gmra.mrb[0].mxu0 %v2438
        %v2541 = vpop.f32.mrb[0].mxu0
        %v2542 = vadd.f32 0.0, %v2541
        %v2543 = vpop.f32.mrb[0].mxu0
        %2544 = vdwg.mxu0
        %v2545 = vadd.f32 %v1930, %v2507
        %v2546 = vadd.f32 %v1935, %v2512
        %v2547 = vadd.f32 %v1940, %v2517
        %v2548 = vadd.f32 %v1945, %v2522
        %v2549 = vadd.f32 %v1950, %v2527
        %v2550 = vadd.f32 %v1955, %v2532
        %v2551 = vadd.f32 %v1960, %v2537
        %v2552 = vadd.f32 %v1965, %v2542
        %s2553 = scalar_lea.vmem %s5, 192
        %v2554 = vld [vmem:[%s2553] sm:$0xff]
        %v2555 = vld [vmem:[%s2553 + $0x8] sm:$0xff]
        %v2556 = vld [vmem:[%s2553 + $0x10] sm:$0xff]
        %v2557 = vld [vmem:[%s2553 + $0x18] sm:$0xff]
        %v2558 = vld [vmem:[%s2553 + $0x20] sm:$0xff]
        %v2559 = vld [vmem:[%s2553 + $0x28] sm:$0xff]
        %v2560 = vld [vmem:[%s2553 + $0x30] sm:$0xff]
        %v2561 = vld [vmem:[%s2553 + $0x38] sm:$0xff]
        %2562 = vrot.lane.b32.xlu0 %v785, 104
        %v2563 = vpop.permute.xlu0 %2562
        %2564 = vrot.lane.b32.xlu0 %v790, 104
        %v2565 = vpop.permute.xlu0 %2564
        %2566 = vrot.lane.b32.xlu0 %v795, 104
        %v2567 = vpop.permute.xlu0 %2566
        %2568 = vrot.lane.b32.xlu0 %v800, 104
        %v2569 = vpop.permute.xlu0 %2568
        %2570 = vrot.lane.b32.xlu0 %v805, 104
        %v2571 = vpop.permute.xlu0 %2570
        %2572 = vrot.lane.b32.xlu0 %v810, 104
        %v2573 = vpop.permute.xlu0 %2572
        %2574 = vrot.lane.b32.xlu0 %v815, 104
        %v2575 = vpop.permute.xlu0 %2574
        %2576 = vrot.lane.b32.xlu0 %v820, 104
        %v2577 = vpop.permute.xlu0 %2576
        %2578 = vrot.lane.b32.xlu0 %v785, 72
        %v2579 = vpop.permute.xlu0 %2578
        %2580 = vrot.lane.b32.xlu0 %v790, 72
        %v2581 = vpop.permute.xlu0 %2580
        %2582 = vrot.lane.b32.xlu0 %v795, 72
        %v2583 = vpop.permute.xlu0 %2582
        %2584 = vrot.lane.b32.xlu0 %v800, 72
        %v2585 = vpop.permute.xlu0 %2584
        %2586 = vrot.lane.b32.xlu0 %v805, 72
        %v2587 = vpop.permute.xlu0 %2586
        %2588 = vrot.lane.b32.xlu0 %v810, 72
        %v2589 = vpop.permute.xlu0 %2588
        %2590 = vrot.lane.b32.xlu0 %v815, 72
        %v2591 = vpop.permute.xlu0 %2590
        %2592 = vrot.lane.b32.xlu0 %v820, 72
        %v2593 = vpop.permute.xlu0 %2592
        %v2594 = vsel %vm855, %v2563, 0
        %v2596 = vsel %vm855, %v2565, 0
        %v2598 = vsel %vm855, %v2567, 0
        %v2600 = vsel %vm855, %v2569, 0
        %v2602 = vsel %vm855, %v2571, 0
        %v2604 = vsel %vm855, %v2573, 0
        %v2606 = vsel %vm855, %v2575, 0
        %v2608 = vsel %vm855, %v2577, 0
        %v2610 = vsel %vm855, %v2579, 0
        %v2612 = vsel %vm855, %v2581, 0
        %v2614 = vsel %vm855, %v2583, 0
        %v2616 = vsel %vm855, %v2585, 0
        %v2618 = vsel %vm855, %v2587, 0
        %v2620 = vsel %vm855, %v2589, 0
        %v2622 = vsel %vm855, %v2591, 0
        %v2624 = vsel %vm855, %v2593, 0
        %2626 = vmatprep.subr.mxu0 0.0
        %2627 = vmatpush1.xpose.msra.mxu0 %v2610
        %2628 = vmatprep.subr.mxu0 0.0
        %2629 = vmatpush1.xpose.msra.mxu0 %v2612
        %2630 = vmatprep.subr.mxu0 0.0
        %2631 = vmatpush1.xpose.msra.mxu0 %v2614
        %2632 = vmatprep.subr.mxu0 0.0
        %2633 = vmatpush1.xpose.msra.mxu0 %v2616
        %2634 = vmatprep.subr.mxu0 0.0
        %2635 = vmatpush1.xpose.msra.mxu0 %v2618
        %2636 = vmatprep.subr.mxu0 0.0
        %2637 = vmatpush1.xpose.msra.mxu0 %v2620
        %2638 = vmatprep.subr.mxu0 0.0
        %2639 = vmatpush1.xpose.msra.mxu0 %v2622
        %2640 = vmatprep.subr.mxu0 0.0
        %2641 = vmatpush1.xpose.msra.mxu0 %v2624
        %2642 = vmatprep.subr.mxu0 0.0
        %2643 = vmatpush1.xpose.msra.mxu0 0.0
        %2644 = vmatprep.subr.mxu0 0.0
        %2645 = vmatpush1.xpose.msra.mxu0 0.0
        %2646 = vmatprep.subr.mxu0 0.0
        %2647 = vmatpush1.xpose.msra.mxu0 0.0
        %2648 = vmatprep.subr.mxu0 0.0
        %2649 = vmatpush1.xpose.msra.mxu0 0.0
        %2650 = vmatprep.subr.mxu0 0.0
        %2651 = vmatpush1.xpose.msra.mxu0 0.0
        %2652 = vmatprep.subr.mxu0 0.0
        %2653 = vmatpush1.xpose.msra.mxu0 0.0
        %2654 = vmatprep.subr.mxu0 0.0
        %2655 = vmatpush1.xpose.msra.mxu0 0.0
        %2656 = vmatprep.subr.mxu0 0.0
        %2657 = vmatpush1.xpose.msra.mxu0 0.0
        %2658 = vmatprep.subr.mxu0 0.0
        %2659 = vmatpush1.xpose.msra.mxu0 0.0
        %2660 = vmatprep.subr.mxu0 0.0
        %2661 = vmatpush1.xpose.msra.mxu0 0.0
        %2662 = vmatprep.subr.mxu0 0.0
        %2663 = vmatpush1.xpose.msra.mxu0 0.0
        %2664 = vmatprep.subr.mxu0 0.0
        %2665 = vmatpush1.xpose.msra.mxu0 0.0
        %2666 = vmatprep.subr.mxu0 0.0
        %2667 = vmatpush1.xpose.msra.mxu0 0.0
        %2668 = vmatprep.subr.mxu0 0.0
        %2669 = vmatpush1.xpose.msra.mxu0 0.0
        %2670 = vmatprep.subr.mxu0 0.0
        %2671 = vmatpush1.xpose.msra.mxu0 0.0
        %2672 = vmatprep.subr.mxu0 0.0
        %2673 = vmatpush1.xpose.msra.mxu0 0.0
        %2674 = vmatprep.subr.mxu0 0.0
        %2675 = vmatpush1.xpose.msra.mxu0 0.0
        %2676 = vmatprep.subr.mxu0 0.0
        %2677 = vmatpush1.xpose.msra.mxu0 0.0
        %2678 = vmatprep.subr.mxu0 0.0
        %2679 = vmatpush1.xpose.msra.mxu0 0.0
        %2680 = vmatprep.subr.mxu0 0.0
        %2681 = vmatpush1.xpose.msra.mxu0 0.0
        %2682 = vmatprep.subr.mxu0 0.0
        %2683 = vmatpush1.xpose.msra.mxu0 0.0
        %2684 = vmatprep.subr.mxu0 0.0
        %2685 = vmatpush1.xpose.msra.mxu0 0.0
        %2686 = vmatprep.subr.mxu0 0.0
        %2687 = vmatpush1.xpose.msra.mxu0 0.0
        %2688 = vmatprep.subr.mxu0 0.0
        %2689 = vmatpush1.xpose.msra.mxu0 0.0
        %2690 = vmatprep.mubr.f32.mxu0 0.0
        %2691 = vmatmul.mubr.f32.gmra.mrb[0].mxu0 %v2594
        %v2692 = vpop.f32.mrb[0].mxu0
        %v2693 = vadd.f32 %v2554, %v2692
        %v2694 = vpop.f32.mrb[0].mxu0
        %2695 = vmatprep.mubr.f32.mxu0 0.0
        %2696 = vmatmul.mubr.f32.gmra.mrb[0].mxu0 %v2596
        %v2697 = vpop.f32.mrb[0].mxu0
        %v2698 = vadd.f32 %v2555, %v2697
        %v2699 = vpop.f32.mrb[0].mxu0
        %2700 = vmatprep.mubr.f32.mxu0 0.0
        %2701 = vmatmul.mubr.f32.gmra.mrb[0].mxu0 %v2598
        %v2702 = vpop.f32.mrb[0].mxu0
        %v2703 = vadd.f32 %v2556, %v2702
        %v2704 = vpop.f32.mrb[0].mxu0
        %2705 = vmatprep.mubr.f32.mxu0 0.0
        %2706 = vmatmul.mubr.f32.gmra.mrb[0].mxu0 %v2600
        %v2707 = vpop.f32.mrb[0].mxu0
        %v2708 = vadd.f32 %v2557, %v2707
        %v2709 = vpop.f32.mrb[0].mxu0
        %2710 = vmatprep.mubr.f32.mxu0 0.0
        %2711 = vmatmul.mubr.f32.gmra.mrb[0].mxu0 %v2602
        %v2712 = vpop.f32.mrb[0].mxu0
        %v2713 = vadd.f32 %v2558, %v2712
        %v2714 = vpop.f32.mrb[0].mxu0
        %2715 = vmatprep.mubr.f32.mxu0 0.0
        %2716 = vmatmul.mubr.f32.gmra.mrb[0].mxu0 %v2604
        %v2717 = vpop.f32.mrb[0].mxu0
        %v2718 = vadd.f32 %v2559, %v2717
        %v2719 = vpop.f32.mrb[0].mxu0
        %2720 = vmatprep.mubr.f32.mxu0 0.0
        %2721 = vmatmul.mubr.f32.gmra.mrb[0].mxu0 %v2606
        %v2722 = vpop.f32.mrb[0].mxu0
        %v2723 = vadd.f32 %v2560, %v2722
        %v2724 = vpop.f32.mrb[0].mxu0
        %2725 = vmatprep.mubr.f32.mxu0 0.0
        %2726 = vmatmul.mubr.f32.gmra.mrb[0].mxu0 %v2608
        %v2727 = vpop.f32.mrb[0].mxu0
        %v2728 = vadd.f32 %v2561, %v2727
        %v2729 = vpop.f32.mrb[0].mxu0
        %2730 = vdwg.mxu0
        %v2731 = vsel %vm993, %v2693, -inf
        %2732 = vmax.xlane.f32.xlu0 %v2731
        %v2733 = vpop.xlane.xlu0 %2732
        %v2734 = vsel %vm993, %v2698, -inf
        %2735 = vmax.xlane.f32.xlu0 %v2734
        %v2736 = vpop.xlane.xlu0 %2735
        %v2737 = vsel %vm993, %v2703, -inf
        %2738 = vmax.xlane.f32.xlu0 %v2737
        %v2739 = vpop.xlane.xlu0 %2738
        %v2740 = vsel %vm993, %v2708, -inf
        %2741 = vmax.xlane.f32.xlu0 %v2740
        %v2742 = vpop.xlane.xlu0 %2741
        %v2743 = vsel %vm993, %v2713, -inf
        %2744 = vmax.xlane.f32.xlu0 %v2743
        %v2745 = vpop.xlane.xlu0 %2744
        %v2746 = vsel %vm993, %v2718, -inf
        %2747 = vmax.xlane.f32.xlu0 %v2746
        %v2748 = vpop.xlane.xlu0 %2747
        %v2749 = vsel %vm993, %v2723, -inf
        %2750 = vmax.xlane.f32.xlu0 %v2749
        %v2751 = vpop.xlane.xlu0 %2750
        %v2752 = vsel %vm993, %v2728, -inf
        %2753 = vmax.xlane.f32.xlu0 %v2752
        %v2754 = vpop.xlane.xlu0 %2753
        %v2755 = vsub.f32 %v2693, %v2733
        %v2756 = vsub.f32 %v2698, %v2736
        %v2757 = vsub.f32 %v2703, %v2739
        %v2758 = vsub.f32 %v2708, %v2742
        %v2759 = vsub.f32 %v2713, %v2745
        %v2760 = vsub.f32 %v2718, %v2748
        %v2761 = vsub.f32 %v2723, %v2751
        %v2762 = vsub.f32 %v2728, %v2754
        %v2763 = vmul.f32 %v2755, 1.442695
        %v2764 = vpow.pop %v2763
        %v2765 = vmul.f32 %v2756, 1.442695
        %v2766 = vpow.pop %v2765
        %v2767 = vmul.f32 %v2757, 1.442695
        %v2768 = vpow.pop %v2767
        %v2769 = vmul.f32 %v2758, 1.442695
        %v2770 = vpow.pop %v2769
        %v2771 = vmul.f32 %v2759, 1.442695
        %v2772 = vpow.pop %v2771
        %v2773 = vmul.f32 %v2760, 1.442695
        %v2774 = vpow.pop %v2773
        %v2775 = vmul.f32 %v2761, 1.442695
        %v2776 = vpow.pop %v2775
        %v2777 = vmul.f32 %v2762, 1.442695
        %v2778 = vpow.pop %v2777
        %v2779 = vsel %vm993, %v2764, 0.0
        %2780 = vadd.xlane.f32.xlu0 %v2779
        %v2781 = vpop.xlane.xlu0 %2780
        %v2782 = vsel %vm993, %v2766, 0.0
        %2783 = vadd.xlane.f32.xlu0 %v2782
        %v2784 = vpop.xlane.xlu0 %2783
        %v2785 = vsel %vm993, %v2768, 0.0
        %2786 = vadd.xlane.f32.xlu0 %v2785
        %v2787 = vpop.xlane.xlu0 %2786
        %v2788 = vsel %vm993, %v2770, 0.0
        %2789 = vadd.xlane.f32.xlu0 %v2788
        %v2790 = vpop.xlane.xlu0 %2789
        %v2791 = vsel %vm993, %v2772, 0.0
        %2792 = vadd.xlane.f32.xlu0 %v2791
        %v2793 = vpop.xlane.xlu0 %2792
        %v2794 = vsel %vm993, %v2774, 0.0
        %2795 = vadd.xlane.f32.xlu0 %v2794
        %v2796 = vpop.xlane.xlu0 %2795
        %v2797 = vsel %vm993, %v2776, 0.0
        %2798 = vadd.xlane.f32.xlu0 %v2797
        %v2799 = vpop.xlane.xlu0 %2798
        %v2800 = vsel %vm993, %v2778, 0.0
        %2801 = vadd.xlane.f32.xlu0 %v2800
        %v2802 = vpop.xlane.xlu0 %2801
        %v2803 = vrcp.pop %v2781
        %v2804 = vrcp.pop %v2784
        %v2805 = vrcp.pop %v2787
        %v2806 = vrcp.pop %v2790
        %v2807 = vrcp.pop %v2793
        %v2808 = vrcp.pop %v2796
        %v2809 = vrcp.pop %v2799
        %v2810 = vrcp.pop %v2802
        %v2811 = vmul.f32 %v2764, %v2803
        %v2812 = vmul.f32 %v2766, %v2804
        %v2813 = vmul.f32 %v2768, %v2805
        %v2814 = vmul.f32 %v2770, %v2806
        %v2815 = vmul.f32 %v2772, %v2807
        %v2816 = vmul.f32 %v2774, %v2808
        %v2817 = vmul.f32 %v2776, %v2809
        %v2818 = vmul.f32 %v2778, %v2810
        %s2819 = sld [smem:[#allocation2 + $0x3]]
        %v2820 = vstv %s2819
        %v2821 = vmul.f32 %v2811, %v2820
        %v2822 = vmul.f32 %v2812, %v2820
        %v2823 = vmul.f32 %v2813, %v2820
        %v2824 = vmul.f32 %v2814, %v2820
        %v2825 = vmul.f32 %v2815, %v2820
        %v2826 = vmul.f32 %v2816, %v2820
        %v2827 = vmul.f32 %v2817, %v2820
        %v2828 = vmul.f32 %v2818, %v2820
        %s2829 = scalar_lea.vmem %s6, 192
        %v2830 = vld [vmem:[%s2829] sm:$0xff]
        %v2831 = vld [vmem:[%s2829 + $0x8] sm:$0xff]
        %v2832 = vld [vmem:[%s2829 + $0x10] sm:$0xff]
        %v2833 = vld [vmem:[%s2829 + $0x18] sm:$0xff]
        %v2834 = vld [vmem:[%s2829 + $0x20] sm:$0xff]
        %v2835 = vld [vmem:[%s2829 + $0x28] sm:$0xff]
        %v2836 = vld [vmem:[%s2829 + $0x30] sm:$0xff]
        %v2837 = vld [vmem:[%s2829 + $0x38] sm:$0xff]
        %v2838 = vsub.f32 %v2821, %v2830
        %v2839 = vsub.f32 %v2822, %v2831
        %v2840 = vsub.f32 %v2823, %v2832
        %v2841 = vsub.f32 %v2824, %v2833
        %v2842 = vsub.f32 %v2825, %v2834
        %v2843 = vsub.f32 %v2826, %v2835
        %v2844 = vsub.f32 %v2827, %v2836
        %v2845 = vsub.f32 %v2828, %v2837
        %2846 = vrot.lane.b32.xlu0 %v785, 40
        %v2847 = vpop.permute.xlu0 %2846
        %2848 = vrot.lane.b32.xlu0 %v790, 40
        %v2849 = vpop.permute.xlu0 %2848
        %2850 = vrot.lane.b32.xlu0 %v795, 40
        %v2851 = vpop.permute.xlu0 %2850
        %2852 = vrot.lane.b32.xlu0 %v800, 40
        %v2853 = vpop.permute.xlu0 %2852
        %2854 = vrot.lane.b32.xlu0 %v805, 40
        %v2855 = vpop.permute.xlu0 %2854
        %2856 = vrot.lane.b32.xlu0 %v810, 40
        %v2857 = vpop.permute.xlu0 %2856
        %2858 = vrot.lane.b32.xlu0 %v815, 40
        %v2859 = vpop.permute.xlu0 %2858
        %2860 = vrot.lane.b32.xlu0 %v820, 40
        %v2861 = vpop.permute.xlu0 %2860
        %v2871 = vsel %vm993, %v2838, 0
        %v2874 = vsel %vm993, %v2839, 0
        %v2877 = vsel %vm993, %v2840, 0
        %v2880 = vsel %vm993, %v2841, 0
        %v2883 = vsel %vm993, %v2842, 0
        %v2886 = vsel %vm993, %v2843, 0
        %v2889 = vsel %vm993, %v2844, 0
        %v2892 = vsel %vm993, %v2845, 0
        %2894 = vmatprep.subr.mxu0 0.0
        %2895 = vmatpush1.msra.mxu0 %v2847
        %2896 = vmatprep.subr.mxu0 0.0
        %2897 = vmatpush1.msra.mxu0 %v2849
        %2898 = vmatprep.subr.mxu0 0.0
        %2899 = vmatpush1.msra.mxu0 %v2851
        %2900 = vmatprep.subr.mxu0 0.0
        %2901 = vmatpush1.msra.mxu0 %v2853
        %2902 = vmatprep.subr.mxu0 0.0
        %2903 = vmatpush1.msra.mxu0 %v2855
        %2904 = vmatprep.subr.mxu0 0.0
        %2905 = vmatpush1.msra.mxu0 %v2857
        %2906 = vmatprep.subr.mxu0 0.0
        %2907 = vmatpush1.msra.mxu0 %v2859
        %2908 = vmatprep.subr.mxu0 0.0
        %2909 = vmatpush1.msra.mxu0 %v2861
        %2910 = vmatprep.subr.mxu0 0.0
        %2911 = vmatpush1.msra.mxu0 0.0
        %2912 = vmatprep.subr.mxu0 0.0
        %2913 = vmatpush1.msra.mxu0 0.0
        %2914 = vmatprep.subr.mxu0 0.0
        %2915 = vmatpush1.msra.mxu0 0.0
        %2916 = vmatprep.subr.mxu0 0.0
        %2917 = vmatpush1.msra.mxu0 0.0
        %2918 = vmatprep.subr.mxu0 0.0
        %2919 = vmatpush1.msra.mxu0 0.0
        %2920 = vmatprep.subr.mxu0 0.0
        %2921 = vmatpush1.msra.mxu0 0.0
        %2922 = vmatprep.subr.mxu0 0.0
        %2923 = vmatpush1.msra.mxu0 0.0
        %2924 = vmatprep.subr.mxu0 0.0
        %2925 = vmatpush1.msra.mxu0 0.0
        %2926 = vmatprep.subr.mxu0 0.0
        %2927 = vmatpush1.msra.mxu0 0.0
        %2928 = vmatprep.subr.mxu0 0.0
        %2929 = vmatpush1.msra.mxu0 0.0
        %2930 = vmatprep.subr.mxu0 0.0
        %2931 = vmatpush1.msra.mxu0 0.0
        %2932 = vmatprep.subr.mxu0 0.0
        %2933 = vmatpush1.msra.mxu0 0.0
        %2934 = vmatprep.subr.mxu0 0.0
        %2935 = vmatpush1.msra.mxu0 0.0
        %2936 = vmatprep.subr.mxu0 0.0
        %2937 = vmatpush1.msra.mxu0 0.0
        %2938 = vmatprep.subr.mxu0 0.0
        %2939 = vmatpush1.msra.mxu0 0.0
        %2940 = vmatprep.subr.mxu0 0.0
        %2941 = vmatpush1.msra.mxu0 0.0
        %2942 = vmatprep.subr.mxu0 0.0
        %2943 = vmatpush1.msra.mxu0 0.0
        %2944 = vmatprep.subr.mxu0 0.0
        %2945 = vmatpush1.msra.mxu0 0.0
        %2946 = vmatprep.subr.mxu0 0.0
        %2947 = vmatpush1.msra.mxu0 0.0
        %2948 = vmatprep.subr.mxu0 0.0
        %2949 = vmatpush1.msra.mxu0 0.0
        %2950 = vmatprep.subr.mxu0 0.0
        %2951 = vmatpush1.msra.mxu0 0.0
        %2952 = vmatprep.subr.mxu0 0.0
        %2953 = vmatpush1.msra.mxu0 0.0
        %2954 = vmatprep.subr.mxu0 0.0
        %2955 = vmatpush1.msra.mxu0 0.0
        %2956 = vmatprep.subr.mxu0 0.0
        %2957 = vmatpush1.msra.mxu0 0.0
        %2958 = vmatprep.mubr.f32.mxu0 0.0
        %2959 = vmatmul.mubr.f32.gmra.mrb[0].mxu0 %v2871
        %v2960 = vpop.f32.mrb[0].mxu0
        %v2961 = vadd.f32 0.0, %v2960
        %v2962 = vpop.f32.mrb[0].mxu0
        %2963 = vmatprep.mubr.f32.mxu0 0.0
        %2964 = vmatmul.mubr.f32.gmra.mrb[0].mxu0 %v2874
        %v2965 = vpop.f32.mrb[0].mxu0
        %v2966 = vadd.f32 0.0, %v2965
        %v2967 = vpop.f32.mrb[0].mxu0
        %2968 = vmatprep.mubr.f32.mxu0 0.0
        %2969 = vmatmul.mubr.f32.gmra.mrb[0].mxu0 %v2877
        %v2970 = vpop.f32.mrb[0].mxu0
        %v2971 = vadd.f32 0.0, %v2970
        %v2972 = vpop.f32.mrb[0].mxu0
        %2973 = vmatprep.mubr.f32.mxu0 0.0
        %2974 = vmatmul.mubr.f32.gmra.mrb[0].mxu0 %v2880
        %v2975 = vpop.f32.mrb[0].mxu0
        %v2976 = vadd.f32 0.0, %v2975
        %v2977 = vpop.f32.mrb[0].mxu0
        %2978 = vmatprep.mubr.f32.mxu0 0.0
        %2979 = vmatmul.mubr.f32.gmra.mrb[0].mxu0 %v2883
        %v2980 = vpop.f32.mrb[0].mxu0
        %v2981 = vadd.f32 0.0, %v2980
        %v2982 = vpop.f32.mrb[0].mxu0
        %2983 = vmatprep.mubr.f32.mxu0 0.0
        %2984 = vmatmul.mubr.f32.gmra.mrb[0].mxu0 %v2886
        %v2985 = vpop.f32.mrb[0].mxu0
        %v2986 = vadd.f32 0.0, %v2985
        %v2987 = vpop.f32.mrb[0].mxu0
        %2988 = vmatprep.mubr.f32.mxu0 0.0
        %2989 = vmatmul.mubr.f32.gmra.mrb[0].mxu0 %v2889
        %v2990 = vpop.f32.mrb[0].mxu0
        %v2991 = vadd.f32 0.0, %v2990
        %v2992 = vpop.f32.mrb[0].mxu0
        %2993 = vmatprep.mubr.f32.mxu0 0.0
        %2994 = vmatmul.mubr.f32.gmra.mrb[0].mxu0 %v2892
        %v2995 = vpop.f32.mrb[0].mxu0
        %v2996 = vadd.f32 0.0, %v2995
        %v2997 = vpop.f32.mrb[0].mxu0
        %2998 = vdwg.mxu0
        %s2999 = scalar_lea.vmem %s8, 24
        %v3000 = vld [vmem:[%s2999] sm:$0xff]
        %v3002 = vsel %vm855, %v2961, 0
        %v3005 = vsel %vm855, %v2966, 0
        %v3008 = vsel %vm855, %v2971, 0
        %v3011 = vsel %vm855, %v2976, 0
        %v3014 = vsel %vm855, %v2981, 0
        %v3017 = vsel %vm855, %v2986, 0
        %v3020 = vsel %vm855, %v2991, 0
        %v3023 = vsel %vm855, %v2996, 0
        %3025 = vmatprep.subr.mxu0 0.0
        %3026 = vmatpush1.msra.mxu0 %v3000
        %3027 = vmatprep.subr.mxu0 0.0
        %3028 = vmatpush1.msra.mxu0 0.0
        %3029 = vmatprep.subr.mxu0 0.0
        %3030 = vmatpush1.msra.mxu0 0.0
        %3031 = vmatprep.subr.mxu0 0.0
        %3032 = vmatpush1.msra.mxu0 0.0
        %3033 = vmatprep.subr.mxu0 0.0
        %3034 = vmatpush1.msra.mxu0 0.0
        %3035 = vmatprep.subr.mxu0 0.0
        %3036 = vmatpush1.msra.mxu0 0.0
        %3037 = vmatprep.subr.mxu0 0.0
        %3038 = vmatpush1.msra.mxu0 0.0
        %3039 = vmatprep.subr.mxu0 0.0
        %3040 = vmatpush1.msra.mxu0 0.0
        %3041 = vmatprep.subr.mxu0 0.0
        %3042 = vmatpush1.msra.mxu0 0.0
        %3043 = vmatprep.subr.mxu0 0.0
        %3044 = vmatpush1.msra.mxu0 0.0
        %3045 = vmatprep.subr.mxu0 0.0
        %3046 = vmatpush1.msra.mxu0 0.0
        %3047 = vmatprep.subr.mxu0 0.0
        %3048 = vmatpush1.msra.mxu0 0.0
        %3049 = vmatprep.subr.mxu0 0.0
        %3050 = vmatpush1.msra.mxu0 0.0
        %3051 = vmatprep.subr.mxu0 0.0
        %3052 = vmatpush1.msra.mxu0 0.0
        %3053 = vmatprep.subr.mxu0 0.0
        %3054 = vmatpush1.msra.mxu0 0.0
        %3055 = vmatprep.subr.mxu0 0.0
        %3056 = vmatpush1.msra.mxu0 0.0
        %3057 = vmatprep.subr.mxu0 0.0
        %3058 = vmatpush1.msra.mxu0 0.0
        %3059 = vmatprep.subr.mxu0 0.0
        %3060 = vmatpush1.msra.mxu0 0.0
        %3061 = vmatprep.subr.mxu0 0.0
        %3062 = vmatpush1.msra.mxu0 0.0
        %3063 = vmatprep.subr.mxu0 0.0
        %3064 = vmatpush1.msra.mxu0 0.0
        %3065 = vmatprep.subr.mxu0 0.0
        %3066 = vmatpush1.msra.mxu0 0.0
        %3067 = vmatprep.subr.mxu0 0.0
        %3068 = vmatpush1.msra.mxu0 0.0
        %3069 = vmatprep.subr.mxu0 0.0
        %3070 = vmatpush1.msra.mxu0 0.0
        %3071 = vmatprep.subr.mxu0 0.0
        %3072 = vmatpush1.msra.mxu0 0.0
        %3073 = vmatprep.subr.mxu0 0.0
        %3074 = vmatpush1.msra.mxu0 0.0
        %3075 = vmatprep.subr.mxu0 0.0
        %3076 = vmatpush1.msra.mxu0 0.0
        %3077 = vmatprep.subr.mxu0 0.0
        %3078 = vmatpush1.msra.mxu0 0.0
        %3079 = vmatprep.subr.mxu0 0.0
        %3080 = vmatpush1.msra.mxu0 0.0
        %3081 = vmatprep.subr.mxu0 0.0
        %3082 = vmatpush1.msra.mxu0 0.0
        %3083 = vmatprep.subr.mxu0 0.0
        %3084 = vmatpush1.msra.mxu0 0.0
        %3085 = vmatprep.subr.mxu0 0.0
        %3086 = vmatpush1.msra.mxu0 0.0
        %3087 = vmatprep.subr.mxu0 0.0
        %3088 = vmatpush1.msra.mxu0 0.0
        %3089 = vmatprep.mubr.f32.mxu0 0.0
        %3090 = vmatmul.mubr.f32.gmra.mrb[0].mxu0 %v3002
        %v3091 = vpop.f32.mrb[0].mxu0
        %v3092 = vadd.f32 0.0, %v3091
        %v3093 = vpop.f32.mrb[0].mxu0
        %3094 = vmatprep.mubr.f32.mxu0 0.0
        %3095 = vmatmul.mubr.f32.gmra.mrb[0].mxu0 %v3005
        %v3096 = vpop.f32.mrb[0].mxu0
        %v3097 = vadd.f32 0.0, %v3096
        %v3098 = vpop.f32.mrb[0].mxu0
        %3099 = vmatprep.mubr.f32.mxu0 0.0
        %3100 = vmatmul.mubr.f32.gmra.mrb[0].mxu0 %v3008
        %v3101 = vpop.f32.mrb[0].mxu0
        %v3102 = vadd.f32 0.0, %v3101
        %v3103 = vpop.f32.mrb[0].mxu0
        %3104 = vmatprep.mubr.f32.mxu0 0.0
        %3105 = vmatmul.mubr.f32.gmra.mrb[0].mxu0 %v3011
        %v3106 = vpop.f32.mrb[0].mxu0
        %v3107 = vadd.f32 0.0, %v3106
        %v3108 = vpop.f32.mrb[0].mxu0
        %3109 = vmatprep.mubr.f32.mxu0 0.0
        %3110 = vmatmul.mubr.f32.gmra.mrb[0].mxu0 %v3014
        %v3111 = vpop.f32.mrb[0].mxu0
        %v3112 = vadd.f32 0.0, %v3111
        %v3113 = vpop.f32.mrb[0].mxu0
        %3114 = vmatprep.mubr.f32.mxu0 0.0
        %3115 = vmatmul.mubr.f32.gmra.mrb[0].mxu0 %v3017
        %v3116 = vpop.f32.mrb[0].mxu0
        %v3117 = vadd.f32 0.0, %v3116
        %v3118 = vpop.f32.mrb[0].mxu0
        %3119 = vmatprep.mubr.f32.mxu0 0.0
        %3120 = vmatmul.mubr.f32.gmra.mrb[0].mxu0 %v3020
        %v3121 = vpop.f32.mrb[0].mxu0
        %v3122 = vadd.f32 0.0, %v3121
        %v3123 = vpop.f32.mrb[0].mxu0
        %3124 = vmatprep.mubr.f32.mxu0 0.0
        %3125 = vmatmul.mubr.f32.gmra.mrb[0].mxu0 %v3023
        %v3126 = vpop.f32.mrb[0].mxu0
        %v3127 = vadd.f32 0.0, %v3126
        %v3128 = vpop.f32.mrb[0].mxu0
        %3129 = vdwg.mxu0
        %v3130 = vadd.f32 %v2545, %v3092
        %v3131 = vadd.f32 %v2546, %v3097
        %v3132 = vadd.f32 %v2547, %v3102
        %v3133 = vadd.f32 %v2548, %v3107
        %v3134 = vadd.f32 %v2549, %v3112
        %v3135 = vadd.f32 %v2550, %v3117
        %v3136 = vadd.f32 %v2551, %v3122
        %v3137 = vadd.f32 %v2552, %v3127
        %v3138 = vadd.f32 %v539, %v3130
        %v3139 = vadd.f32 %v540, %v3131
        %v3140 = vadd.f32 %v541, %v3132
        %v3141 = vadd.f32 %v542, %v3133
        %v3142 = vadd.f32 %v543, %v3134
        %v3143 = vadd.f32 %v544, %v3135
        %v3144 = vadd.f32 %v545, %v3136
        %v3145 = vadd.f32 %v546, %v3137
        %v3146 = vld [vmem:[%s9] sm:$0x1]
        %v3148 = vlaneseq
        %v3149 = vshrl.u32 %v3148, 7
        %v3150 = vsub.s32 0, %v3149
        %v3151 = vrot.slane %v3146, %v3150
        %v3153 = vadd.f32 %v3138, %v3151
        %v3154 = vadd.f32 %v3139, %v3151
        %v3155 = vadd.f32 %v3140, %v3151
        %v3156 = vadd.f32 %v3141, %v3151
        %v3157 = vadd.f32 %v3142, %v3151
        %v3158 = vadd.f32 %v3143, %v3151
        %v3159 = vadd.f32 %v3144, %v3151
        %v3160 = vadd.f32 %v3145, %v3151
        %v3161 = vsel %vm547, %v3153, 0.0
        %3162 = vadd.xlane.f32.xlu0 %v3161
        %v3163 = vpop.xlane.xlu0 %3162
        %v3164 = vsel %vm547, %v3154, 0.0
        %3165 = vadd.xlane.f32.xlu0 %v3164
        %v3166 = vpop.xlane.xlu0 %3165
        %v3167 = vsel %vm547, %v3155, 0.0
        %3168 = vadd.xlane.f32.xlu0 %v3167
        %v3169 = vpop.xlane.xlu0 %3168
        %v3170 = vsel %vm547, %v3156, 0.0
        %3171 = vadd.xlane.f32.xlu0 %v3170
        %v3172 = vpop.xlane.xlu0 %3171
        %v3173 = vsel %vm547, %v3157, 0.0
        %3174 = vadd.xlane.f32.xlu0 %v3173
        %v3175 = vpop.xlane.xlu0 %3174
        %v3176 = vsel %vm547, %v3158, 0.0
        %3177 = vadd.xlane.f32.xlu0 %v3176
        %v3178 = vpop.xlane.xlu0 %3177
        %v3179 = vsel %vm547, %v3159, 0.0
        %3180 = vadd.xlane.f32.xlu0 %v3179
        %v3181 = vpop.xlane.xlu0 %3180
        %v3182 = vsel %vm547, %v3160, 0.0
        %3183 = vadd.xlane.f32.xlu0 %v3182
        %v3184 = vpop.xlane.xlu0 %3183
        %v3185 = vmul.f32 %v3163, %v572
        %v3186 = vmul.f32 %v3166, %v572
        %v3187 = vmul.f32 %v3169, %v572
        %v3188 = vmul.f32 %v3172, %v572
        %v3189 = vmul.f32 %v3175, %v572
        %v3190 = vmul.f32 %v3178, %v572
        %v3191 = vmul.f32 %v3181, %v572
        %v3192 = vmul.f32 %v3184, %v572
        %v3193 = vsub.f32 %v3153, %v3185
        %v3194 = vsub.f32 %v3154, %v3186
        %v3195 = vsub.f32 %v3155, %v3187
        %v3196 = vsub.f32 %v3156, %v3188
        %v3197 = vsub.f32 %v3157, %v3189
        %v3198 = vsub.f32 %v3158, %v3190
        %v3199 = vsub.f32 %v3159, %v3191
        %v3200 = vsub.f32 %v3160, %v3192
        %v3201 = vmul.f32 %v3193, %v3193
        %v3202 = vmul.f32 %v3194, %v3194
        %v3203 = vmul.f32 %v3195, %v3195
        %v3204 = vmul.f32 %v3196, %v3196
        %v3205 = vmul.f32 %v3197, %v3197
        %v3206 = vmul.f32 %v3198, %v3198
        %v3207 = vmul.f32 %v3199, %v3199
        %v3208 = vmul.f32 %v3200, %v3200
        %v3209 = vsel %vm547, %v3201, 0.0
        %3210 = vadd.xlane.f32.xlu0 %v3209
        %v3211 = vpop.xlane.xlu0 %3210
        %v3212 = vsel %vm547, %v3202, 0.0
        %3213 = vadd.xlane.f32.xlu0 %v3212
        %v3214 = vpop.xlane.xlu0 %3213
        %v3215 = vsel %vm547, %v3203, 0.0
        %3216 = vadd.xlane.f32.xlu0 %v3215
        %v3217 = vpop.xlane.xlu0 %3216
        %v3218 = vsel %vm547, %v3204, 0.0
        %3219 = vadd.xlane.f32.xlu0 %v3218
        %v3220 = vpop.xlane.xlu0 %3219
        %v3221 = vsel %vm547, %v3205, 0.0
        %3222 = vadd.xlane.f32.xlu0 %v3221
        %v3223 = vpop.xlane.xlu0 %3222
        %v3224 = vsel %vm547, %v3206, 0.0
        %3225 = vadd.xlane.f32.xlu0 %v3224
        %v3226 = vpop.xlane.xlu0 %3225
        %v3227 = vsel %vm547, %v3207, 0.0
        %3228 = vadd.xlane.f32.xlu0 %v3227
        %v3229 = vpop.xlane.xlu0 %3228
        %v3230 = vsel %vm547, %v3208, 0.0
        %3231 = vadd.xlane.f32.xlu0 %v3230
        %v3232 = vpop.xlane.xlu0 %3231
        %v3233 = vmul.f32 %v3211, %v572
        %v3234 = vmul.f32 %v3214, %v572
        %v3235 = vmul.f32 %v3217, %v572
        %v3236 = vmul.f32 %v3220, %v572
        %v3237 = vmul.f32 %v3223, %v572
        %v3238 = vmul.f32 %v3226, %v572
        %v3239 = vmul.f32 %v3229, %v572
        %v3240 = vmul.f32 %v3232, %v572
        %v3241 = vadd.f32 %v3233, 1e-05
        %v3242 = vadd.f32 %v3234, 1e-05
        %v3243 = vadd.f32 %v3235, 1e-05
        %v3244 = vadd.f32 %v3236, 1e-05
        %v3245 = vadd.f32 %v3237, 1e-05
        %v3246 = vadd.f32 %v3238, 1e-05
        %v3247 = vadd.f32 %v3239, 1e-05
        %v3248 = vadd.f32 %v3240, 1e-05
        %v3249 = vrsqrt.pop %v3241
        %v3250 = vrsqrt.pop %v3242
        %v3251 = vrsqrt.pop %v3243
        %v3252 = vrsqrt.pop %v3244
        %v3253 = vrsqrt.pop %v3245
        %v3254 = vrsqrt.pop %v3246
        %v3255 = vrsqrt.pop %v3247
        %v3256 = vrsqrt.pop %v3248
        %v3257 = vmul.f32 %v3193, %v3249
        %v3258 = vmul.f32 %v3194, %v3250
        %v3259 = vmul.f32 %v3195, %v3251
        %v3260 = vmul.f32 %v3196, %v3252
        %v3261 = vmul.f32 %v3197, %v3253
        %v3262 = vmul.f32 %v3198, %v3254
        %v3263 = vmul.f32 %v3199, %v3255
        %v3264 = vmul.f32 %v3200, %v3256
        %v3265 = vld [vmem:[%s10] sm:$0x1]
        %v3267 = vlaneseq
        %v3268 = vshrl.u32 %v3267, 7
        %v3269 = vsub.s32 0, %v3268
        %v3270 = vrot.slane %v3265, %v3269
        %v3272 = vmul.f32 %v3257, %v3270
        %v3273 = vmul.f32 %v3258, %v3270
        %v3274 = vmul.f32 %v3259, %v3270
        %v3275 = vmul.f32 %v3260, %v3270
        %v3276 = vmul.f32 %v3261, %v3270
        %v3277 = vmul.f32 %v3262, %v3270
        %v3278 = vmul.f32 %v3263, %v3270
        %v3279 = vmul.f32 %v3264, %v3270
        %v3280 = vld [vmem:[%s11] sm:$0x1]
        %v3282 = vlaneseq
        %v3283 = vshrl.u32 %v3282, 7
        %v3284 = vsub.s32 0, %v3283
        %v3285 = vrot.slane %v3280, %v3284
        %v3287 = vadd.f32 %v3272, %v3285
        %v3288 = vadd.f32 %v3273, %v3285
        %v3289 = vadd.f32 %v3274, %v3285
        %v3290 = vadd.f32 %v3275, %v3285
        %v3291 = vadd.f32 %v3276, %v3285
        %v3292 = vadd.f32 %v3277, %v3285
        %v3293 = vadd.f32 %v3278, %v3285
        %v3294 = vadd.f32 %v3279, %v3285
        %v3295 = vld [vmem:[%s12] sm:$0xff]
        %v3296 = vld [vmem:[%s12 + $0x8] sm:$0xff]
        %v3297 = vld [vmem:[%s12 + $0x10] sm:$0xff]
        %v3298 = vld [vmem:[%s12 + $0x18] sm:$0xff]
        %v3299 = vld [vmem:[%s13] sm:$0x1]
        %v3301 = vlaneseq
        %v3302 = vshrl.u32 %v3301, 7
        %v3303 = vsub.s32 0, %v3302
        %v3304 = vrot.slane %v3299, %v3303
        %v3307 = vsel %vm547, %v3287, 0
        %v3310 = vsel %vm547, %v3288, 0
        %v3313 = vsel %vm547, %v3289, 0
        %v3316 = vsel %vm547, %v3290, 0
        %v3319 = vsel %vm547, %v3291, 0
        %v3322 = vsel %vm547, %v3292, 0
        %v3325 = vsel %vm547, %v3293, 0
        %v3328 = vsel %vm547, %v3294, 0
        %3330 = vmatprep.subr.mxu0 0.0
        %3331 = vmatpush1.msra.mxu0 %v3295
        %3332 = vmatprep.subr.mxu0 0.0
        %3333 = vmatpush1.msra.mxu0 %v3296
        %3334 = vmatprep.subr.mxu0 0.0
        %3335 = vmatpush1.msra.mxu0 %v3297
        %3336 = vmatprep.subr.mxu0 0.0
        %3337 = vmatpush1.msra.mxu0 %v3298
        %3338 = vmatprep.subr.mxu0 0.0
        %3339 = vmatpush1.msra.mxu0 0.0
        %3340 = vmatprep.subr.mxu0 0.0
        %3341 = vmatpush1.msra.mxu0 0.0
        %3342 = vmatprep.subr.mxu0 0.0
        %3343 = vmatpush1.msra.mxu0 0.0
        %3344 = vmatprep.subr.mxu0 0.0
        %3345 = vmatpush1.msra.mxu0 0.0
        %3346 = vmatprep.subr.mxu0 0.0
        %3347 = vmatpush1.msra.mxu0 0.0
        %3348 = vmatprep.subr.mxu0 0.0
        %3349 = vmatpush1.msra.mxu0 0.0
        %3350 = vmatprep.subr.mxu0 0.0
        %3351 = vmatpush1.msra.mxu0 0.0
        %3352 = vmatprep.subr.mxu0 0.0
        %3353 = vmatpush1.msra.mxu0 0.0
        %3354 = vmatprep.subr.mxu0 0.0
        %3355 = vmatpush1.msra.mxu0 0.0
        %3356 = vmatprep.subr.mxu0 0.0
        %3357 = vmatpush1.msra.mxu0 0.0
        %3358 = vmatprep.subr.mxu0 0.0
        %3359 = vmatpush1.msra.mxu0 0.0
        %3360 = vmatprep.subr.mxu0 0.0
        %3361 = vmatpush1.msra.mxu0 0.0
        %3362 = vmatprep.subr.mxu0 0.0
        %3363 = vmatpush1.msra.mxu0 0.0
        %3364 = vmatprep.subr.mxu0 0.0
        %3365 = vmatpush1.msra.mxu0 0.0
        %3366 = vmatprep.subr.mxu0 0.0
        %3367 = vmatpush1.msra.mxu0 0.0
        %3368 = vmatprep.subr.mxu0 0.0
        %3369 = vmatpush1.msra.mxu0 0.0
        %3370 = vmatprep.subr.mxu0 0.0
        %3371 = vmatpush1.msra.mxu0 0.0
        %3372 = vmatprep.subr.mxu0 0.0
        %3373 = vmatpush1.msra.mxu0 0.0
        %3374 = vmatprep.subr.mxu0 0.0
        %3375 = vmatpush1.msra.mxu0 0.0
        %3376 = vmatprep.subr.mxu0 0.0
        %3377 = vmatpush1.msra.mxu0 0.0
        %3378 = vmatprep.subr.mxu0 0.0
        %3379 = vmatpush1.msra.mxu0 0.0
        %3380 = vmatprep.subr.mxu0 0.0
        %3381 = vmatpush1.msra.mxu0 0.0
        %3382 = vmatprep.subr.mxu0 0.0
        %3383 = vmatpush1.msra.mxu0 0.0
        %3384 = vmatprep.subr.mxu0 0.0
        %3385 = vmatpush1.msra.mxu0 0.0
        %3386 = vmatprep.subr.mxu0 0.0
        %3387 = vmatpush1.msra.mxu0 0.0
        %3388 = vmatprep.subr.mxu0 0.0
        %3389 = vmatpush1.msra.mxu0 0.0
        %3390 = vmatprep.subr.mxu0 0.0
        %3391 = vmatpush1.msra.mxu0 0.0
        %3392 = vmatprep.subr.mxu0 0.0
        %3393 = vmatpush1.msra.mxu0 0.0
        %3394 = vmatprep.mubr.f32.mxu0 0.0
        %3395 = vmatmul.mubr.f32.gmra.mrb[0].mxu0 %v3307
        %v3396 = vpop.f32.mrb[0].mxu0
        %v3397 = vadd.f32 %v3304, %v3396
        %v3398 = vpop.f32.mrb[0].mxu0
        %3399 = vmatprep.mubr.f32.mxu0 0.0
        %3400 = vmatmul.mubr.f32.gmra.mrb[0].mxu0 %v3310
        %v3401 = vpop.f32.mrb[0].mxu0
        %v3402 = vadd.f32 %v3304, %v3401
        %v3403 = vpop.f32.mrb[0].mxu0
        %3404 = vmatprep.mubr.f32.mxu0 0.0
        %3405 = vmatmul.mubr.f32.gmra.mrb[0].mxu0 %v3313
        %v3406 = vpop.f32.mrb[0].mxu0
        %v3407 = vadd.f32 %v3304, %v3406
        %v3408 = vpop.f32.mrb[0].mxu0
        %3409 = vmatprep.mubr.f32.mxu0 0.0
        %3410 = vmatmul.mubr.f32.gmra.mrb[0].mxu0 %v3316
        %v3411 = vpop.f32.mrb[0].mxu0
        %v3412 = vadd.f32 %v3304, %v3411
        %v3413 = vpop.f32.mrb[0].mxu0
        %3414 = vmatprep.mubr.f32.mxu0 0.0
        %3415 = vmatmul.mubr.f32.gmra.mrb[0].mxu0 %v3319
        %v3416 = vpop.f32.mrb[0].mxu0
        %v3417 = vadd.f32 %v3304, %v3416
        %v3418 = vpop.f32.mrb[0].mxu0
        %3419 = vmatprep.mubr.f32.mxu0 0.0
        %3420 = vmatmul.mubr.f32.gmra.mrb[0].mxu0 %v3322
        %v3421 = vpop.f32.mrb[0].mxu0
        %v3422 = vadd.f32 %v3304, %v3421
        %v3423 = vpop.f32.mrb[0].mxu0
        %3424 = vmatprep.mubr.f32.mxu0 0.0
        %3425 = vmatmul.mubr.f32.gmra.mrb[0].mxu0 %v3325
        %v3426 = vpop.f32.mrb[0].mxu0
        %v3427 = vadd.f32 %v3304, %v3426
        %v3428 = vpop.f32.mrb[0].mxu0
        %3429 = vmatprep.mubr.f32.mxu0 0.0
        %3430 = vmatmul.mubr.f32.gmra.mrb[0].mxu0 %v3328
        %v3431 = vpop.f32.mrb[0].mxu0
        %v3432 = vadd.f32 %v3304, %v3431
        %v3433 = vpop.f32.mrb[0].mxu0
        %3434 = vdwg.mxu0
        %v3435 = vmul.f32 %v3397, 0.5
        %v3436 = vmul.f32 %v3402, 0.5
        %v3437 = vmul.f32 %v3407, 0.5
        %v3438 = vmul.f32 %v3412, 0.5
        %v3439 = vmul.f32 %v3417, 0.5
        %v3440 = vmul.f32 %v3422, 0.5
        %v3441 = vmul.f32 %v3427, 0.5
        %v3442 = vmul.f32 %v3432, 0.5
        %v3443 = vmul.f32 %v3397, 0.70710677
        %v3444 = vmul.f32 %v3402, 0.70710677
        %v3445 = vmul.f32 %v3407, 0.70710677
        %v3446 = vmul.f32 %v3412, 0.70710677
        %v3447 = vmul.f32 %v3417, 0.70710677
        %v3448 = vmul.f32 %v3422, 0.70710677
        %v3449 = vmul.f32 %v3427, 0.70710677
        %v3450 = vmul.f32 %v3432, 0.70710677
        %vm3451 = vcmp.ge.f32.partialorder %v3443, 0.0
        %vm3452 = vcmp.ge.f32.partialorder %v3444, 0.0
        %vm3453 = vcmp.ge.f32.partialorder %v3445, 0.0
        %vm3454 = vcmp.ge.f32.partialorder %v3446, 0.0
        %vm3455 = vcmp.ge.f32.partialorder %v3447, 0.0
        %vm3456 = vcmp.ge.f32.partialorder %v3448, 0.0
        %vm3457 = vcmp.ge.f32.partialorder %v3449, 0.0
        %vm3458 = vcmp.ge.f32.partialorder %v3450, 0.0
        %v3459 = vsel %vm3451, 1.0, -1.0
        %v3460 = vsel %vm3452, 1.0, -1.0
        %v3461 = vsel %vm3453, 1.0, -1.0
        %v3462 = vsel %vm3454, 1.0, -1.0
        %v3463 = vsel %vm3455, 1.0, -1.0
        %v3464 = vsel %vm3456, 1.0, -1.0
        %v3465 = vsel %vm3457, 1.0, -1.0
        %v3466 = vsel %vm3458, 1.0, -1.0
        %v3467 = vand.u32 2147483647, %v3443
        %v3468 = vand.u32 2147483647, %v3444
        %v3469 = vand.u32 2147483647, %v3445
        %v3470 = vand.u32 2147483647, %v3446
        %v3471 = vand.u32 2147483647, %v3447
        %v3472 = vand.u32 2147483647, %v3448
        %v3473 = vand.u32 2147483647, %v3449
        %v3474 = vand.u32 2147483647, %v3450
        %v3475 = vmul.f32 %v3467, 0.3275911
        %v3476 = vmul.f32 %v3468, 0.3275911
        %v3477 = vmul.f32 %v3469, 0.3275911
        %v3478 = vmul.f32 %v3470, 0.3275911
        %v3479 = vmul.f32 %v3471, 0.3275911
        %v3480 = vmul.f32 %v3472, 0.3275911
        %v3481 = vmul.f32 %v3473, 0.3275911
        %v3482 = vmul.f32 %v3474, 0.3275911
        %v3483 = vadd.f32 %v3475, 1.0
        %v3484 = vadd.f32 %v3476, 1.0
        %v3485 = vadd.f32 %v3477, 1.0
        %v3486 = vadd.f32 %v3478, 1.0
        %v3487 = vadd.f32 %v3479, 1.0
        %v3488 = vadd.f32 %v3480, 1.0
        %v3489 = vadd.f32 %v3481, 1.0
        %v3490 = vadd.f32 %v3482, 1.0
        %v3491 = vrcp.pop %v3483
        %v3492 = vmul.f32 1.0, %v3491
        %v3493 = vrcp.pop %v3484
        %v3494 = vmul.f32 1.0, %v3493
        %v3495 = vrcp.pop %v3485
        %v3496 = vmul.f32 1.0, %v3495
        %v3497 = vrcp.pop %v3486
        %v3498 = vmul.f32 1.0, %v3497
        %v3499 = vrcp.pop %v3487
        %v3500 = vmul.f32 1.0, %v3499
        %v3501 = vrcp.pop %v3488
        %v3502 = vmul.f32 1.0, %v3501
        %v3503 = vrcp.pop %v3489
        %v3504 = vmul.f32 1.0, %v3503
        %v3505 = vrcp.pop %v3490
        %v3506 = vmul.f32 1.0, %v3505
        %v3507 = vmul.f32 %v3492, 1.0614054
        %v3508 = vmul.f32 %v3494, 1.0614054
        %v3509 = vmul.f32 %v3496, 1.0614054
        %v3510 = vmul.f32 %v3498, 1.0614054
        %v3511 = vmul.f32 %v3500, 1.0614054
        %v3512 = vmul.f32 %v3502, 1.0614054
        %v3513 = vmul.f32 %v3504, 1.0614054
        %v3514 = vmul.f32 %v3506, 1.0614054
        %v3515 = vadd.f32 %v3507, -1.4531521
        %v3516 = vadd.f32 %v3508, -1.4531521
        %v3517 = vadd.f32 %v3509, -1.4531521
        %v3518 = vadd.f32 %v3510, -1.4531521
        %v3519 = vadd.f32 %v3511, -1.4531521
        %v3520 = vadd.f32 %v3512, -1.4531521
        %v3521 = vadd.f32 %v3513, -1.4531521
        %v3522 = vadd.f32 %v3514, -1.4531521
        %v3523 = vmul.f32 %v3515, %v3492
        %v3524 = vmul.f32 %v3516, %v3494
        %v3525 = vmul.f32 %v3517, %v3496
        %v3526 = vmul.f32 %v3518, %v3498
        %v3527 = vmul.f32 %v3519, %v3500
        %v3528 = vmul.f32 %v3520, %v3502
        %v3529 = vmul.f32 %v3521, %v3504
        %v3530 = vmul.f32 %v3522, %v3506
        %v3531 = vadd.f32 %v3523, 1.4214138
        %v3532 = vadd.f32 %v3524, 1.4214138
        %v3533 = vadd.f32 %v3525, 1.4214138
        %v3534 = vadd.f32 %v3526, 1.4214138
        %v3535 = vadd.f32 %v3527, 1.4214138
        %v3536 = vadd.f32 %v3528, 1.4214138
        %v3537 = vadd.f32 %v3529, 1.4214138
        %v3538 = vadd.f32 %v3530, 1.4214138
        %v3539 = vmul.f32 %v3531, %v3492
        %v3540 = vmul.f32 %v3532, %v3494
        %v3541 = vmul.f32 %v3533, %v3496
        %v3542 = vmul.f32 %v3534, %v3498
        %v3543 = vmul.f32 %v3535, %v3500
        %v3544 = vmul.f32 %v3536, %v3502
        %v3545 = vmul.f32 %v3537, %v3504
        %v3546 = vmul.f32 %v3538, %v3506
        %v3547 = vadd.f32 %v3539, -0.28449672
        %v3548 = vadd.f32 %v3540, -0.28449672
        %v3549 = vadd.f32 %v3541, -0.28449672
        %v3550 = vadd.f32 %v3542, -0.28449672
        %v3551 = vadd.f32 %v3543, -0.28449672
        %v3552 = vadd.f32 %v3544, -0.28449672
        %v3553 = vadd.f32 %v3545, -0.28449672
        %v3554 = vadd.f32 %v3546, -0.28449672
        %v3555 = vmul.f32 %v3547, %v3492
        %v3556 = vmul.f32 %v3548, %v3494
        %v3557 = vmul.f32 %v3549, %v3496
        %v3558 = vmul.f32 %v3550, %v3498
        %v3559 = vmul.f32 %v3551, %v3500
        %v3560 = vmul.f32 %v3552, %v3502
        %v3561 = vmul.f32 %v3553, %v3504
        %v3562 = vmul.f32 %v3554, %v3506
        %v3563 = vadd.f32 %v3555, 0.2548296
        %v3564 = vadd.f32 %v3556, 0.2548296
        %v3565 = vadd.f32 %v3557, 0.2548296
        %v3566 = vadd.f32 %v3558, 0.2548296
        %v3567 = vadd.f32 %v3559, 0.2548296
        %v3568 = vadd.f32 %v3560, 0.2548296
        %v3569 = vadd.f32 %v3561, 0.2548296
        %v3570 = vadd.f32 %v3562, 0.2548296
        %v3571 = vmul.f32 %v3563, %v3492
        %v3572 = vmul.f32 %v3564, %v3494
        %v3573 = vmul.f32 %v3565, %v3496
        %v3574 = vmul.f32 %v3566, %v3498
        %v3575 = vmul.f32 %v3567, %v3500
        %v3576 = vmul.f32 %v3568, %v3502
        %v3577 = vmul.f32 %v3569, %v3504
        %v3578 = vmul.f32 %v3570, %v3506
        %v3579 = vsub.f32 0.0, %v3467
        %v3580 = vsub.f32 0.0, %v3468
        %v3581 = vsub.f32 0.0, %v3469
        %v3582 = vsub.f32 0.0, %v3470
        %v3583 = vsub.f32 0.0, %v3471
        %v3584 = vsub.f32 0.0, %v3472
        %v3585 = vsub.f32 0.0, %v3473
        %v3586 = vsub.f32 0.0, %v3474
        %v3587 = vmul.f32 %v3579, %v3467
        %v3588 = vmul.f32 %v3580, %v3468
        %v3589 = vmul.f32 %v3581, %v3469
        %v3590 = vmul.f32 %v3582, %v3470
        %v3591 = vmul.f32 %v3583, %v3471
        %v3592 = vmul.f32 %v3584, %v3472
        %v3593 = vmul.f32 %v3585, %v3473
        %v3594 = vmul.f32 %v3586, %v3474
        %v3595 = vmul.f32 %v3587, 1.442695
        %v3596 = vpow.pop %v3595
        %v3597 = vmul.f32 %v3588, 1.442695
        %v3598 = vpow.pop %v3597
        %v3599 = vmul.f32 %v3589, 1.442695
        %v3600 = vpow.pop %v3599
        %v3601 = vmul.f32 %v3590, 1.442695
        %v3602 = vpow.pop %v3601
        %v3603 = vmul.f32 %v3591, 1.442695
        %v3604 = vpow.pop %v3603
        %v3605 = vmul.f32 %v3592, 1.442695
        %v3606 = vpow.pop %v3605
        %v3607 = vmul.f32 %v3593, 1.442695
        %v3608 = vpow.pop %v3607
        %v3609 = vmul.f32 %v3594, 1.442695
        %v3610 = vpow.pop %v3609
        %v3611 = vmul.f32 %v3571, %v3596
        %v3612 = vmul.f32 %v3572, %v3598
        %v3613 = vmul.f32 %v3573, %v3600
        %v3614 = vmul.f32 %v3574, %v3602
        %v3615 = vmul.f32 %v3575, %v3604
        %v3616 = vmul.f32 %v3576, %v3606
        %v3617 = vmul.f32 %v3577, %v3608
        %v3618 = vmul.f32 %v3578, %v3610
        %v3619 = vsub.f32 1.0, %v3611
        %v3620 = vsub.f32 1.0, %v3612
        %v3621 = vsub.f32 1.0, %v3613
        %v3622 = vsub.f32 1.0, %v3614
        %v3623 = vsub.f32 1.0, %v3615
        %v3624 = vsub.f32 1.0, %v3616
        %v3625 = vsub.f32 1.0, %v3617
        %v3626 = vsub.f32 1.0, %v3618
        %v3627 = vmul.f32 %v3459, %v3619
        %v3628 = vmul.f32 %v3460, %v3620
        %v3629 = vmul.f32 %v3461, %v3621
        %v3630 = vmul.f32 %v3462, %v3622
        %v3631 = vmul.f32 %v3463, %v3623
        %v3632 = vmul.f32 %v3464, %v3624
        %v3633 = vmul.f32 %v3465, %v3625
        %v3634 = vmul.f32 %v3466, %v3626
        %v3635 = vadd.f32 %v3627, 1.0
        %v3636 = vadd.f32 %v3628, 1.0
        %v3637 = vadd.f32 %v3629, 1.0
        %v3638 = vadd.f32 %v3630, 1.0
        %v3639 = vadd.f32 %v3631, 1.0
        %v3640 = vadd.f32 %v3632, 1.0
        %v3641 = vadd.f32 %v3633, 1.0
        %v3642 = vadd.f32 %v3634, 1.0
        %v3643 = vmul.f32 %v3435, %v3635
        %v3644 = vmul.f32 %v3436, %v3636
        %v3645 = vmul.f32 %v3437, %v3637
        %v3646 = vmul.f32 %v3438, %v3638
        %v3647 = vmul.f32 %v3439, %v3639
        %v3648 = vmul.f32 %v3440, %v3640
        %v3649 = vmul.f32 %v3441, %v3641
        %v3650 = vmul.f32 %v3442, %v3642
        %v3651 = vld [vmem:[%s14] sm:$0xff]
        %v3652 = vld [vmem:[%s14 + $0x8] sm:$0xff]
        %v3653 = vld [vmem:[%s14 + $0x10] sm:$0xff]
        %v3654 = vld [vmem:[%s14 + $0x18] sm:$0xff]
        %v3655 = vld [vmem:[%s14 + $0x20] sm:$0xff]
        %v3656 = vld [vmem:[%s14 + $0x28] sm:$0xff]
        %v3657 = vld [vmem:[%s14 + $0x30] sm:$0xff]
        %v3658 = vld [vmem:[%s14 + $0x38] sm:$0xff]
        %v3659 = vld [vmem:[%s14 + $0x40] sm:$0xff]
        %v3660 = vld [vmem:[%s14 + $0x48] sm:$0xff]
        %v3661 = vld [vmem:[%s14 + $0x50] sm:$0xff]
        %v3662 = vld [vmem:[%s14 + $0x58] sm:$0xff]
        %v3663 = vld [vmem:[%s14 + $0x60] sm:$0xff]
        %v3664 = vld [vmem:[%s14 + $0x68] sm:$0xff]
        %v3665 = vld [vmem:[%s14 + $0x70] sm:$0xff]
        %v3666 = vld [vmem:[%s14 + $0x78] sm:$0xff]
        %v3667 = vld [vmem:[%s15] sm:$0x1]
        %v3669 = vlaneseq
        %v3670 = vshrl.u32 %v3669, 7
        %v3671 = vsub.s32 0, %v3670
        %v3672 = vrot.slane %v3667, %v3671
        %3674 = vmatprep.subr.mxu0 0.0
        %3675 = vmatpush1.msra.mxu0 %v3651
        %3676 = vmatprep.subr.mxu0 0.0
        %3677 = vmatpush1.msra.mxu0 %v3652
        %3678 = vmatprep.subr.mxu0 0.0
        %3679 = vmatpush1.msra.mxu0 %v3653
        %3680 = vmatprep.subr.mxu0 0.0
        %3681 = vmatpush1.msra.mxu0 %v3654
        %3682 = vmatprep.subr.mxu0 0.0
        %3683 = vmatpush1.msra.mxu0 %v3655
        %3684 = vmatprep.subr.mxu0 0.0
        %3685 = vmatpush1.msra.mxu0 %v3656
        %3686 = vmatprep.subr.mxu0 0.0
        %3687 = vmatpush1.msra.mxu0 %v3657
        %3688 = vmatprep.subr.mxu0 0.0
        %3689 = vmatpush1.msra.mxu0 %v3658
        %3690 = vmatprep.subr.mxu0 0.0
        %3691 = vmatpush1.msra.mxu0 %v3659
        %3692 = vmatprep.subr.mxu0 0.0
        %3693 = vmatpush1.msra.mxu0 %v3660
        %3694 = vmatprep.subr.mxu0 0.0
        %3695 = vmatpush1.msra.mxu0 %v3661
        %3696 = vmatprep.subr.mxu0 0.0
        %3697 = vmatpush1.msra.mxu0 %v3662
        %3698 = vmatprep.subr.mxu0 0.0
        %3699 = vmatpush1.msra.mxu0 %v3663
        %3700 = vmatprep.subr.mxu0 0.0
        %3701 = vmatpush1.msra.mxu0 %v3664
        %3702 = vmatprep.subr.mxu0 0.0
        %3703 = vmatpush1.msra.mxu0 %v3665
        %3704 = vmatprep.subr.mxu0 0.0
        %3705 = vmatpush1.msra.mxu0 %v3666
        %3706 = vmatprep.subr.mxu0 0.0
        %3707 = vmatpush1.msra.mxu0 0.0
        %3708 = vmatprep.subr.mxu0 0.0
        %3709 = vmatpush1.msra.mxu0 0.0
        %3710 = vmatprep.subr.mxu0 0.0
        %3711 = vmatpush1.msra.mxu0 0.0
        %3712 = vmatprep.subr.mxu0 0.0
        %3713 = vmatpush1.msra.mxu0 0.0
        %3714 = vmatprep.subr.mxu0 0.0
        %3715 = vmatpush1.msra.mxu0 0.0
        %3716 = vmatprep.subr.mxu0 0.0
        %3717 = vmatpush1.msra.mxu0 0.0
        %3718 = vmatprep.subr.mxu0 0.0
        %3719 = vmatpush1.msra.mxu0 0.0
        %3720 = vmatprep.subr.mxu0 0.0
        %3721 = vmatpush1.msra.mxu0 0.0
        %3722 = vmatprep.subr.mxu0 0.0
        %3723 = vmatpush1.msra.mxu0 0.0
        %3724 = vmatprep.subr.mxu0 0.0
        %3725 = vmatpush1.msra.mxu0 0.0
        %3726 = vmatprep.subr.mxu0 0.0
        %3727 = vmatpush1.msra.mxu0 0.0
        %3728 = vmatprep.subr.mxu0 0.0
        %3729 = vmatpush1.msra.mxu0 0.0
        %3730 = vmatprep.subr.mxu0 0.0
        %3731 = vmatpush1.msra.mxu0 0.0
        %3732 = vmatprep.subr.mxu0 0.0
        %3733 = vmatpush1.msra.mxu0 0.0
        %3734 = vmatprep.subr.mxu0 0.0
        %3735 = vmatpush1.msra.mxu0 0.0
        %3736 = vmatprep.subr.mxu0 0.0
        %3737 = vmatpush1.msra.mxu0 0.0
        %3738 = vmatprep.mubr.f32.mxu0 0.0
        %3739 = vmatmul.mubr.f32.gmra.mrb[0].mxu0 %v3643
        %v3740 = vpop.f32.mrb[0].mxu0
        %v3741 = vadd.f32 %v3672, %v3740
        %v3742 = vpop.f32.mrb[0].mxu0
        %3743 = vmatprep.mubr.f32.mxu0 0.0
        %3744 = vmatmul.mubr.f32.gmra.mrb[0].mxu0 %v3644
        %v3745 = vpop.f32.mrb[0].mxu0
        %v3746 = vadd.f32 %v3672, %v3745
        %v3747 = vpop.f32.mrb[0].mxu0
        %3748 = vmatprep.mubr.f32.mxu0 0.0
        %3749 = vmatmul.mubr.f32.gmra.mrb[0].mxu0 %v3645
        %v3750 = vpop.f32.mrb[0].mxu0
        %v3751 = vadd.f32 %v3672, %v3750
        %v3752 = vpop.f32.mrb[0].mxu0
        %3753 = vmatprep.mubr.f32.mxu0 0.0
        %3754 = vmatmul.mubr.f32.gmra.mrb[0].mxu0 %v3646
        %v3755 = vpop.f32.mrb[0].mxu0
        %v3756 = vadd.f32 %v3672, %v3755
        %v3757 = vpop.f32.mrb[0].mxu0
        %3758 = vmatprep.mubr.f32.mxu0 0.0
        %3759 = vmatmul.mubr.f32.gmra.mrb[0].mxu0 %v3647
        %v3760 = vpop.f32.mrb[0].mxu0
        %v3761 = vadd.f32 %v3672, %v3760
        %v3762 = vpop.f32.mrb[0].mxu0
        %3763 = vmatprep.mubr.f32.mxu0 0.0
        %3764 = vmatmul.mubr.f32.gmra.mrb[0].mxu0 %v3648
        %v3765 = vpop.f32.mrb[0].mxu0
        %v3766 = vadd.f32 %v3672, %v3765
        %v3767 = vpop.f32.mrb[0].mxu0
        %3768 = vmatprep.mubr.f32.mxu0 0.0
        %3769 = vmatmul.mubr.f32.gmra.mrb[0].mxu0 %v3649
        %v3770 = vpop.f32.mrb[0].mxu0
        %v3771 = vadd.f32 %v3672, %v3770
        %v3772 = vpop.f32.mrb[0].mxu0
        %3773 = vmatprep.mubr.f32.mxu0 0.0
        %3774 = vmatmul.mubr.f32.gmra.mrb[0].mxu0 %v3650
        %v3775 = vpop.f32.mrb[0].mxu0
        %v3776 = vadd.f32 %v3672, %v3775
        %v3777 = vpop.f32.mrb[0].mxu0
        %3778 = vdwg.mxu0
        %v3779 = vadd.f32 %v3153, %v3741
        %v3780 = vadd.f32 %v3154, %v3746
        %v3781 = vadd.f32 %v3155, %v3751
        %v3782 = vadd.f32 %v3156, %v3756
        %v3783 = vadd.f32 %v3157, %v3761
        %v3784 = vadd.f32 %v3158, %v3766
        %v3785 = vadd.f32 %v3159, %v3771
        %v3786 = vadd.f32 %v3160, %v3776
        %3787 = vst.msk [vmem:[%s537] sm:$0xff] %vm547, %v3779
        %3788 = vst.msk [vmem:[%s537 + $0x8] sm:$0xff] %vm547, %v3780
        %3789 = vst.msk [vmem:[%s537 + $0x10] sm:$0xff] %vm547, %v3781
        %3790 = vst.msk [vmem:[%s537 + $0x18] sm:$0xff] %vm547, %v3782
        %3791 = vst.msk [vmem:[%s537 + $0x20] sm:$0xff] %vm547, %v3783
        %3792 = vst.msk [vmem:[%s537 + $0x28] sm:$0xff] %vm547, %v3784
        %3793 = vst.msk [vmem:[%s537 + $0x30] sm:$0xff] %vm547, %v3785
        %3794 = vst.msk [vmem:[%s537 + $0x38] sm:$0xff] %vm547, %v3786
        %s3795 = smul.u32 8, %s28
        %p3796 = scmp.lt.s32.totalorder %s3795, 15
        %s3797 = scalar_select %p3796, %s3795, 15
        %s3798 = smul.addr %s3797, 8
        %s3799 = scalar_lea.vmem %s16, %s3798
        // Predicated region
        $region89: #{swin_block_forward.1} parent=83 // pred_check
          %p3800 = pneg %p387
        $region90: #{swin_block_forward.1} parent=83 // pred_check_branch
          %3802 = sbr.rel (%p3800) target = $region92
        $region91: #{swin_block_forward.1} parent=83 // pred_region
          %s3803 = smul.u32 8, %s28
        $region92: #{swin_block_forward.1} parent=83 // pred_fallthru
          _
      $region84: #{swin_block_forward.1} parent=5 // pred_fallthru
        _
      %p3804 = scmp.le.s32.totalorder 2, %s23
      // Predicated region
      $region93: #{swin_block_forward.1} parent=5 // pred_check
        %p3805 = pneg %p3804
      $region94: #{swin_block_forward.1} parent=5 // pred_check_branch
        %3807 = sbr.rel (%p3805) target = $region96
      $region95: #{swin_block_forward.1} parent=5 // pred_region
        %s3808 = ssub.s32 %s23, 2
        // Predicated region
        $region97: #{swin_block_forward.1} parent=95 // pred_check
          %p3809 = pneg %p393
        $region98: #{swin_block_forward.1} parent=95 // pred_check_branch
          %3811 = sbr.rel (%p3809) target = $region100
        $region99: #{swin_block_forward.1} parent=95 // pred_region
          %s3812 = smul.u32 8, %s29
          %p3813 = scmp.lt.s32.totalorder %s3812, 15
          %s3814 = scalar_select %p3813, %s3812, 15
          %s3815 = smul.addr %s3814, 8
          %s3816 = scalar_lea.vmem %s16, %s3815
        $region100: #{swin_block_forward.1} parent=95 // pred_fallthru
          _
      $region96: #{swin_block_forward.1} parent=5 // pred_fallthru
        _
    $region6: #{swin_block_forward.1} parent=1 // loop_footer
      %s27 = sadd.s32 1, %s23
    $region7: #{swin_block_forward.1} parent=1 // loop_footer_branch
      %22 = sbr.rel target = $region3
    $region8: #{swin_block_forward.1} parent=1 // loop_exit
      _
    %3817 = vsyncpa [#allocation3], 1
    %s3818 = scalar_lea.sflag [#allocation3], 1
    %3819 = vsyncpa %s3818, 1

</llo_original>
